<compile_context>
chip_gen: v7x
topology: tpu7x:2x2x1
jax: 0.10.0
libtpu: 0.0.40
codegen_flags: <defaults>
</compile_context>

<pallas_src>
import jax
import jax.numpy as jnp
from jax.experimental import pallas as pl
from jax.experimental.pallas import tpu as pltpu

D_IN = 768
D_H1 = 512
D_H2 = 256
NUM_PHONES = 40     # phone2id is empty in the snippet; use a synthetic head size
P_PAD = 128         # head padded to a full 128-lane vreg / MXU tile
BN_EPS = 1e-5


def _round_up(n, m):
    return ((n + m - 1) // m) * m


def phone_classifier_kernel(
    x_ref,            # (TN, 768)  f32  (cast to bf16 per tile below)
    w1_ref, b1_ref,   # (768, 512) bf16, (1, 512) f32
    w2_ref, b2_ref,   # (512, 256) bf16 (BN folded in), (1, 256) f32
    w3_ref, b3_ref,   # (256, 128) bf16 (lane-padded),  (1, 128) f32
    o_ref,            # (TN, 128)  bf16
):
    # x is streamed as f32 (no separate wrapper cast pass over HBM); cast the
    # tile to bf16 here for the MXU, accumulate in f32.
    x = x_ref[...].astype(jnp.bfloat16)

    # Linear(768, 512) + ReLU
    h1 = jnp.dot(x, w1_ref[...], preferred_element_type=jnp.float32)
    h1 = jnp.maximum(h1 + b1_ref[...], 0.0)

    # BatchNorm1d(512) already folded into w2/b2 (eval mode); Dropout = identity.
    # Linear(512, 256) + ReLU
    h2 = jnp.dot(h1.astype(w2_ref.dtype), w2_ref[...],
                 preferred_element_type=jnp.float32)
    h2 = jnp.maximum(h2 + b2_ref[...], 0.0)

    # Linear(256, P_PAD)   (lane-padded head -> lane-dense stores)
    out = jnp.dot(h2.astype(w3_ref.dtype), w3_ref[...],
                  preferred_element_type=jnp.float32)
    o_ref[...] = (out + b3_ref[...]).astype(o_ref.dtype)


def _prepare_params(params):
    """Fold eval-mode BN into Linear2, pad the head to 128 lanes, cast MXU
    operands to bf16 (biases stay f32)."""
    scale = params["gamma"] * jax.lax.rsqrt(params["var"] + BN_EPS)   # (1, 512)
    shift = params["beta"] - params["mean"] * scale                   # (1, 512)
    w2f = params["w2"] * scale.reshape(D_H1, 1)                       # diag(scale) @ W2
    b2f = params["b2"] + shift @ params["w2"]

    P = params["w3"].shape[1]
    w3p = jnp.zeros((D_H2, P_PAD), jnp.float32).at[:, :P].set(params["w3"])
    b3p = jnp.zeros((1, P_PAD), jnp.float32).at[:, :P].set(params["b3"])

    return dict(
        w1=params["w1"].astype(jnp.bfloat16), b1=params["b1"],
        w2=w2f.astype(jnp.bfloat16),          b2=b2f,
        w3=w3p.astype(jnp.bfloat16),          b3=b3p,
    )


def _tensorcores_per_chip():
    """Best-effort TensorCore-per-chip count.  v5e/v6e -> 1 (grid is a
    sequential loop there); v7x / megacore -> 2 (parallel grid axes shard)."""
    try:
        info = pltpu.get_tpu_info()
        for attr in ("num_cores", "num_tensorcores", "tensorcore_count",
                     "core_count", "num_cores_per_chip"):
            v = getattr(info, attr, None)
            if isinstance(v, int) and v > 0:
                return v
    except Exception:
        pass
    try:
        kind = jax.devices()[0].device_kind.lower()
        if "v7" in kind or "7x" in kind or "v4" in kind:
            return 2
    except Exception:
        pass
    return 1


def _pick_tile_n(N, tile_n, n_cores):
    # Largest 8-aligned tile that covers the batch (one pipeline step when it
    # fits).  Only split the batch when the chip actually has >1 TensorCore
    # AND the batch is too small to feed both cores with full-size tiles.
    t = min(tile_n, _round_up(N, 8))
    if n_cores > 1 and N > 8 and N < n_cores * tile_n:
        t = min(t, _round_up(pl.cdiv(N, n_cores), 8))
    return max(t, 8)


def phone_classifier(x, params, *, tile_n=1024, out_dtype=jnp.bfloat16):
    N, d_in = x.shape
    assert d_in == D_IN
    P = params["w3"].shape[1]
    assert P <= P_PAD

    p = _prepare_params(params)

    t = _pick_tile_n(N, tile_n, _tensorcores_per_chip())
    grid = (pl.cdiv(N, t),)            # ragged tail handled by Pallas (no pad)
    const = lambda shape: pl.BlockSpec(shape, lambda i: (0, 0))

    out = pl.pallas_call(
        phone_classifier_kernel,
        out_shape=jax.ShapeDtypeStruct((N, P_PAD), out_dtype),
        grid_spec=pltpu.PrefetchScalarGridSpec(
            num_scalar_prefetch=0,
            grid=grid,
            in_specs=[
                pl.BlockSpec((t, D_IN), lambda i: (i, 0)),   # x tile (f32)
                const((D_IN, D_H1)), const((1, D_H1)),       # w1, b1
                const((D_H1, D_H2)), const((1, D_H2)),       # w2 (BN folded), b2
                const((D_H2, P_PAD)), const((1, P_PAD)),     # w3 (padded), b3
            ],
            out_specs=pl.BlockSpec((t, P_PAD), lambda i: (i, 0)),
        ),
        compiler_params=pltpu.CompilerParams(
            dimension_semantics=("parallel",),
        ),
    )(x, p["w1"], p["b1"], p["w2"], p["b2"], p["w3"], p["b3"])

    return out[:, :P]


def init_params(key):
    ks = jax.random.split(key, 8)

    def linear(kw, kb, fan_in, fan_out):
        bound = 1.0 / jnp.sqrt(fan_in)
        w = jax.random.uniform(kw, (fan_in, fan_out), jnp.float32, -bound, bound)
        b = jax.random.uniform(kb, (1, fan_out), jnp.float32, -bound, bound)
        return w, b

    w1, b1 = linear(ks[0], ks[1], D_IN, D_H1)
    w2, b2 = linear(ks[2], ks[3], D_H1, D_H2)
    w3, b3 = linear(ks[4], ks[5], D_H2, NUM_PHONES)

    # BatchNorm1d(512): affine params + running stats (deterministic, non-trivial).
    gamma = jnp.ones((1, D_H1), jnp.float32)
    beta = jnp.zeros((1, D_H1), jnp.float32)
    mean = 0.1 * jax.random.normal(ks[6], (1, D_H1), jnp.float32)
    var = 1.0 + 0.05 * jax.random.uniform(ks[7], (1, D_H1), jnp.float32)

    return dict(w1=w1, b1=b1, w2=w2, b2=b2, w3=w3, b3=b3,
                gamma=gamma, beta=beta, mean=mean, var=var)


def reference(x, p):
    h1 = jnp.maximum(x @ p["w1"] + p["b1"], 0.0)
    h1 = (h1 - p["mean"]) / jnp.sqrt(p["var"] + BN_EPS) * p["gamma"] + p["beta"]
    h2 = jnp.maximum(h1 @ p["w2"] + p["b2"], 0.0)
    return h2 @ p["w3"] + p["b3"]


if __name__ == "__main__":
    key = jax.random.PRNGKey(0)
    k_x, k_p = jax.random.split(key)

    N = 200  # small batch of 768-d frame features (deliberately not tile-aligned)
    x = jax.random.normal(k_x, (N, D_IN), jnp.float32)
    params = init_params(k_p)

    ref = reference(x, params)

    # Default config: full-batch tile (split in two only on multi-TC chips).
    out = jax.block_until_ready(phone_classifier(x, params))
    assert out.shape == (N, NUM_PHONES), out.shape
    err = float(jnp.max(jnp.abs(out.astype(jnp.float32) - ref)))
    # bf16 MXU inputs / bf16 logits with f32 accumulation -> loosened tolerance.
    assert jnp.allclose(out.astype(jnp.float32), ref, atol=5e-2, rtol=5e-2), \
        f"mismatch vs reference (max |err|={err})"

    # Small tile: multi-step grid with a ragged tail block (no wrapper pad).
    out2 = jax.block_until_ready(phone_classifier(x, params, tile_n=64))
    assert out2.shape == (N, NUM_PHONES), out2.shape
    err2 = float(jnp.max(jnp.abs(out2.astype(jnp.float32) - ref)))
    assert jnp.allclose(out2.astype(jnp.float32), ref, atol=5e-2, rtol=5e-2), \
        f"mismatch vs reference (ragged path, max |err|={err2})"

    print("KERNEL_OK")
</pallas_src>

<mosaic_0001>
module attributes {stable_mosaic.version = 11 : i64} {
  func.func @phone_classifier_kernel(%arg0: i32, %arg1: memref<200x768xf32, #tpu.memory_space<vmem>>, %arg2: memref<768x512xbf16, #tpu.memory_space<vmem>>, %arg3: memref<1x512xf32, #tpu.memory_space<vmem>>, %arg4: memref<512x256xbf16, #tpu.memory_space<vmem>>, %arg5: memref<1x256xf32, #tpu.memory_space<vmem>>, %arg6: memref<256x128xbf16, #tpu.memory_space<vmem>>, %arg7: memref<1x128xf32, #tpu.memory_space<vmem>>, %arg8: memref<200x128xbf16, #tpu.memory_space<vmem>>) attributes {dimension_semantics = [#tpu.dimension_semantics<parallel>], iteration_bounds = array<i64: 1>, scalar_prefetch = 0 : i64, scratch_operands = 0 : i64, tpu.core_type = #tpu.core_type<tc>, window_params = [{transform_indices = @transform_0, window_bounds = array<i64: 200, 768>}, {pipeline_mode = #tpu.pipeline_mode<synchronous>, transform_indices = @transform_1, window_bounds = array<i64: 768, 512>}, {pipeline_mode = #tpu.pipeline_mode<synchronous>, transform_indices = @transform_2, window_bounds = array<i64: 1, 512>}, {pipeline_mode = #tpu.pipeline_mode<synchronous>, transform_indices = @transform_3, window_bounds = array<i64: 512, 256>}, {pipeline_mode = #tpu.pipeline_mode<synchronous>, transform_indices = @transform_4, window_bounds = array<i64: 1, 256>}, {pipeline_mode = #tpu.pipeline_mode<synchronous>, transform_indices = @transform_5, window_bounds = array<i64: 256, 128>}, {pipeline_mode = #tpu.pipeline_mode<synchronous>, transform_indices = @transform_6, window_bounds = array<i64: 1, 128>}, {transform_indices = @transform_7, window_bounds = array<i64: 200, 128>}]} {
    %c0 = arith.constant 0 : index
    %c0_0 = arith.constant 0 : index
    %0 = vector.load %arg1[%c0, %c0_0] : memref<200x768xf32, #tpu.memory_space<vmem>>, vector<200x768xf32>
    %1 = arith.truncf %0 : vector<200x768xf32> to vector<200x768xbf16>
    %c0_1 = arith.constant 0 : index
    %c0_2 = arith.constant 0 : index
    %2 = vector.load %arg2[%c0_1, %c0_2] : memref<768x512xbf16, #tpu.memory_space<vmem>>, vector<768x512xbf16>
    %cst = arith.constant dense<0.000000e+00> : vector<200x512xf32>
    %3 = tpu.matmul %1, %2, %cst {dimension_numbers = #tpu.dot_dimension_numbers<[1], [0], [0], [1], [0, 0, 1, 1], [], []>} : vector<200x768xbf16>, vector<768x512xbf16>, vector<200x512xf32> -> vector<200x512xf32>
    %c0_3 = arith.constant 0 : index
    %c0_4 = arith.constant 0 : index
    %4 = vector.load %arg3[%c0_3, %c0_4] : memref<1x512xf32, #tpu.memory_space<vmem>>, vector<1x512xf32>
    %5 = vector.broadcast %4 : vector<1x512xf32> to vector<200x512xf32>
    %6 = arith.addf %3, %5 : vector<200x512xf32>
    %cst_5 = arith.constant 0.000000e+00 : f32
    %7 = vector.broadcast %cst_5 : f32 to vector<200x512xf32>
    %8 = arith.maximumf %6, %7 : vector<200x512xf32>
    %9 = arith.truncf %8 : vector<200x512xf32> to vector<200x512xbf16>
    %c0_6 = arith.constant 0 : index
    %c0_7 = arith.constant 0 : index
    %10 = vector.load %arg4[%c0_6, %c0_7] : memref<512x256xbf16, #tpu.memory_space<vmem>>, vector<512x256xbf16>
    %cst_8 = arith.constant dense<0.000000e+00> : vector<200x256xf32>
    %11 = tpu.matmul %9, %10, %cst_8 {dimension_numbers = #tpu.dot_dimension_numbers<[1], [0], [0], [1], [0, 0, 1, 1], [], []>} : vector<200x512xbf16>, vector<512x256xbf16>, vector<200x256xf32> -> vector<200x256xf32>
    %c0_9 = arith.constant 0 : index
    %c0_10 = arith.constant 0 : index
    %12 = vector.load %arg5[%c0_9, %c0_10] : memref<1x256xf32, #tpu.memory_space<vmem>>, vector<1x256xf32>
    %13 = vector.broadcast %12 : vector<1x256xf32> to vector<200x256xf32>
    %14 = arith.addf %11, %13 : vector<200x256xf32>
    %cst_11 = arith.constant 0.000000e+00 : f32
    %15 = vector.broadcast %cst_11 : f32 to vector<200x256xf32>
    %16 = arith.maximumf %14, %15 : vector<200x256xf32>
    %17 = arith.truncf %16 : vector<200x256xf32> to vector<200x256xbf16>
    %c0_12 = arith.constant 0 : index
    %c0_13 = arith.constant 0 : index
    %18 = vector.load %arg6[%c0_12, %c0_13] : memref<256x128xbf16, #tpu.memory_space<vmem>>, vector<256x128xbf16>
    %cst_14 = arith.constant dense<0.000000e+00> : vector<200x128xf32>
    %19 = tpu.matmul %17, %18, %cst_14 {dimension_numbers = #tpu.dot_dimension_numbers<[1], [0], [0], [1], [0, 0, 1, 1], [], []>} : vector<200x256xbf16>, vector<256x128xbf16>, vector<200x128xf32> -> vector<200x128xf32>
    %c0_15 = arith.constant 0 : index
    %c0_16 = arith.constant 0 : index
    %20 = vector.load %arg7[%c0_15, %c0_16] : memref<1x128xf32, #tpu.memory_space<vmem>>, vector<1x128xf32>
    %21 = vector.broadcast %20 : vector<1x128xf32> to vector<200x128xf32>
    %22 = arith.addf %19, %21 : vector<200x128xf32>
    %23 = arith.truncf %22 : vector<200x128xf32> to vector<200x128xbf16>
    %c0_17 = arith.constant 0 : index
    %c0_18 = arith.constant 0 : index
    %24 = vector.load %arg8[%c0_17, %c0_18] : memref<200x128xbf16, #tpu.memory_space<vmem>>, vector<200x128xbf16>
    tpu.vector_store %arg8[%c0_17, %c0_18], %23 {strides = array<i32>} : memref<200x128xbf16, #tpu.memory_space<vmem>>, vector<200x128xbf16>,
    return
  }
  func.func @transform_0(%arg0: i32) -> (i32, i32) {
    %c0_i32 = arith.constant 0 : i32
    %c0_i32_0 = arith.constant 0 : i32
    return %arg0, %c0_i32 : i32, i32
  }
  func.func @transform_1(%arg0: i32) -> (i32, i32) {
    %c0_i32 = arith.constant 0 : i32
    %c0_i32_0 = arith.constant 0 : i32
    %c0_i32_1 = arith.constant 0 : i32
    return %c0_i32, %c0_i32_0 : i32, i32
  }
  func.func @transform_2(%arg0: i32) -> (i32, i32) {
    %c0_i32 = arith.constant 0 : i32
    %c0_i32_0 = arith.constant 0 : i32
    %c0_i32_1 = arith.constant 0 : i32
    return %c0_i32, %c0_i32_0 : i32, i32
  }
  func.func @transform_3(%arg0: i32) -> (i32, i32) {
    %c0_i32 = arith.constant 0 : i32
    %c0_i32_0 = arith.constant 0 : i32
    %c0_i32_1 = arith.constant 0 : i32
    return %c0_i32, %c0_i32_0 : i32, i32
  }
  func.func @transform_4(%arg0: i32) -> (i32, i32) {
    %c0_i32 = arith.constant 0 : i32
    %c0_i32_0 = arith.constant 0 : i32
    %c0_i32_1 = arith.constant 0 : i32
    return %c0_i32, %c0_i32_0 : i32, i32
  }
  func.func @transform_5(%arg0: i32) -> (i32, i32) {
    %c0_i32 = arith.constant 0 : i32
    %c0_i32_0 = arith.constant 0 : i32
    %c0_i32_1 = arith.constant 0 : i32
    return %c0_i32, %c0_i32_0 : i32, i32
  }
  func.func @transform_6(%arg0: i32) -> (i32, i32) {
    %c0_i32 = arith.constant 0 : i32
    %c0_i32_0 = arith.constant 0 : i32
    %c0_i32_1 = arith.constant 0 : i32
    return %c0_i32, %c0_i32_0 : i32, i32
  }
  func.func @transform_7(%arg0: i32) -> (i32, i32) {
    %c0_i32 = arith.constant 0 : i32
    %c0_i32_0 = arith.constant 0 : i32
    return %arg0, %c0_i32 : i32, i32
  }
}

</mosaic_0001>

<llo_original>
// kernel: tpu_custom_call.1
$region0: #{tpu_custom_call.1}
  #allocation0 [shape = 'u32[]', space=smem, size = 0x4, offset = 0x4, fixed_abs, tag = 'smem constant byte address 0x4 - core index']
  #allocation1 [shape = 'u32[144,128]{1,0:T(1,128)}', space=vmem, size = 0x12000, scoped, tag = 'internal scratch']
  %s0 = inlined_call_operand.hbm [shape: f32[200,768], index: 0, kind: input, shape index: {}]
  %s1 = inlined_call_operand.hbm [shape: bf16[768,512], index: 1, kind: input, shape index: {}]
  %s2 = inlined_call_operand.vmem [shape: f32[1,512], index: 2, kind: input, shape index: {}]
  %s3 = inlined_call_operand.hbm [shape: bf16[512,256], index: 3, kind: input, shape index: {}]
  %s4 = inlined_call_operand.vmem [shape: f32[1,256], index: 4, kind: input, shape index: {}]
  %s5 = inlined_call_operand.hbm [shape: bf16[256,128], index: 5, kind: input, shape index: {}]
  %s6 = inlined_call_operand.vmem [shape: f32[1,128], index: 6, kind: input, shape index: {}]
  %s7 = inlined_call_operand.hbm [shape: bf16[200,128], index: 7, kind: output, shape index: {}]
  %s8 = sld [smem:[#allocation0]]
  $region54: #{tpu_custom_call.1} parent=0
    _
  %s10 = ssub.s32 1, %s8
  %s11 = scalar_select 0, %s10, %s8
  $region1: #{tpu_custom_call.1} parent=0
    #allocation2 [shape = 'u8[614400]{0}', space=vmem, size = 0x96000, scoped, tag = 'input window, operand 0, single buffered']
    #allocation3 [shape = 's32[1]{0}', space=sflag, size = 0x4, scoped, tag = 'scoped memory for tpu_custom_call.1']
    #allocation4 [shape = 's32[1]{0}', space=sflag, size = 0x4, scoped, tag = 'scoped memory for tpu_custom_call.1']
    #allocation5 [shape = 'u8[786432]{0}', space=vmem, size = 0xc0000, scoped, tag = 'input window, operand 1, single buffered']
    #allocation6 [shape = 's32[1]{0}', space=sflag, size = 0x4, scoped, tag = 'scoped memory for tpu_custom_call.1']
    #allocation7 [shape = 'u8[262144]{0}', space=vmem, size = 0x40000, scoped, tag = 'input window, operand 3, single buffered']
    #allocation8 [shape = 'u8[65536]{0}', space=vmem, size = 0x10000, scoped, tag = 'input window, operand 5, single buffered']
    #allocation9 [shape = 's32[1]{0}', space=sflag, size = 0x4, scoped, tag = 'scoped memory for tpu_custom_call.1']
    #allocation10 [shape = 'u8[51200]{0}', space=vmem, size = 0xc800, scoped, tag = 'output window, operand 0, single buffered']
    %12 = vsyncpa [#allocation3], 0
    %13 = vsyncpa [#allocation6], 0
    %14 = vsyncpa [#allocation9], 0
    %15 = vsyncpa [#allocation4], 0
    // Predicated region
    $region2: #{tpu_custom_call.1} parent=1 // pred_check
      _
    $region3: #{tpu_custom_call.1} parent=1 // pred_check_branch
      %17 = sbr.rel (0) target = $region5
    $region4: #{tpu_custom_call.1} parent=1 // pred_region
      %s19 = ssub.s32 19200, 19200
      %20 = vsyncadd [#allocation3], %s19
      %s21 = sshll.u32 [#allocation2], 4
      %s22 = int_to_ptr.vmem [resolvable:$true] %s21
      %27 = dma.hbm_to_vmem [thread:$0]  %s0, 19200, %s22, [#allocation3], 768, 768, 48
    $region5: #{tpu_custom_call.1} parent=1 // pred_fallthru
      _
    // Predicated region
    $region6: #{tpu_custom_call.1} parent=1 // pred_check
      _
    $region7: #{tpu_custom_call.1} parent=1 // pred_check_branch
      %29 = sbr.rel (0) target = $region9
    $region8: #{tpu_custom_call.1} parent=1 // pred_region
      %s31 = ssub.s32 24576, 24576
      %32 = vsyncadd [#allocation6], %s31
      %s33 = sshll.u32 [#allocation5], 4
      %s34 = int_to_ptr.vmem [resolvable:$true] %s33
      %39 = dma.hbm_to_vmem [thread:$0]  %s1, 24576, %s34, [#allocation6], 256, 256, 16
    $region9: #{tpu_custom_call.1} parent=1 // pred_fallthru
      _
    // Predicated region
    $region10: #{tpu_custom_call.1} parent=1 // pred_check
      _
    $region11: #{tpu_custom_call.1} parent=1 // pred_check_branch
      %41 = sbr.rel (0) target = $region13
    $region12: #{tpu_custom_call.1} parent=1 // pred_region
      _
    $region13: #{tpu_custom_call.1} parent=1 // pred_fallthru
      _
    // Predicated region
    $region14: #{tpu_custom_call.1} parent=1 // pred_check
      _
    $region15: #{tpu_custom_call.1} parent=1 // pred_check_branch
      %43 = sbr.rel (0) target = $region17
    $region16: #{tpu_custom_call.1} parent=1 // pred_region
      %s45 = ssub.s32 8192, 8192
      %46 = vsyncadd [#allocation6], %s45
      %s47 = sshll.u32 [#allocation7], 4
      %s48 = int_to_ptr.vmem [resolvable:$true] %s47
      %53 = dma.hbm_to_vmem [thread:$0]  %s3, 8192, %s48, [#allocation6], 128, 128, 8
    $region17: #{tpu_custom_call.1} parent=1 // pred_fallthru
      _
    // Predicated region
    $region18: #{tpu_custom_call.1} parent=1 // pred_check
      _
    $region19: #{tpu_custom_call.1} parent=1 // pred_check_branch
      %55 = sbr.rel (0) target = $region21
    $region20: #{tpu_custom_call.1} parent=1 // pred_region
      _
    $region21: #{tpu_custom_call.1} parent=1 // pred_fallthru
      _
    // Predicated region
    $region22: #{tpu_custom_call.1} parent=1 // pred_check
      _
    $region23: #{tpu_custom_call.1} parent=1 // pred_check_branch
      %57 = sbr.rel (0) target = $region25
    $region24: #{tpu_custom_call.1} parent=1 // pred_region
      %s59 = ssub.s32 2048, 2048
      %60 = vsyncadd [#allocation9], %s59
      %s61 = sshll.u32 [#allocation8], 4
      %s62 = int_to_ptr.vmem [resolvable:$true] %s61
      %67 = dma.hbm_to_vmem [thread:$0]  %s5, 2048, %s62, [#allocation9], 64, 64, 4
    $region25: #{tpu_custom_call.1} parent=1 // pred_fallthru
      _
    // Predicated region
    $region26: #{tpu_custom_call.1} parent=1 // pred_check
      _
    $region27: #{tpu_custom_call.1} parent=1 // pred_check_branch
      %69 = sbr.rel (0) target = $region29
    $region28: #{tpu_custom_call.1} parent=1 // pred_region
      _
    $region29: #{tpu_custom_call.1} parent=1 // pred_fallthru
      _
    // Predicated region
    $region30: #{tpu_custom_call.1} parent=1 // pred_check
      _
    $region31: #{tpu_custom_call.1} parent=1 // pred_check_branch
      %71 = sbr.rel (0) target = $region33
    $region32: #{tpu_custom_call.1} parent=1 // pred_region
      %72 = dma.done [#allocation3], 19200
    $region33: #{tpu_custom_call.1} parent=1 // pred_fallthru
      _
    // Predicated region
    $region34: #{tpu_custom_call.1} parent=1 // pred_check
      _
    $region35: #{tpu_custom_call.1} parent=1 // pred_check_branch
      %74 = sbr.rel (0) target = $region37
    $region36: #{tpu_custom_call.1} parent=1 // pred_region
      %75 = dma.done [#allocation6], 24576
    $region37: #{tpu_custom_call.1} parent=1 // pred_fallthru
      _
    // Predicated region
    $region38: #{tpu_custom_call.1} parent=1 // pred_check
      _
    $region39: #{tpu_custom_call.1} parent=1 // pred_check_branch
      %77 = sbr.rel (0) target = $region41
    $region40: #{tpu_custom_call.1} parent=1 // pred_region
      %78 = dma.done [#allocation6], 8192
    $region41: #{tpu_custom_call.1} parent=1 // pred_fallthru
      _
    // Predicated region
    $region42: #{tpu_custom_call.1} parent=1 // pred_check
      _
    $region43: #{tpu_custom_call.1} parent=1 // pred_check_branch
      %80 = sbr.rel (0) target = $region45
    $region44: #{tpu_custom_call.1} parent=1 // pred_region
      %81 = dma.done [#allocation9], 2048
    $region45: #{tpu_custom_call.1} parent=1 // pred_fallthru
      _
    %v83 = vld [vmem:[#allocation2] sm:$0xff]
    %v84 = vld [vmem:[#allocation2 + $0x8] sm:$0xff]
    %v85 = vld [vmem:[#allocation2 + $0x10] sm:$0xff]
    %v86 = vld [vmem:[#allocation2 + $0x18] sm:$0xff]
    %v87 = vld [vmem:[#allocation2 + $0x20] sm:$0xff]
    %v88 = vld [vmem:[#allocation2 + $0x28] sm:$0xff]
    %v89 = vld [vmem:[#allocation2 + $0x30] sm:$0xff]
    %v90 = vld [vmem:[#allocation2 + $0x38] sm:$0xff]
    %v91 = vld [vmem:[#allocation2 + $0x40] sm:$0xff]
    %v92 = vld [vmem:[#allocation2 + $0x48] sm:$0xff]
    %v93 = vld [vmem:[#allocation2 + $0x50] sm:$0xff]
    %v94 = vld [vmem:[#allocation2 + $0x58] sm:$0xff]
    %v95 = vld [vmem:[#allocation2 + $0x60] sm:$0xff]
    %v96 = vld [vmem:[#allocation2 + $0x68] sm:$0xff]
    %v97 = vld [vmem:[#allocation2 + $0x70] sm:$0xff]
    %v98 = vld [vmem:[#allocation2 + $0x78] sm:$0xff]
    %v99 = vld [vmem:[#allocation2 + $0x80] sm:$0xff]
    %v100 = vld [vmem:[#allocation2 + $0x88] sm:$0xff]
    %v101 = vld [vmem:[#allocation2 + $0x90] sm:$0xff]
    %v102 = vld [vmem:[#allocation2 + $0x98] sm:$0xff]
    %v103 = vld [vmem:[#allocation2 + $0xa0] sm:$0xff]
    %v104 = vld [vmem:[#allocation2 + $0xa8] sm:$0xff]
    %v105 = vld [vmem:[#allocation2 + $0xb0] sm:$0xff]
    %v106 = vld [vmem:[#allocation2 + $0xb8] sm:$0xff]
    %v107 = vld [vmem:[#allocation2 + $0xc0] sm:$0xff]
    %v108 = vld [vmem:[#allocation2 + $0xc8] sm:$0xff]
    %v109 = vld [vmem:[#allocation2 + $0xd0] sm:$0xff]
    %v110 = vld [vmem:[#allocation2 + $0xd8] sm:$0xff]
    %v111 = vld [vmem:[#allocation2 + $0xe0] sm:$0xff]
    %v112 = vld [vmem:[#allocation2 + $0xe8] sm:$0xff]
    %v113 = vld [vmem:[#allocation2 + $0xf0] sm:$0xff]
    %v114 = vld [vmem:[#allocation2 + $0xf8] sm:$0xff]
    %v115 = vld [vmem:[#allocation2 + $0x100] sm:$0xff]
    %v116 = vld [vmem:[#allocation2 + $0x108] sm:$0xff]
    %v117 = vld [vmem:[#allocation2 + $0x110] sm:$0xff]
    %v118 = vld [vmem:[#allocation2 + $0x118] sm:$0xff]
    %v119 = vld [vmem:[#allocation2 + $0x120] sm:$0xff]
    %v120 = vld [vmem:[#allocation2 + $0x128] sm:$0xff]
    %v121 = vld [vmem:[#allocation2 + $0x130] sm:$0xff]
    %v122 = vld [vmem:[#allocation2 + $0x138] sm:$0xff]
    %v123 = vld [vmem:[#allocation2 + $0x140] sm:$0xff]
    %v124 = vld [vmem:[#allocation2 + $0x148] sm:$0xff]
    %v125 = vld [vmem:[#allocation2 + $0x150] sm:$0xff]
    %v126 = vld [vmem:[#allocation2 + $0x158] sm:$0xff]
    %v127 = vld [vmem:[#allocation2 + $0x160] sm:$0xff]
    %v128 = vld [vmem:[#allocation2 + $0x168] sm:$0xff]
    %v129 = vld [vmem:[#allocation2 + $0x170] sm:$0xff]
    %v130 = vld [vmem:[#allocation2 + $0x178] sm:$0xff]
    %v131 = vld [vmem:[#allocation2 + $0x180] sm:$0xff]
    %v132 = vld [vmem:[#allocation2 + $0x188] sm:$0xff]
    %v133 = vld [vmem:[#allocation2 + $0x190] sm:$0xff]
    %v134 = vld [vmem:[#allocation2 + $0x198] sm:$0xff]
    %v135 = vld [vmem:[#allocation2 + $0x1a0] sm:$0xff]
    %v136 = vld [vmem:[#allocation2 + $0x1a8] sm:$0xff]
    %v137 = vld [vmem:[#allocation2 + $0x1b0] sm:$0xff]
    %v138 = vld [vmem:[#allocation2 + $0x1b8] sm:$0xff]
    %v139 = vld [vmem:[#allocation2 + $0x1c0] sm:$0xff]
    %v140 = vld [vmem:[#allocation2 + $0x1c8] sm:$0xff]
    %v141 = vld [vmem:[#allocation2 + $0x1d0] sm:$0xff]
    %v142 = vld [vmem:[#allocation2 + $0x1d8] sm:$0xff]
    %v143 = vld [vmem:[#allocation2 + $0x1e0] sm:$0xff]
    %v144 = vld [vmem:[#allocation2 + $0x1e8] sm:$0xff]
    %v145 = vld [vmem:[#allocation2 + $0x1f0] sm:$0xff]
    %v146 = vld [vmem:[#allocation2 + $0x1f8] sm:$0xff]
    %v147 = vld [vmem:[#allocation2 + $0x200] sm:$0xff]
    %v148 = vld [vmem:[#allocation2 + $0x208] sm:$0xff]
    %v149 = vld [vmem:[#allocation2 + $0x210] sm:$0xff]
    %v150 = vld [vmem:[#allocation2 + $0x218] sm:$0xff]
    %v151 = vld [vmem:[#allocation2 + $0x220] sm:$0xff]
    %v152 = vld [vmem:[#allocation2 + $0x228] sm:$0xff]
    %v153 = vld [vmem:[#allocation2 + $0x230] sm:$0xff]
    %v154 = vld [vmem:[#allocation2 + $0x238] sm:$0xff]
    %v155 = vld [vmem:[#allocation2 + $0x240] sm:$0xff]
    %v156 = vld [vmem:[#allocation2 + $0x248] sm:$0xff]
    %v157 = vld [vmem:[#allocation2 + $0x250] sm:$0xff]
    %v158 = vld [vmem:[#allocation2 + $0x258] sm:$0xff]
    %v159 = vld [vmem:[#allocation2 + $0x260] sm:$0xff]
    %v160 = vld [vmem:[#allocation2 + $0x268] sm:$0xff]
    %v161 = vld [vmem:[#allocation2 + $0x270] sm:$0xff]
    %v162 = vld [vmem:[#allocation2 + $0x278] sm:$0xff]
    %v163 = vld [vmem:[#allocation2 + $0x280] sm:$0xff]
    %v164 = vld [vmem:[#allocation2 + $0x288] sm:$0xff]
    %v165 = vld [vmem:[#allocation2 + $0x290] sm:$0xff]
    %v166 = vld [vmem:[#allocation2 + $0x298] sm:$0xff]
    %v167 = vld [vmem:[#allocation2 + $0x2a0] sm:$0xff]
    %v168 = vld [vmem:[#allocation2 + $0x2a8] sm:$0xff]
    %v169 = vld [vmem:[#allocation2 + $0x2b0] sm:$0xff]
    %v170 = vld [vmem:[#allocation2 + $0x2b8] sm:$0xff]
    %v171 = vld [vmem:[#allocation2 + $0x2c0] sm:$0xff]
    %v172 = vld [vmem:[#allocation2 + $0x2c8] sm:$0xff]
    %v173 = vld [vmem:[#allocation2 + $0x2d0] sm:$0xff]
    %v174 = vld [vmem:[#allocation2 + $0x2d8] sm:$0xff]
    %v175 = vld [vmem:[#allocation2 + $0x2e0] sm:$0xff]
    %v176 = vld [vmem:[#allocation2 + $0x2e8] sm:$0xff]
    %v177 = vld [vmem:[#allocation2 + $0x2f0] sm:$0xff]
    %v178 = vld [vmem:[#allocation2 + $0x2f8] sm:$0xff]
    %v179 = vld [vmem:[#allocation2 + $0x300] sm:$0xff]
    %v180 = vld [vmem:[#allocation2 + $0x308] sm:$0xff]
    %v181 = vld [vmem:[#allocation2 + $0x310] sm:$0xff]
    %v182 = vld [vmem:[#allocation2 + $0x318] sm:$0xff]
    %v183 = vld [vmem:[#allocation2 + $0x320] sm:$0xff]
    %v184 = vld [vmem:[#allocation2 + $0x328] sm:$0xff]
    %v185 = vld [vmem:[#allocation2 + $0x330] sm:$0xff]
    %v186 = vld [vmem:[#allocation2 + $0x338] sm:$0xff]
    %v187 = vld [vmem:[#allocation2 + $0x340] sm:$0xff]
    %v188 = vld [vmem:[#allocation2 + $0x348] sm:$0xff]
    %v189 = vld [vmem:[#allocation2 + $0x350] sm:$0xff]
    %v190 = vld [vmem:[#allocation2 + $0x358] sm:$0xff]
    %v191 = vld [vmem:[#allocation2 + $0x360] sm:$0xff]
    %v192 = vld [vmem:[#allocation2 + $0x368] sm:$0xff]
    %v193 = vld [vmem:[#allocation2 + $0x370] sm:$0xff]
    %v194 = vld [vmem:[#allocation2 + $0x378] sm:$0xff]
    %v195 = vld [vmem:[#allocation2 + $0x380] sm:$0xff]
    %v196 = vld [vmem:[#allocation2 + $0x388] sm:$0xff]
    %v197 = vld [vmem:[#allocation2 + $0x390] sm:$0xff]
    %v198 = vld [vmem:[#allocation2 + $0x398] sm:$0xff]
    %v199 = vld [vmem:[#allocation2 + $0x3a0] sm:$0xff]
    %v200 = vld [vmem:[#allocation2 + $0x3a8] sm:$0xff]
    %v201 = vld [vmem:[#allocation2 + $0x3b0] sm:$0xff]
    %v202 = vld [vmem:[#allocation2 + $0x3b8] sm:$0xff]
    %v203 = vld [vmem:[#allocation2 + $0x3c0] sm:$0xff]
    %v204 = vld [vmem:[#allocation2 + $0x3c8] sm:$0xff]
    %v205 = vld [vmem:[#allocation2 + $0x3d0] sm:$0xff]
    %v206 = vld [vmem:[#allocation2 + $0x3d8] sm:$0xff]
    %v207 = vld [vmem:[#allocation2 + $0x3e0] sm:$0xff]
    %v208 = vld [vmem:[#allocation2 + $0x3e8] sm:$0xff]
    %v209 = vld [vmem:[#allocation2 + $0x3f0] sm:$0xff]
    %v210 = vld [vmem:[#allocation2 + $0x3f8] sm:$0xff]
    %v211 = vld [vmem:[#allocation2 + $0x400] sm:$0xff]
    %v212 = vld [vmem:[#allocation2 + $0x408] sm:$0xff]
    %v213 = vld [vmem:[#allocation2 + $0x410] sm:$0xff]
    %v214 = vld [vmem:[#allocation2 + $0x418] sm:$0xff]
    %v215 = vld [vmem:[#allocation2 + $0x420] sm:$0xff]
    %v216 = vld [vmem:[#allocation2 + $0x428] sm:$0xff]
    %v217 = vld [vmem:[#allocation2 + $0x430] sm:$0xff]
    %v218 = vld [vmem:[#allocation2 + $0x438] sm:$0xff]
    %v219 = vld [vmem:[#allocation2 + $0x440] sm:$0xff]
    %v220 = vld [vmem:[#allocation2 + $0x448] sm:$0xff]
    %v221 = vld [vmem:[#allocation2 + $0x450] sm:$0xff]
    %v222 = vld [vmem:[#allocation2 + $0x458] sm:$0xff]
    %v223 = vld [vmem:[#allocation2 + $0x460] sm:$0xff]
    %v224 = vld [vmem:[#allocation2 + $0x468] sm:$0xff]
    %v225 = vld [vmem:[#allocation2 + $0x470] sm:$0xff]
    %v226 = vld [vmem:[#allocation2 + $0x478] sm:$0xff]
    %v227 = vld [vmem:[#allocation2 + $0x480] sm:$0xff]
    %v228 = vld [vmem:[#allocation2 + $0x488] sm:$0xff]
    %v229 = vld [vmem:[#allocation2 + $0x490] sm:$0xff]
    %v230 = vld [vmem:[#allocation2 + $0x498] sm:$0xff]
    %v231 = vld [vmem:[#allocation2 + $0x4a0] sm:$0xff]
    %v232 = vld [vmem:[#allocation2 + $0x4a8] sm:$0xff]
    %v233 = vpack.c.bf16 %v89, %v83
    %v234 = vpack.c.bf16 %v90, %v84
    %v235 = vpack.c.bf16 %v91, %v85
    %v236 = vpack.c.bf16 %v92, %v86
    %v237 = vpack.c.bf16 %v93, %v87
    %v238 = vpack.c.bf16 %v94, %v88
    %v239 = vpack.c.bf16 %v101, %v95
    %v240 = vpack.c.bf16 %v102, %v96
    %v241 = vpack.c.bf16 %v103, %v97
    %v242 = vpack.c.bf16 %v104, %v98
    %v243 = vpack.c.bf16 %v105, %v99
    %v244 = vpack.c.bf16 %v106, %v100
    %v245 = vpack.c.bf16 %v113, %v107
    %v246 = vpack.c.bf16 %v114, %v108
    %v247 = vpack.c.bf16 %v115, %v109
    %v248 = vpack.c.bf16 %v116, %v110
    %v249 = vpack.c.bf16 %v117, %v111
    %v250 = vpack.c.bf16 %v118, %v112
    %v251 = vpack.c.bf16 %v125, %v119
    %v252 = vpack.c.bf16 %v126, %v120
    %v253 = vpack.c.bf16 %v127, %v121
    %v254 = vpack.c.bf16 %v128, %v122
    %v255 = vpack.c.bf16 %v129, %v123
    %v256 = vpack.c.bf16 %v130, %v124
    %v257 = vpack.c.bf16 %v137, %v131
    %v258 = vpack.c.bf16 %v138, %v132
    %v259 = vpack.c.bf16 %v139, %v133
    %v260 = vpack.c.bf16 %v140, %v134
    %v261 = vpack.c.bf16 %v141, %v135
    %v262 = vpack.c.bf16 %v142, %v136
    %v263 = vpack.c.bf16 %v149, %v143
    %v264 = vpack.c.bf16 %v150, %v144
    %v265 = vpack.c.bf16 %v151, %v145
    %v266 = vpack.c.bf16 %v152, %v146
    %v267 = vpack.c.bf16 %v153, %v147
    %v268 = vpack.c.bf16 %v154, %v148
    %v269 = vpack.c.bf16 %v161, %v155
    %v270 = vpack.c.bf16 %v162, %v156
    %v271 = vpack.c.bf16 %v163, %v157
    %v272 = vpack.c.bf16 %v164, %v158
    %v273 = vpack.c.bf16 %v165, %v159
    %v274 = vpack.c.bf16 %v166, %v160
    %v275 = vpack.c.bf16 %v173, %v167
    %v276 = vpack.c.bf16 %v174, %v168
    %v277 = vpack.c.bf16 %v175, %v169
    %v278 = vpack.c.bf16 %v176, %v170
    %v279 = vpack.c.bf16 %v177, %v171
    %v280 = vpack.c.bf16 %v178, %v172
    %v281 = vpack.c.bf16 %v185, %v179
    %v282 = vpack.c.bf16 %v186, %v180
    %v283 = vpack.c.bf16 %v187, %v181
    %v284 = vpack.c.bf16 %v188, %v182
    %v285 = vpack.c.bf16 %v189, %v183
    %v286 = vpack.c.bf16 %v190, %v184
    %v287 = vpack.c.bf16 %v197, %v191
    %v288 = vpack.c.bf16 %v198, %v192
    %v289 = vpack.c.bf16 %v199, %v193
    %v290 = vpack.c.bf16 %v200, %v194
    %v291 = vpack.c.bf16 %v201, %v195
    %v292 = vpack.c.bf16 %v202, %v196
    %v293 = vpack.c.bf16 %v209, %v203
    %v294 = vpack.c.bf16 %v210, %v204
    %v295 = vpack.c.bf16 %v211, %v205
    %v296 = vpack.c.bf16 %v212, %v206
    %v297 = vpack.c.bf16 %v213, %v207
    %v298 = vpack.c.bf16 %v214, %v208
    %v299 = vpack.c.bf16 %v221, %v215
    %v300 = vpack.c.bf16 %v222, %v216
    %v301 = vpack.c.bf16 %v223, %v217
    %v302 = vpack.c.bf16 %v224, %v218
    %v303 = vpack.c.bf16 %v225, %v219
    %v304 = vpack.c.bf16 %v226, %v220
    %v305 = vpack.c.bf16 %v227, %v227
    %v306 = vpack.c.bf16 %v228, %v228
    %v307 = vpack.c.bf16 %v229, %v229
    %v308 = vpack.c.bf16 %v230, %v230
    %v309 = vpack.c.bf16 %v231, %v231
    %v310 = vpack.c.bf16 %v232, %v232
    %v311 = vld [vmem:[#allocation5] sm:$0xff]
    %v312 = vld [vmem:[#allocation5 + $0x8] sm:$0xff]
    %v313 = vld [vmem:[#allocation5 + $0x10] sm:$0xff]
    %v314 = vld [vmem:[#allocation5 + $0x18] sm:$0xff]
    %v315 = vld [vmem:[#allocation5 + $0x20] sm:$0xff]
    %v316 = vld [vmem:[#allocation5 + $0x28] sm:$0xff]
    %v317 = vld [vmem:[#allocation5 + $0x30] sm:$0xff]
    %v318 = vld [vmem:[#allocation5 + $0x38] sm:$0xff]
    %v319 = vld [vmem:[#allocation5 + $0x40] sm:$0xff]
    %v320 = vld [vmem:[#allocation5 + $0x48] sm:$0xff]
    %v321 = vld [vmem:[#allocation5 + $0x50] sm:$0xff]
    %v322 = vld [vmem:[#allocation5 + $0x58] sm:$0xff]
    %v323 = vld [vmem:[#allocation5 + $0x60] sm:$0xff]
    %v324 = vld [vmem:[#allocation5 + $0x68] sm:$0xff]
    %v325 = vld [vmem:[#allocation5 + $0x70] sm:$0xff]
    %v326 = vld [vmem:[#allocation5 + $0x78] sm:$0xff]
    %v327 = vld [vmem:[#allocation5 + $0x80] sm:$0xff]
    %v328 = vld [vmem:[#allocation5 + $0x88] sm:$0xff]
    %v329 = vld [vmem:[#allocation5 + $0x90] sm:$0xff]
    %v330 = vld [vmem:[#allocation5 + $0x98] sm:$0xff]
    %v331 = vld [vmem:[#allocation5 + $0xa0] sm:$0xff]
    %v332 = vld [vmem:[#allocation5 + $0xa8] sm:$0xff]
    %v333 = vld [vmem:[#allocation5 + $0xb0] sm:$0xff]
    %v334 = vld [vmem:[#allocation5 + $0xb8] sm:$0xff]
    %v335 = vld [vmem:[#allocation5 + $0xc0] sm:$0xff]
    %v336 = vld [vmem:[#allocation5 + $0xc8] sm:$0xff]
    %v337 = vld [vmem:[#allocation5 + $0xd0] sm:$0xff]
    %v338 = vld [vmem:[#allocation5 + $0xd8] sm:$0xff]
    %v339 = vld [vmem:[#allocation5 + $0xe0] sm:$0xff]
    %v340 = vld [vmem:[#allocation5 + $0xe8] sm:$0xff]
    %v341 = vld [vmem:[#allocation5 + $0xf0] sm:$0xff]
    %v342 = vld [vmem:[#allocation5 + $0xf8] sm:$0xff]
    %v343 = vld [vmem:[#allocation5 + $0x100] sm:$0xff]
    %v344 = vld [vmem:[#allocation5 + $0x108] sm:$0xff]
    %v345 = vld [vmem:[#allocation5 + $0x110] sm:$0xff]
    %v346 = vld [vmem:[#allocation5 + $0x118] sm:$0xff]
    %v347 = vld [vmem:[#allocation5 + $0x120] sm:$0xff]
    %v348 = vld [vmem:[#allocation5 + $0x128] sm:$0xff]
    %v349 = vld [vmem:[#allocation5 + $0x130] sm:$0xff]
    %v350 = vld [vmem:[#allocation5 + $0x138] sm:$0xff]
    %v351 = vld [vmem:[#allocation5 + $0x140] sm:$0xff]
    %v352 = vld [vmem:[#allocation5 + $0x148] sm:$0xff]
    %v353 = vld [vmem:[#allocation5 + $0x150] sm:$0xff]
    %v354 = vld [vmem:[#allocation5 + $0x158] sm:$0xff]
    %v355 = vld [vmem:[#allocation5 + $0x160] sm:$0xff]
    %v356 = vld [vmem:[#allocation5 + $0x168] sm:$0xff]
    %v357 = vld [vmem:[#allocation5 + $0x170] sm:$0xff]
    %v358 = vld [vmem:[#allocation5 + $0x178] sm:$0xff]
    %v359 = vld [vmem:[#allocation5 + $0x180] sm:$0xff]
    %v360 = vld [vmem:[#allocation5 + $0x188] sm:$0xff]
    %v361 = vld [vmem:[#allocation5 + $0x190] sm:$0xff]
    %v362 = vld [vmem:[#allocation5 + $0x198] sm:$0xff]
    %v363 = vld [vmem:[#allocation5 + $0x1a0] sm:$0xff]
    %v364 = vld [vmem:[#allocation5 + $0x1a8] sm:$0xff]
    %v365 = vld [vmem:[#allocation5 + $0x1b0] sm:$0xff]
    %v366 = vld [vmem:[#allocation5 + $0x1b8] sm:$0xff]
    %v367 = vld [vmem:[#allocation5 + $0x1c0] sm:$0xff]
    %v368 = vld [vmem:[#allocation5 + $0x1c8] sm:$0xff]
    %v369 = vld [vmem:[#allocation5 + $0x1d0] sm:$0xff]
    %v370 = vld [vmem:[#allocation5 + $0x1d8] sm:$0xff]
    %v371 = vld [vmem:[#allocation5 + $0x1e0] sm:$0xff]
    %v372 = vld [vmem:[#allocation5 + $0x1e8] sm:$0xff]
    %v373 = vld [vmem:[#allocation5 + $0x1f0] sm:$0xff]
    %v374 = vld [vmem:[#allocation5 + $0x1f8] sm:$0xff]
    %v375 = vld [vmem:[#allocation5 + $0x200] sm:$0xff]
    %v376 = vld [vmem:[#allocation5 + $0x208] sm:$0xff]
    %v377 = vld [vmem:[#allocation5 + $0x210] sm:$0xff]
    %v378 = vld [vmem:[#allocation5 + $0x218] sm:$0xff]
    %v379 = vld [vmem:[#allocation5 + $0x220] sm:$0xff]
    %v380 = vld [vmem:[#allocation5 + $0x228] sm:$0xff]
    %v381 = vld [vmem:[#allocation5 + $0x230] sm:$0xff]
    %v382 = vld [vmem:[#allocation5 + $0x238] sm:$0xff]
    %v383 = vld [vmem:[#allocation5 + $0x240] sm:$0xff]
    %v384 = vld [vmem:[#allocation5 + $0x248] sm:$0xff]
    %v385 = vld [vmem:[#allocation5 + $0x250] sm:$0xff]
    %v386 = vld [vmem:[#allocation5 + $0x258] sm:$0xff]
    %v387 = vld [vmem:[#allocation5 + $0x260] sm:$0xff]
    %v388 = vld [vmem:[#allocation5 + $0x268] sm:$0xff]
    %v389 = vld [vmem:[#allocation5 + $0x270] sm:$0xff]
    %v390 = vld [vmem:[#allocation5 + $0x278] sm:$0xff]
    %v391 = vld [vmem:[#allocation5 + $0x280] sm:$0xff]
    %v392 = vld [vmem:[#allocation5 + $0x288] sm:$0xff]
    %v393 = vld [vmem:[#allocation5 + $0x290] sm:$0xff]
    %v394 = vld [vmem:[#allocation5 + $0x298] sm:$0xff]
    %v395 = vld [vmem:[#allocation5 + $0x2a0] sm:$0xff]
    %v396 = vld [vmem:[#allocation5 + $0x2a8] sm:$0xff]
    %v397 = vld [vmem:[#allocation5 + $0x2b0] sm:$0xff]
    %v398 = vld [vmem:[#allocation5 + $0x2b8] sm:$0xff]
    %v399 = vld [vmem:[#allocation5 + $0x2c0] sm:$0xff]
    %v400 = vld [vmem:[#allocation5 + $0x2c8] sm:$0xff]
    %v401 = vld [vmem:[#allocation5 + $0x2d0] sm:$0xff]
    %v402 = vld [vmem:[#allocation5 + $0x2d8] sm:$0xff]
    %v403 = vld [vmem:[#allocation5 + $0x2e0] sm:$0xff]
    %v404 = vld [vmem:[#allocation5 + $0x2e8] sm:$0xff]
    %v405 = vld [vmem:[#allocation5 + $0x2f0] sm:$0xff]
    %v406 = vld [vmem:[#allocation5 + $0x2f8] sm:$0xff]
    %v407 = vld [vmem:[#allocation5 + $0x300] sm:$0xff]
    %v408 = vld [vmem:[#allocation5 + $0x308] sm:$0xff]
    %v409 = vld [vmem:[#allocation5 + $0x310] sm:$0xff]
    %v410 = vld [vmem:[#allocation5 + $0x318] sm:$0xff]
    %v411 = vld [vmem:[#allocation5 + $0x320] sm:$0xff]
    %v412 = vld [vmem:[#allocation5 + $0x328] sm:$0xff]
    %v413 = vld [vmem:[#allocation5 + $0x330] sm:$0xff]
    %v414 = vld [vmem:[#allocation5 + $0x338] sm:$0xff]
    %v415 = vld [vmem:[#allocation5 + $0x340] sm:$0xff]
    %v416 = vld [vmem:[#allocation5 + $0x348] sm:$0xff]
    %v417 = vld [vmem:[#allocation5 + $0x350] sm:$0xff]
    %v418 = vld [vmem:[#allocation5 + $0x358] sm:$0xff]
    %v419 = vld [vmem:[#allocation5 + $0x360] sm:$0xff]
    %v420 = vld [vmem:[#allocation5 + $0x368] sm:$0xff]
    %v421 = vld [vmem:[#allocation5 + $0x370] sm:$0xff]
    %v422 = vld [vmem:[#allocation5 + $0x378] sm:$0xff]
    %v423 = vld [vmem:[#allocation5 + $0x380] sm:$0xff]
    %v424 = vld [vmem:[#allocation5 + $0x388] sm:$0xff]
    %v425 = vld [vmem:[#allocation5 + $0x390] sm:$0xff]
    %v426 = vld [vmem:[#allocation5 + $0x398] sm:$0xff]
    %v427 = vld [vmem:[#allocation5 + $0x3a0] sm:$0xff]
    %v428 = vld [vmem:[#allocation5 + $0x3a8] sm:$0xff]
    %v429 = vld [vmem:[#allocation5 + $0x3b0] sm:$0xff]
    %v430 = vld [vmem:[#allocation5 + $0x3b8] sm:$0xff]
    %v431 = vld [vmem:[#allocation5 + $0x3c0] sm:$0xff]
    %v432 = vld [vmem:[#allocation5 + $0x3c8] sm:$0xff]
    %v433 = vld [vmem:[#allocation5 + $0x3d0] sm:$0xff]
    %v434 = vld [vmem:[#allocation5 + $0x3d8] sm:$0xff]
    %v435 = vld [vmem:[#allocation5 + $0x3e0] sm:$0xff]
    %v436 = vld [vmem:[#allocation5 + $0x3e8] sm:$0xff]
    %v437 = vld [vmem:[#allocation5 + $0x3f0] sm:$0xff]
    %v438 = vld [vmem:[#allocation5 + $0x3f8] sm:$0xff]
    %v439 = vld [vmem:[#allocation5 + $0x400] sm:$0xff]
    %v440 = vld [vmem:[#allocation5 + $0x408] sm:$0xff]
    %v441 = vld [vmem:[#allocation5 + $0x410] sm:$0xff]
    %v442 = vld [vmem:[#allocation5 + $0x418] sm:$0xff]
    %v443 = vld [vmem:[#allocation5 + $0x420] sm:$0xff]
    %v444 = vld [vmem:[#allocation5 + $0x428] sm:$0xff]
    %v445 = vld [vmem:[#allocation5 + $0x430] sm:$0xff]
    %v446 = vld [vmem:[#allocation5 + $0x438] sm:$0xff]
    %v447 = vld [vmem:[#allocation5 + $0x440] sm:$0xff]
    %v448 = vld [vmem:[#allocation5 + $0x448] sm:$0xff]
    %v449 = vld [vmem:[#allocation5 + $0x450] sm:$0xff]
    %v450 = vld [vmem:[#allocation5 + $0x458] sm:$0xff]
    %v451 = vld [vmem:[#allocation5 + $0x460] sm:$0xff]
    %v452 = vld [vmem:[#allocation5 + $0x468] sm:$0xff]
    %v453 = vld [vmem:[#allocation5 + $0x470] sm:$0xff]
    %v454 = vld [vmem:[#allocation5 + $0x478] sm:$0xff]
    %v455 = vld [vmem:[#allocation5 + $0x480] sm:$0xff]
    %v456 = vld [vmem:[#allocation5 + $0x488] sm:$0xff]
    %v457 = vld [vmem:[#allocation5 + $0x490] sm:$0xff]
    %v458 = vld [vmem:[#allocation5 + $0x498] sm:$0xff]
    %v459 = vld [vmem:[#allocation5 + $0x4a0] sm:$0xff]
    %v460 = vld [vmem:[#allocation5 + $0x4a8] sm:$0xff]
    %v461 = vld [vmem:[#allocation5 + $0x4b0] sm:$0xff]
    %v462 = vld [vmem:[#allocation5 + $0x4b8] sm:$0xff]
    %v463 = vld [vmem:[#allocation5 + $0x4c0] sm:$0xff]
    %v464 = vld [vmem:[#allocation5 + $0x4c8] sm:$0xff]
    %v465 = vld [vmem:[#allocation5 + $0x4d0] sm:$0xff]
    %v466 = vld [vmem:[#allocation5 + $0x4d8] sm:$0xff]
    %v467 = vld [vmem:[#allocation5 + $0x4e0] sm:$0xff]
    %v468 = vld [vmem:[#allocation5 + $0x4e8] sm:$0xff]
    %v469 = vld [vmem:[#allocation5 + $0x4f0] sm:$0xff]
    %v470 = vld [vmem:[#allocation5 + $0x4f8] sm:$0xff]
    %v471 = vld [vmem:[#allocation5 + $0x500] sm:$0xff]
    %v472 = vld [vmem:[#allocation5 + $0x508] sm:$0xff]
    %v473 = vld [vmem:[#allocation5 + $0x510] sm:$0xff]
    %v474 = vld [vmem:[#allocation5 + $0x518] sm:$0xff]
    %v475 = vld [vmem:[#allocation5 + $0x520] sm:$0xff]
    %v476 = vld [vmem:[#allocation5 + $0x528] sm:$0xff]
    %v477 = vld [vmem:[#allocation5 + $0x530] sm:$0xff]
    %v478 = vld [vmem:[#allocation5 + $0x538] sm:$0xff]
    %v479 = vld [vmem:[#allocation5 + $0x540] sm:$0xff]
    %v480 = vld [vmem:[#allocation5 + $0x548] sm:$0xff]
    %v481 = vld [vmem:[#allocation5 + $0x550] sm:$0xff]
    %v482 = vld [vmem:[#allocation5 + $0x558] sm:$0xff]
    %v483 = vld [vmem:[#allocation5 + $0x560] sm:$0xff]
    %v484 = vld [vmem:[#allocation5 + $0x568] sm:$0xff]
    %v485 = vld [vmem:[#allocation5 + $0x570] sm:$0xff]
    %v486 = vld [vmem:[#allocation5 + $0x578] sm:$0xff]
    %v487 = vld [vmem:[#allocation5 + $0x580] sm:$0xff]
    %v488 = vld [vmem:[#allocation5 + $0x588] sm:$0xff]
    %v489 = vld [vmem:[#allocation5 + $0x590] sm:$0xff]
    %v490 = vld [vmem:[#allocation5 + $0x598] sm:$0xff]
    %v491 = vld [vmem:[#allocation5 + $0x5a0] sm:$0xff]
    %v492 = vld [vmem:[#allocation5 + $0x5a8] sm:$0xff]
    %v493 = vld [vmem:[#allocation5 + $0x5b0] sm:$0xff]
    %v494 = vld [vmem:[#allocation5 + $0x5b8] sm:$0xff]
    %v495 = vld [vmem:[#allocation5 + $0x5c0] sm:$0xff]
    %v496 = vld [vmem:[#allocation5 + $0x5c8] sm:$0xff]
    %v497 = vld [vmem:[#allocation5 + $0x5d0] sm:$0xff]
    %v498 = vld [vmem:[#allocation5 + $0x5d8] sm:$0xff]
    %v499 = vld [vmem:[#allocation5 + $0x5e0] sm:$0xff]
    %v500 = vld [vmem:[#allocation5 + $0x5e8] sm:$0xff]
    %v501 = vld [vmem:[#allocation5 + $0x5f0] sm:$0xff]
    %v502 = vld [vmem:[#allocation5 + $0x5f8] sm:$0xff]
    %v503 = vld [vmem:[%s2] sm:$0xf]
    %v505 = vlaneseq
    %v506 = vshrl.u32 %v505, 7
    %v507 = vsub.s32 0, %v506
    %v508 = vrot.slane %v503, %v507
    %v509 = vlaneseq
    %v510 = vshrl.u32 %v509, 7
    %v511 = vsub.s32 1, %v510
    %v512 = vrot.slane %v503, %v511
    %v513 = vlaneseq
    %v514 = vshrl.u32 %v513, 7
    %v515 = vsub.s32 2, %v514
    %v516 = vrot.slane %v503, %v515
    %v517 = vlaneseq
    %v518 = vshrl.u32 %v517, 7
    %v519 = vsub.s32 3, %v518
    %v520 = vrot.slane %v503, %v519
    %v717 = vunpack.c.l.b16 %v311
    %v718 = vunpack.c.h.b16 %v311
    %v719 = vunpack.c.l.b16 %v312
    %v720 = vunpack.c.h.b16 %v312
    %v721 = vunpack.c.l.b16 %v313
    %v722 = vunpack.c.h.b16 %v313
    %v723 = vunpack.c.l.b16 %v314
    %v724 = vunpack.c.h.b16 %v314
    %v725 = vunpack.c.l.b16 %v315
    %v726 = vunpack.c.h.b16 %v315
    %v727 = vunpack.c.l.b16 %v316
    %v728 = vunpack.c.h.b16 %v316
    %v729 = vunpack.c.l.b16 %v317
    %v730 = vunpack.c.h.b16 %v317
    %v731 = vunpack.c.l.b16 %v318
    %v732 = vunpack.c.h.b16 %v318
    %v733 = vunpack.c.l.b16 %v319
    %v734 = vunpack.c.h.b16 %v319
    %v735 = vunpack.c.l.b16 %v320
    %v736 = vunpack.c.h.b16 %v320
    %v737 = vunpack.c.l.b16 %v321
    %v738 = vunpack.c.h.b16 %v321
    %v739 = vunpack.c.l.b16 %v322
    %v740 = vunpack.c.h.b16 %v322
    %v741 = vunpack.c.l.b16 %v323
    %v742 = vunpack.c.h.b16 %v323
    %v743 = vunpack.c.l.b16 %v324
    %v744 = vunpack.c.h.b16 %v324
    %v745 = vunpack.c.l.b16 %v325
    %v746 = vunpack.c.h.b16 %v325
    %v747 = vunpack.c.l.b16 %v326
    %v748 = vunpack.c.h.b16 %v326
    %v749 = vunpack.c.l.b16 %v327
    %v750 = vunpack.c.h.b16 %v327
    %v751 = vunpack.c.l.b16 %v328
    %v752 = vunpack.c.h.b16 %v328
    %v753 = vunpack.c.l.b16 %v329
    %v754 = vunpack.c.h.b16 %v329
    %v755 = vunpack.c.l.b16 %v330
    %v756 = vunpack.c.h.b16 %v330
    %v757 = vunpack.c.l.b16 %v331
    %v758 = vunpack.c.h.b16 %v331
    %v759 = vunpack.c.l.b16 %v332
    %v760 = vunpack.c.h.b16 %v332
    %v761 = vunpack.c.l.b16 %v333
    %v762 = vunpack.c.h.b16 %v333
    %v763 = vunpack.c.l.b16 %v334
    %v764 = vunpack.c.h.b16 %v334
    %v765 = vunpack.c.l.b16 %v335
    %v766 = vunpack.c.h.b16 %v335
    %v767 = vunpack.c.l.b16 %v336
    %v768 = vunpack.c.h.b16 %v336
    %v769 = vunpack.c.l.b16 %v337
    %v770 = vunpack.c.h.b16 %v337
    %v771 = vunpack.c.l.b16 %v338
    %v772 = vunpack.c.h.b16 %v338
    %v773 = vunpack.c.l.b16 %v339
    %v774 = vunpack.c.h.b16 %v339
    %v775 = vunpack.c.l.b16 %v340
    %v776 = vunpack.c.h.b16 %v340
    %v777 = vunpack.c.l.b16 %v341
    %v778 = vunpack.c.h.b16 %v341
    %v779 = vunpack.c.l.b16 %v342
    %v780 = vunpack.c.h.b16 %v342
    %v781 = vunpack.c.l.b16 %v343
    %v782 = vunpack.c.h.b16 %v343
    %v783 = vunpack.c.l.b16 %v344
    %v784 = vunpack.c.h.b16 %v344
    %v785 = vunpack.c.l.b16 %v345
    %v786 = vunpack.c.h.b16 %v345
    %v787 = vunpack.c.l.b16 %v346
    %v788 = vunpack.c.h.b16 %v346
    %v789 = vunpack.c.l.b16 %v347
    %v790 = vunpack.c.h.b16 %v347
    %v791 = vunpack.c.l.b16 %v348
    %v792 = vunpack.c.h.b16 %v348
    %v793 = vunpack.c.l.b16 %v349
    %v794 = vunpack.c.h.b16 %v349
    %v795 = vunpack.c.l.b16 %v350
    %v796 = vunpack.c.h.b16 %v350
    %v797 = vunpack.c.l.b16 %v351
    %v798 = vunpack.c.h.b16 %v351
    %v799 = vunpack.c.l.b16 %v352
    %v800 = vunpack.c.h.b16 %v352
    %v801 = vunpack.c.l.b16 %v353
    %v802 = vunpack.c.h.b16 %v353
    %v803 = vunpack.c.l.b16 %v354
    %v804 = vunpack.c.h.b16 %v354
    %v805 = vunpack.c.l.b16 %v355
    %v806 = vunpack.c.h.b16 %v355
    %v807 = vunpack.c.l.b16 %v356
    %v808 = vunpack.c.h.b16 %v356
    %v809 = vunpack.c.l.b16 %v357
    %v810 = vunpack.c.h.b16 %v357
    %v811 = vunpack.c.l.b16 %v358
    %v812 = vunpack.c.h.b16 %v358
    %v813 = vunpack.c.l.b16 %v359
    %v814 = vunpack.c.h.b16 %v359
    %v815 = vunpack.c.l.b16 %v360
    %v816 = vunpack.c.h.b16 %v360
    %v817 = vunpack.c.l.b16 %v361
    %v818 = vunpack.c.h.b16 %v361
    %v819 = vunpack.c.l.b16 %v362
    %v820 = vunpack.c.h.b16 %v362
    %v821 = vunpack.c.l.b16 %v363
    %v822 = vunpack.c.h.b16 %v363
    %v823 = vunpack.c.l.b16 %v364
    %v824 = vunpack.c.h.b16 %v364
    %v825 = vunpack.c.l.b16 %v365
    %v826 = vunpack.c.h.b16 %v365
    %v827 = vunpack.c.l.b16 %v366
    %v828 = vunpack.c.h.b16 %v366
    %v829 = vunpack.c.l.b16 %v367
    %v830 = vunpack.c.h.b16 %v367
    %v831 = vunpack.c.l.b16 %v368
    %v832 = vunpack.c.h.b16 %v368
    %v833 = vunpack.c.l.b16 %v369
    %v834 = vunpack.c.h.b16 %v369
    %v835 = vunpack.c.l.b16 %v370
    %v836 = vunpack.c.h.b16 %v370
    %v837 = vunpack.c.l.b16 %v371
    %v838 = vunpack.c.h.b16 %v371
    %v839 = vunpack.c.l.b16 %v372
    %v840 = vunpack.c.h.b16 %v372
    %v841 = vunpack.c.l.b16 %v373
    %v842 = vunpack.c.h.b16 %v373
    %v843 = vunpack.c.l.b16 %v374
    %v844 = vunpack.c.h.b16 %v374
    %v845 = vunpack.c.l.b16 %v375
    %v846 = vunpack.c.h.b16 %v375
    %v847 = vunpack.c.l.b16 %v376
    %v848 = vunpack.c.h.b16 %v376
    %v849 = vunpack.c.l.b16 %v377
    %v850 = vunpack.c.h.b16 %v377
    %v851 = vunpack.c.l.b16 %v378
    %v852 = vunpack.c.h.b16 %v378
    %v853 = vunpack.c.l.b16 %v379
    %v854 = vunpack.c.h.b16 %v379
    %v855 = vunpack.c.l.b16 %v380
    %v856 = vunpack.c.h.b16 %v380
    %v857 = vunpack.c.l.b16 %v381
    %v858 = vunpack.c.h.b16 %v381
    %v859 = vunpack.c.l.b16 %v382
    %v860 = vunpack.c.h.b16 %v382
    %v861 = vunpack.c.l.b16 %v383
    %v862 = vunpack.c.h.b16 %v383
    %v863 = vunpack.c.l.b16 %v384
    %v864 = vunpack.c.h.b16 %v384
    %v865 = vunpack.c.l.b16 %v385
    %v866 = vunpack.c.h.b16 %v385
    %v867 = vunpack.c.l.b16 %v386
    %v868 = vunpack.c.h.b16 %v386
    %v869 = vunpack.c.l.b16 %v387
    %v870 = vunpack.c.h.b16 %v387
    %v871 = vunpack.c.l.b16 %v388
    %v872 = vunpack.c.h.b16 %v388
    %v873 = vunpack.c.l.b16 %v389
    %v874 = vunpack.c.h.b16 %v389
    %v875 = vunpack.c.l.b16 %v390
    %v876 = vunpack.c.h.b16 %v390
    %v877 = vunpack.c.l.b16 %v391
    %v878 = vunpack.c.h.b16 %v391
    %v879 = vunpack.c.l.b16 %v392
    %v880 = vunpack.c.h.b16 %v392
    %v881 = vunpack.c.l.b16 %v393
    %v882 = vunpack.c.h.b16 %v393
    %v883 = vunpack.c.l.b16 %v394
    %v884 = vunpack.c.h.b16 %v394
    %v885 = vunpack.c.l.b16 %v395
    %v886 = vunpack.c.h.b16 %v395
    %v887 = vunpack.c.l.b16 %v396
    %v888 = vunpack.c.h.b16 %v396
    %v889 = vunpack.c.l.b16 %v397
    %v890 = vunpack.c.h.b16 %v397
    %v891 = vunpack.c.l.b16 %v398
    %v892 = vunpack.c.h.b16 %v398
    %v893 = vunpack.c.l.b16 %v399
    %v894 = vunpack.c.h.b16 %v399
    %v895 = vunpack.c.l.b16 %v400
    %v896 = vunpack.c.h.b16 %v400
    %v897 = vunpack.c.l.b16 %v401
    %v898 = vunpack.c.h.b16 %v401
    %v899 = vunpack.c.l.b16 %v402
    %v900 = vunpack.c.h.b16 %v402
    %v901 = vunpack.c.l.b16 %v403
    %v902 = vunpack.c.h.b16 %v403
    %v903 = vunpack.c.l.b16 %v404
    %v904 = vunpack.c.h.b16 %v404
    %v905 = vunpack.c.l.b16 %v405
    %v906 = vunpack.c.h.b16 %v405
    %v907 = vunpack.c.l.b16 %v406
    %v908 = vunpack.c.h.b16 %v406
    %v909 = vunpack.c.l.b16 %v407
    %v910 = vunpack.c.h.b16 %v407
    %v911 = vunpack.c.l.b16 %v408
    %v912 = vunpack.c.h.b16 %v408
    %v913 = vunpack.c.l.b16 %v409
    %v914 = vunpack.c.h.b16 %v409
    %v915 = vunpack.c.l.b16 %v410
    %v916 = vunpack.c.h.b16 %v410
    %v917 = vunpack.c.l.b16 %v411
    %v918 = vunpack.c.h.b16 %v411
    %v919 = vunpack.c.l.b16 %v412
    %v920 = vunpack.c.h.b16 %v412
    %v921 = vunpack.c.l.b16 %v413
    %v922 = vunpack.c.h.b16 %v413
    %v923 = vunpack.c.l.b16 %v414
    %v924 = vunpack.c.h.b16 %v414
    %v925 = vunpack.c.l.b16 %v415
    %v926 = vunpack.c.h.b16 %v415
    %v927 = vunpack.c.l.b16 %v416
    %v928 = vunpack.c.h.b16 %v416
    %v929 = vunpack.c.l.b16 %v417
    %v930 = vunpack.c.h.b16 %v417
    %v931 = vunpack.c.l.b16 %v418
    %v932 = vunpack.c.h.b16 %v418
    %v933 = vunpack.c.l.b16 %v419
    %v934 = vunpack.c.h.b16 %v419
    %v935 = vunpack.c.l.b16 %v420
    %v936 = vunpack.c.h.b16 %v420
    %v937 = vunpack.c.l.b16 %v421
    %v938 = vunpack.c.h.b16 %v421
    %v939 = vunpack.c.l.b16 %v422
    %v940 = vunpack.c.h.b16 %v422
    %v941 = vunpack.c.l.b16 %v423
    %v942 = vunpack.c.h.b16 %v423
    %v943 = vunpack.c.l.b16 %v424
    %v944 = vunpack.c.h.b16 %v424
    %v945 = vunpack.c.l.b16 %v425
    %v946 = vunpack.c.h.b16 %v425
    %v947 = vunpack.c.l.b16 %v426
    %v948 = vunpack.c.h.b16 %v426
    %v949 = vunpack.c.l.b16 %v427
    %v950 = vunpack.c.h.b16 %v427
    %v951 = vunpack.c.l.b16 %v428
    %v952 = vunpack.c.h.b16 %v428
    %v953 = vunpack.c.l.b16 %v429
    %v954 = vunpack.c.h.b16 %v429
    %v955 = vunpack.c.l.b16 %v430
    %v956 = vunpack.c.h.b16 %v430
    %v957 = vunpack.c.l.b16 %v431
    %v958 = vunpack.c.h.b16 %v431
    %v959 = vunpack.c.l.b16 %v432
    %v960 = vunpack.c.h.b16 %v432
    %v961 = vunpack.c.l.b16 %v433
    %v962 = vunpack.c.h.b16 %v433
    %v963 = vunpack.c.l.b16 %v434
    %v964 = vunpack.c.h.b16 %v434
    %v965 = vunpack.c.l.b16 %v435
    %v966 = vunpack.c.h.b16 %v435
    %v967 = vunpack.c.l.b16 %v436
    %v968 = vunpack.c.h.b16 %v436
    %v969 = vunpack.c.l.b16 %v437
    %v970 = vunpack.c.h.b16 %v437
    %v971 = vunpack.c.l.b16 %v438
    %v972 = vunpack.c.h.b16 %v438
    %v973 = vunpack.c.l.b16 %v439
    %v974 = vunpack.c.h.b16 %v439
    %v975 = vunpack.c.l.b16 %v440
    %v976 = vunpack.c.h.b16 %v440
    %v977 = vunpack.c.l.b16 %v441
    %v978 = vunpack.c.h.b16 %v441
    %v979 = vunpack.c.l.b16 %v442
    %v980 = vunpack.c.h.b16 %v442
    %v981 = vunpack.c.l.b16 %v443
    %v982 = vunpack.c.h.b16 %v443
    %v983 = vunpack.c.l.b16 %v444
    %v984 = vunpack.c.h.b16 %v444
    %v985 = vunpack.c.l.b16 %v445
    %v986 = vunpack.c.h.b16 %v445
    %v987 = vunpack.c.l.b16 %v446
    %v988 = vunpack.c.h.b16 %v446
    %v989 = vunpack.c.l.b16 %v447
    %v990 = vunpack.c.h.b16 %v447
    %v991 = vunpack.c.l.b16 %v448
    %v992 = vunpack.c.h.b16 %v448
    %v993 = vunpack.c.l.b16 %v449
    %v994 = vunpack.c.h.b16 %v449
    %v995 = vunpack.c.l.b16 %v450
    %v996 = vunpack.c.h.b16 %v450
    %v997 = vunpack.c.l.b16 %v451
    %v998 = vunpack.c.h.b16 %v451
    %v999 = vunpack.c.l.b16 %v452
    %v1000 = vunpack.c.h.b16 %v452
    %v1001 = vunpack.c.l.b16 %v453
    %v1002 = vunpack.c.h.b16 %v453
    %v1003 = vunpack.c.l.b16 %v454
    %v1004 = vunpack.c.h.b16 %v454
    %v1005 = vunpack.c.l.b16 %v455
    %v1006 = vunpack.c.h.b16 %v455
    %v1007 = vunpack.c.l.b16 %v456
    %v1008 = vunpack.c.h.b16 %v456
    %v1009 = vunpack.c.l.b16 %v457
    %v1010 = vunpack.c.h.b16 %v457
    %v1011 = vunpack.c.l.b16 %v458
    %v1012 = vunpack.c.h.b16 %v458
    %v1013 = vunpack.c.l.b16 %v459
    %v1014 = vunpack.c.h.b16 %v459
    %v1015 = vunpack.c.l.b16 %v460
    %v1016 = vunpack.c.h.b16 %v460
    %v1017 = vunpack.c.l.b16 %v461
    %v1018 = vunpack.c.h.b16 %v461
    %v1019 = vunpack.c.l.b16 %v462
    %v1020 = vunpack.c.h.b16 %v462
    %v1021 = vunpack.c.l.b16 %v463
    %v1022 = vunpack.c.h.b16 %v463
    %v1023 = vunpack.c.l.b16 %v464
    %v1024 = vunpack.c.h.b16 %v464
    %v1025 = vunpack.c.l.b16 %v465
    %v1026 = vunpack.c.h.b16 %v465
    %v1027 = vunpack.c.l.b16 %v466
    %v1028 = vunpack.c.h.b16 %v466
    %v1029 = vunpack.c.l.b16 %v467
    %v1030 = vunpack.c.h.b16 %v467
    %v1031 = vunpack.c.l.b16 %v468
    %v1032 = vunpack.c.h.b16 %v468
    %v1033 = vunpack.c.l.b16 %v469
    %v1034 = vunpack.c.h.b16 %v469
    %v1035 = vunpack.c.l.b16 %v470
    %v1036 = vunpack.c.h.b16 %v470
    %v1037 = vunpack.c.l.b16 %v471
    %v1038 = vunpack.c.h.b16 %v471
    %v1039 = vunpack.c.l.b16 %v472
    %v1040 = vunpack.c.h.b16 %v472
    %v1041 = vunpack.c.l.b16 %v473
    %v1042 = vunpack.c.h.b16 %v473
    %v1043 = vunpack.c.l.b16 %v474
    %v1044 = vunpack.c.h.b16 %v474
    %v1045 = vunpack.c.l.b16 %v475
    %v1046 = vunpack.c.h.b16 %v475
    %v1047 = vunpack.c.l.b16 %v476
    %v1048 = vunpack.c.h.b16 %v476
    %v1049 = vunpack.c.l.b16 %v477
    %v1050 = vunpack.c.h.b16 %v477
    %v1051 = vunpack.c.l.b16 %v478
    %v1052 = vunpack.c.h.b16 %v478
    %v1053 = vunpack.c.l.b16 %v479
    %v1054 = vunpack.c.h.b16 %v479
    %v1055 = vunpack.c.l.b16 %v480
    %v1056 = vunpack.c.h.b16 %v480
    %v1057 = vunpack.c.l.b16 %v481
    %v1058 = vunpack.c.h.b16 %v481
    %v1059 = vunpack.c.l.b16 %v482
    %v1060 = vunpack.c.h.b16 %v482
    %v1061 = vunpack.c.l.b16 %v483
    %v1062 = vunpack.c.h.b16 %v483
    %v1063 = vunpack.c.l.b16 %v484
    %v1064 = vunpack.c.h.b16 %v484
    %v1065 = vunpack.c.l.b16 %v485
    %v1066 = vunpack.c.h.b16 %v485
    %v1067 = vunpack.c.l.b16 %v486
    %v1068 = vunpack.c.h.b16 %v486
    %v1069 = vunpack.c.l.b16 %v487
    %v1070 = vunpack.c.h.b16 %v487
    %v1071 = vunpack.c.l.b16 %v488
    %v1072 = vunpack.c.h.b16 %v488
    %v1073 = vunpack.c.l.b16 %v489
    %v1074 = vunpack.c.h.b16 %v489
    %v1075 = vunpack.c.l.b16 %v490
    %v1076 = vunpack.c.h.b16 %v490
    %v1077 = vunpack.c.l.b16 %v491
    %v1078 = vunpack.c.h.b16 %v491
    %v1079 = vunpack.c.l.b16 %v492
    %v1080 = vunpack.c.h.b16 %v492
    %v1081 = vunpack.c.l.b16 %v493
    %v1082 = vunpack.c.h.b16 %v493
    %v1083 = vunpack.c.l.b16 %v494
    %v1084 = vunpack.c.h.b16 %v494
    %v1085 = vunpack.c.l.b16 %v495
    %v1086 = vunpack.c.h.b16 %v495
    %v1087 = vunpack.c.l.b16 %v496
    %v1088 = vunpack.c.h.b16 %v496
    %v1089 = vunpack.c.l.b16 %v497
    %v1090 = vunpack.c.h.b16 %v497
    %v1091 = vunpack.c.l.b16 %v498
    %v1092 = vunpack.c.h.b16 %v498
    %v1093 = vunpack.c.l.b16 %v499
    %v1094 = vunpack.c.h.b16 %v499
    %v1095 = vunpack.c.l.b16 %v500
    %v1096 = vunpack.c.h.b16 %v500
    %v1097 = vunpack.c.l.b16 %v501
    %v1098 = vunpack.c.h.b16 %v501
    %v1099 = vunpack.c.l.b16 %v502
    %v1100 = vunpack.c.h.b16 %v502
    %v1101 = vpack.c.b16 %v721, %v717
    %v1102 = vpack.c.b16 %v722, %v718
    %v1103 = vpack.c.b16 %v723, %v719
    %v1104 = vpack.c.b16 %v724, %v720
    %v1105 = vpack.c.b16 %v729, %v725
    %v1106 = vpack.c.b16 %v730, %v726
    %v1107 = vpack.c.b16 %v731, %v727
    %v1108 = vpack.c.b16 %v732, %v728
    %v1109 = vpack.c.b16 %v737, %v733
    %v1110 = vpack.c.b16 %v738, %v734
    %v1111 = vpack.c.b16 %v739, %v735
    %v1112 = vpack.c.b16 %v740, %v736
    %v1113 = vpack.c.b16 %v745, %v741
    %v1114 = vpack.c.b16 %v746, %v742
    %v1115 = vpack.c.b16 %v747, %v743
    %v1116 = vpack.c.b16 %v748, %v744
    %v1117 = vpack.c.b16 %v753, %v749
    %v1118 = vpack.c.b16 %v754, %v750
    %v1119 = vpack.c.b16 %v755, %v751
    %v1120 = vpack.c.b16 %v756, %v752
    %v1121 = vpack.c.b16 %v761, %v757
    %v1122 = vpack.c.b16 %v762, %v758
    %v1123 = vpack.c.b16 %v763, %v759
    %v1124 = vpack.c.b16 %v764, %v760
    %v1125 = vpack.c.b16 %v769, %v765
    %v1126 = vpack.c.b16 %v770, %v766
    %v1127 = vpack.c.b16 %v771, %v767
    %v1128 = vpack.c.b16 %v772, %v768
    %v1129 = vpack.c.b16 %v777, %v773
    %v1130 = vpack.c.b16 %v778, %v774
    %v1131 = vpack.c.b16 %v779, %v775
    %v1132 = vpack.c.b16 %v780, %v776
    %v1133 = vpack.c.b16 %v785, %v781
    %v1134 = vpack.c.b16 %v786, %v782
    %v1135 = vpack.c.b16 %v787, %v783
    %v1136 = vpack.c.b16 %v788, %v784
    %v1137 = vpack.c.b16 %v793, %v789
    %v1138 = vpack.c.b16 %v794, %v790
    %v1139 = vpack.c.b16 %v795, %v791
    %v1140 = vpack.c.b16 %v796, %v792
    %v1141 = vpack.c.b16 %v801, %v797
    %v1142 = vpack.c.b16 %v802, %v798
    %v1143 = vpack.c.b16 %v803, %v799
    %v1144 = vpack.c.b16 %v804, %v800
    %v1145 = vpack.c.b16 %v809, %v805
    %v1146 = vpack.c.b16 %v810, %v806
    %v1147 = vpack.c.b16 %v811, %v807
    %v1148 = vpack.c.b16 %v812, %v808
    %v1149 = vpack.c.b16 %v817, %v813
    %v1150 = vpack.c.b16 %v818, %v814
    %v1151 = vpack.c.b16 %v819, %v815
    %v1152 = vpack.c.b16 %v820, %v816
    %v1153 = vpack.c.b16 %v825, %v821
    %v1154 = vpack.c.b16 %v826, %v822
    %v1155 = vpack.c.b16 %v827, %v823
    %v1156 = vpack.c.b16 %v828, %v824
    %v1157 = vpack.c.b16 %v833, %v829
    %v1158 = vpack.c.b16 %v834, %v830
    %v1159 = vpack.c.b16 %v835, %v831
    %v1160 = vpack.c.b16 %v836, %v832
    %v1161 = vpack.c.b16 %v841, %v837
    %v1162 = vpack.c.b16 %v842, %v838
    %v1163 = vpack.c.b16 %v843, %v839
    %v1164 = vpack.c.b16 %v844, %v840
    %v1165 = vpack.c.b16 %v849, %v845
    %v1166 = vpack.c.b16 %v850, %v846
    %v1167 = vpack.c.b16 %v851, %v847
    %v1168 = vpack.c.b16 %v852, %v848
    %v1169 = vpack.c.b16 %v857, %v853
    %v1170 = vpack.c.b16 %v858, %v854
    %v1171 = vpack.c.b16 %v859, %v855
    %v1172 = vpack.c.b16 %v860, %v856
    %v1173 = vpack.c.b16 %v865, %v861
    %v1174 = vpack.c.b16 %v866, %v862
    %v1175 = vpack.c.b16 %v867, %v863
    %v1176 = vpack.c.b16 %v868, %v864
    %v1177 = vpack.c.b16 %v873, %v869
    %v1178 = vpack.c.b16 %v874, %v870
    %v1179 = vpack.c.b16 %v875, %v871
    %v1180 = vpack.c.b16 %v876, %v872
    %v1181 = vpack.c.b16 %v881, %v877
    %v1182 = vpack.c.b16 %v882, %v878
    %v1183 = vpack.c.b16 %v883, %v879
    %v1184 = vpack.c.b16 %v884, %v880
    %v1185 = vpack.c.b16 %v889, %v885
    %v1186 = vpack.c.b16 %v890, %v886
    %v1187 = vpack.c.b16 %v891, %v887
    %v1188 = vpack.c.b16 %v892, %v888
    %v1189 = vpack.c.b16 %v897, %v893
    %v1190 = vpack.c.b16 %v898, %v894
    %v1191 = vpack.c.b16 %v899, %v895
    %v1192 = vpack.c.b16 %v900, %v896
    %v1193 = vpack.c.b16 %v905, %v901
    %v1194 = vpack.c.b16 %v906, %v902
    %v1195 = vpack.c.b16 %v907, %v903
    %v1196 = vpack.c.b16 %v908, %v904
    %v1197 = vpack.c.b16 %v913, %v909
    %v1198 = vpack.c.b16 %v914, %v910
    %v1199 = vpack.c.b16 %v915, %v911
    %v1200 = vpack.c.b16 %v916, %v912
    %v1201 = vpack.c.b16 %v921, %v917
    %v1202 = vpack.c.b16 %v922, %v918
    %v1203 = vpack.c.b16 %v923, %v919
    %v1204 = vpack.c.b16 %v924, %v920
    %v1205 = vpack.c.b16 %v929, %v925
    %v1206 = vpack.c.b16 %v930, %v926
    %v1207 = vpack.c.b16 %v931, %v927
    %v1208 = vpack.c.b16 %v932, %v928
    %v1209 = vpack.c.b16 %v937, %v933
    %v1210 = vpack.c.b16 %v938, %v934
    %v1211 = vpack.c.b16 %v939, %v935
    %v1212 = vpack.c.b16 %v940, %v936
    %v1213 = vpack.c.b16 %v945, %v941
    %v1214 = vpack.c.b16 %v946, %v942
    %v1215 = vpack.c.b16 %v947, %v943
    %v1216 = vpack.c.b16 %v948, %v944
    %v1217 = vpack.c.b16 %v953, %v949
    %v1218 = vpack.c.b16 %v954, %v950
    %v1219 = vpack.c.b16 %v955, %v951
    %v1220 = vpack.c.b16 %v956, %v952
    %v1221 = vpack.c.b16 %v961, %v957
    %v1222 = vpack.c.b16 %v962, %v958
    %v1223 = vpack.c.b16 %v963, %v959
    %v1224 = vpack.c.b16 %v964, %v960
    %v1225 = vpack.c.b16 %v969, %v965
    %v1226 = vpack.c.b16 %v970, %v966
    %v1227 = vpack.c.b16 %v971, %v967
    %v1228 = vpack.c.b16 %v972, %v968
    %v1229 = vpack.c.b16 %v977, %v973
    %v1230 = vpack.c.b16 %v978, %v974
    %v1231 = vpack.c.b16 %v979, %v975
    %v1232 = vpack.c.b16 %v980, %v976
    %v1233 = vpack.c.b16 %v985, %v981
    %v1234 = vpack.c.b16 %v986, %v982
    %v1235 = vpack.c.b16 %v987, %v983
    %v1236 = vpack.c.b16 %v988, %v984
    %v1237 = vpack.c.b16 %v993, %v989
    %v1238 = vpack.c.b16 %v994, %v990
    %v1239 = vpack.c.b16 %v995, %v991
    %v1240 = vpack.c.b16 %v996, %v992
    %v1241 = vpack.c.b16 %v1001, %v997
    %v1242 = vpack.c.b16 %v1002, %v998
    %v1243 = vpack.c.b16 %v1003, %v999
    %v1244 = vpack.c.b16 %v1004, %v1000
    %v1245 = vpack.c.b16 %v1009, %v1005
    %v1246 = vpack.c.b16 %v1010, %v1006
    %v1247 = vpack.c.b16 %v1011, %v1007
    %v1248 = vpack.c.b16 %v1012, %v1008
    %v1249 = vpack.c.b16 %v1017, %v1013
    %v1250 = vpack.c.b16 %v1018, %v1014
    %v1251 = vpack.c.b16 %v1019, %v1015
    %v1252 = vpack.c.b16 %v1020, %v1016
    %v1253 = vpack.c.b16 %v1025, %v1021
    %v1254 = vpack.c.b16 %v1026, %v1022
    %v1255 = vpack.c.b16 %v1027, %v1023
    %v1256 = vpack.c.b16 %v1028, %v1024
    %v1257 = vpack.c.b16 %v1033, %v1029
    %v1258 = vpack.c.b16 %v1034, %v1030
    %v1259 = vpack.c.b16 %v1035, %v1031
    %v1260 = vpack.c.b16 %v1036, %v1032
    %v1261 = vpack.c.b16 %v1041, %v1037
    %v1262 = vpack.c.b16 %v1042, %v1038
    %v1263 = vpack.c.b16 %v1043, %v1039
    %v1264 = vpack.c.b16 %v1044, %v1040
    %v1265 = vpack.c.b16 %v1049, %v1045
    %v1266 = vpack.c.b16 %v1050, %v1046
    %v1267 = vpack.c.b16 %v1051, %v1047
    %v1268 = vpack.c.b16 %v1052, %v1048
    %v1269 = vpack.c.b16 %v1057, %v1053
    %v1270 = vpack.c.b16 %v1058, %v1054
    %v1271 = vpack.c.b16 %v1059, %v1055
    %v1272 = vpack.c.b16 %v1060, %v1056
    %v1273 = vpack.c.b16 %v1065, %v1061
    %v1274 = vpack.c.b16 %v1066, %v1062
    %v1275 = vpack.c.b16 %v1067, %v1063
    %v1276 = vpack.c.b16 %v1068, %v1064
    %v1277 = vpack.c.b16 %v1073, %v1069
    %v1278 = vpack.c.b16 %v1074, %v1070
    %v1279 = vpack.c.b16 %v1075, %v1071
    %v1280 = vpack.c.b16 %v1076, %v1072
    %v1281 = vpack.c.b16 %v1081, %v1077
    %v1282 = vpack.c.b16 %v1082, %v1078
    %v1283 = vpack.c.b16 %v1083, %v1079
    %v1284 = vpack.c.b16 %v1084, %v1080
    %v1285 = vpack.c.b16 %v1089, %v1085
    %v1286 = vpack.c.b16 %v1090, %v1086
    %v1287 = vpack.c.b16 %v1091, %v1087
    %v1288 = vpack.c.b16 %v1092, %v1088
    %v1289 = vpack.c.b16 %v1097, %v1093
    %v1290 = vpack.c.b16 %v1098, %v1094
    %v1291 = vpack.c.b16 %v1099, %v1095
    %v1292 = vpack.c.b16 %v1100, %v1096
    %1485 = vmatprep.subr.bf16.mxu0 %v1102
    %1486 = vmatpush1.bf16.msra.mxu0 %v1101
    %1487 = vmatprep.subr.bf16.mxu0 %v1106
    %1488 = vmatpush1.bf16.msra.mxu0 %v1105
    %1489 = vmatprep.subr.bf16.mxu0 %v1110
    %1490 = vmatpush1.bf16.msra.mxu0 %v1109
    %1491 = vmatprep.subr.bf16.mxu0 %v1114
    %1492 = vmatpush1.bf16.msra.mxu0 %v1113
    %1493 = vmatprep.subr.bf16.mxu0 %v1118
    %1494 = vmatpush1.bf16.msra.mxu0 %v1117
    %1495 = vmatprep.subr.bf16.mxu0 %v1122
    %1496 = vmatpush1.bf16.msra.mxu0 %v1121
    %1497 = vmatprep.subr.bf16.mxu0 %v1126
    %1498 = vmatpush1.bf16.msra.mxu0 %v1125
    %1499 = vmatprep.subr.bf16.mxu0 %v1130
    %1500 = vmatpush1.bf16.msra.mxu0 %v1129
    %1501 = vmatprep.subr.bf16.mxu0 %v1134
    %1502 = vmatpush1.bf16.msra.mxu0 %v1133
    %1503 = vmatprep.subr.bf16.mxu0 %v1138
    %1504 = vmatpush1.bf16.msra.mxu0 %v1137
    %1505 = vmatprep.subr.bf16.mxu0 %v1142
    %1506 = vmatpush1.bf16.msra.mxu0 %v1141
    %1507 = vmatprep.subr.bf16.mxu0 %v1146
    %1508 = vmatpush1.bf16.msra.mxu0 %v1145
    %1509 = vmatprep.subr.bf16.mxu0 %v1150
    %1510 = vmatpush1.bf16.msra.mxu0 %v1149
    %1511 = vmatprep.subr.bf16.mxu0 %v1154
    %1512 = vmatpush1.bf16.msra.mxu0 %v1153
    %1513 = vmatprep.subr.bf16.mxu0 %v1158
    %1514 = vmatpush1.bf16.msra.mxu0 %v1157
    %1515 = vmatprep.subr.bf16.mxu0 %v1162
    %1516 = vmatpush1.bf16.msra.mxu0 %v1161
    %1517 = vmatprep.mubr.bf16.mxu0 %v234
    %1518 = vmatmul.mubr.bf16.gmra.mrb[0].mxu0 %v233
    %v1519 = vpop.f32.mrb[0].mxu0
    %v1520 = vadd.f32 %v508, %v1519
    %v1521 = vpop.f32.mrb[0].mxu0
    %v1522 = vadd.f32 %v512, %v1521
    %v1523 = vpop.f32.mrb[0].mxu0
    %v1524 = vadd.f32 %v508, %v1523
    %v1525 = vpop.f32.mrb[0].mxu0
    %v1526 = vadd.f32 %v512, %v1525
    %1527 = vmatprep.mubr.bf16.mxu0 %v240
    %1528 = vmatmul.mubr.bf16.gmra.mrb[0].mxu0 %v239
    %v1529 = vpop.f32.mrb[0].mxu0
    %v1530 = vadd.f32 %v508, %v1529
    %v1531 = vpop.f32.mrb[0].mxu0
    %v1532 = vadd.f32 %v512, %v1531
    %v1533 = vpop.f32.mrb[0].mxu0
    %v1534 = vadd.f32 %v508, %v1533
    %v1535 = vpop.f32.mrb[0].mxu0
    %v1536 = vadd.f32 %v512, %v1535
    %1537 = vmatprep.mubr.bf16.mxu0 %v246
    %1538 = vmatmul.mubr.bf16.gmra.mrb[0].mxu0 %v245
    %v1539 = vpop.f32.mrb[0].mxu0
    %v1540 = vadd.f32 %v508, %v1539
    %v1541 = vpop.f32.mrb[0].mxu0
    %v1542 = vadd.f32 %v512, %v1541
    %v1543 = vpop.f32.mrb[0].mxu0
    %v1544 = vadd.f32 %v508, %v1543
    %v1545 = vpop.f32.mrb[0].mxu0
    %v1546 = vadd.f32 %v512, %v1545
    %1547 = vmatprep.mubr.bf16.mxu0 %v252
    %1548 = vmatmul.mubr.bf16.gmra.mrb[0].mxu0 %v251
    %v1549 = vpop.f32.mrb[0].mxu0
    %v1550 = vadd.f32 %v508, %v1549
    %v1551 = vpop.f32.mrb[0].mxu0
    %v1552 = vadd.f32 %v512, %v1551
    %v1553 = vpop.f32.mrb[0].mxu0
    %v1554 = vadd.f32 %v508, %v1553
    %v1555 = vpop.f32.mrb[0].mxu0
    %v1556 = vadd.f32 %v512, %v1555
    %1557 = vmatprep.mubr.bf16.mxu0 %v258
    %1558 = vmatmul.mubr.bf16.gmra.mrb[0].mxu0 %v257
    %v1559 = vpop.f32.mrb[0].mxu0
    %v1560 = vadd.f32 %v508, %v1559
    %v1561 = vpop.f32.mrb[0].mxu0
    %v1562 = vadd.f32 %v512, %v1561
    %v1563 = vpop.f32.mrb[0].mxu0
    %v1564 = vadd.f32 %v508, %v1563
    %v1565 = vpop.f32.mrb[0].mxu0
    %v1566 = vadd.f32 %v512, %v1565
    %1567 = vmatprep.mubr.bf16.mxu0 %v264
    %1568 = vmatmul.mubr.bf16.gmra.mrb[0].mxu0 %v263
    %v1569 = vpop.f32.mrb[0].mxu0
    %v1570 = vadd.f32 %v508, %v1569
    %v1571 = vpop.f32.mrb[0].mxu0
    %v1572 = vadd.f32 %v512, %v1571
    %v1573 = vpop.f32.mrb[0].mxu0
    %v1574 = vadd.f32 %v508, %v1573
    %v1575 = vpop.f32.mrb[0].mxu0
    %v1576 = vadd.f32 %v512, %v1575
    %1577 = vmatprep.mubr.bf16.mxu0 %v270
    %1578 = vmatmul.mubr.bf16.gmra.mrb[0].mxu0 %v269
    %v1579 = vpop.f32.mrb[0].mxu0
    %v1580 = vadd.f32 %v508, %v1579
    %v1581 = vpop.f32.mrb[0].mxu0
    %v1582 = vadd.f32 %v512, %v1581
    %v1583 = vpop.f32.mrb[0].mxu0
    %v1584 = vadd.f32 %v508, %v1583
    %v1585 = vpop.f32.mrb[0].mxu0
    %v1586 = vadd.f32 %v512, %v1585
    %1587 = vmatprep.mubr.bf16.mxu0 %v276
    %1588 = vmatmul.mubr.bf16.gmra.mrb[0].mxu0 %v275
    %v1589 = vpop.f32.mrb[0].mxu0
    %v1590 = vadd.f32 %v508, %v1589
    %v1591 = vpop.f32.mrb[0].mxu0
    %v1592 = vadd.f32 %v512, %v1591
    %v1593 = vpop.f32.mrb[0].mxu0
    %v1594 = vadd.f32 %v508, %v1593
    %v1595 = vpop.f32.mrb[0].mxu0
    %v1596 = vadd.f32 %v512, %v1595
    %1597 = vmatprep.mubr.bf16.mxu0 %v282
    %1598 = vmatmul.mubr.bf16.gmra.mrb[0].mxu0 %v281
    %v1599 = vpop.f32.mrb[0].mxu0
    %v1600 = vadd.f32 %v508, %v1599
    %v1601 = vpop.f32.mrb[0].mxu0
    %v1602 = vadd.f32 %v512, %v1601
    %v1603 = vpop.f32.mrb[0].mxu0
    %v1604 = vadd.f32 %v508, %v1603
    %v1605 = vpop.f32.mrb[0].mxu0
    %v1606 = vadd.f32 %v512, %v1605
    %1607 = vmatprep.mubr.bf16.mxu0 %v288
    %1608 = vmatmul.mubr.bf16.gmra.mrb[0].mxu0 %v287
    %v1609 = vpop.f32.mrb[0].mxu0
    %v1610 = vadd.f32 %v508, %v1609
    %v1611 = vpop.f32.mrb[0].mxu0
    %v1612 = vadd.f32 %v512, %v1611
    %v1613 = vpop.f32.mrb[0].mxu0
    %v1614 = vadd.f32 %v508, %v1613
    %v1615 = vpop.f32.mrb[0].mxu0
    %v1616 = vadd.f32 %v512, %v1615
    %1617 = vmatprep.mubr.bf16.mxu0 %v294
    %1618 = vmatmul.mubr.bf16.gmra.mrb[0].mxu0 %v293
    %v1619 = vpop.f32.mrb[0].mxu0
    %v1620 = vadd.f32 %v508, %v1619
    %v1621 = vpop.f32.mrb[0].mxu0
    %v1622 = vadd.f32 %v512, %v1621
    %v1623 = vpop.f32.mrb[0].mxu0
    %v1624 = vadd.f32 %v508, %v1623
    %v1625 = vpop.f32.mrb[0].mxu0
    %v1626 = vadd.f32 %v512, %v1625
    %1627 = vmatprep.mubr.bf16.mxu0 %v300
    %1628 = vmatmul.mubr.bf16.gmra.mrb[0].mxu0 %v299
    %v1629 = vpop.f32.mrb[0].mxu0
    %v1630 = vadd.f32 %v508, %v1629
    %v1631 = vpop.f32.mrb[0].mxu0
    %v1632 = vadd.f32 %v512, %v1631
    %v1633 = vpop.f32.mrb[0].mxu0
    %v1634 = vadd.f32 %v508, %v1633
    %v1635 = vpop.f32.mrb[0].mxu0
    %v1636 = vadd.f32 %v512, %v1635
    %1637 = vmatprep.mubr.bf16.mxu0 %v306
    %1638 = vmatmul.mubr.bf16.gmra.mrb[0].mxu0 %v305
    %v1639 = vpop.f32.mrb[0].mxu0
    %v1640 = vadd.f32 %v508, %v1639
    %v1641 = vpop.f32.mrb[0].mxu0
    %v1642 = vadd.f32 %v512, %v1641
    %v1643 = vpop.f32.mrb[0].mxu0
    %v1644 = vpop.f32.mrb[0].mxu0
    %1645 = vdwg.mxu0
    %1646 = vmatprep.subr.bf16.mxu0 %v1166
    %1647 = vmatpush1.bf16.msra.mxu0 %v1165
    %1648 = vmatprep.subr.bf16.mxu0 %v1170
    %1649 = vmatpush1.bf16.msra.mxu0 %v1169
    %1650 = vmatprep.subr.bf16.mxu0 %v1174
    %1651 = vmatpush1.bf16.msra.mxu0 %v1173
    %1652 = vmatprep.subr.bf16.mxu0 %v1178
    %1653 = vmatpush1.bf16.msra.mxu0 %v1177
    %1654 = vmatprep.subr.bf16.mxu0 %v1182
    %1655 = vmatpush1.bf16.msra.mxu0 %v1181
    %1656 = vmatprep.subr.bf16.mxu0 %v1186
    %1657 = vmatpush1.bf16.msra.mxu0 %v1185
    %1658 = vmatprep.subr.bf16.mxu0 %v1190
    %1659 = vmatpush1.bf16.msra.mxu0 %v1189
    %1660 = vmatprep.subr.bf16.mxu0 %v1194
    %1661 = vmatpush1.bf16.msra.mxu0 %v1193
    %1662 = vmatprep.subr.bf16.mxu0 %v1198
    %1663 = vmatpush1.bf16.msra.mxu0 %v1197
    %1664 = vmatprep.subr.bf16.mxu0 %v1202
    %1665 = vmatpush1.bf16.msra.mxu0 %v1201
    %1666 = vmatprep.subr.bf16.mxu0 %v1206
    %1667 = vmatpush1.bf16.msra.mxu0 %v1205
    %1668 = vmatprep.subr.bf16.mxu0 %v1210
    %1669 = vmatpush1.bf16.msra.mxu0 %v1209
    %1670 = vmatprep.subr.bf16.mxu0 %v1214
    %1671 = vmatpush1.bf16.msra.mxu0 %v1213
    %1672 = vmatprep.subr.bf16.mxu0 %v1218
    %1673 = vmatpush1.bf16.msra.mxu0 %v1217
    %1674 = vmatprep.subr.bf16.mxu0 %v1222
    %1675 = vmatpush1.bf16.msra.mxu0 %v1221
    %1676 = vmatprep.subr.bf16.mxu0 %v1226
    %1677 = vmatpush1.bf16.msra.mxu0 %v1225
    %1678 = vmatprep.mubr.bf16.mxu0 %v236
    %1679 = vmatmul.mubr.bf16.gmra.mrb[0].mxu0 %v235
    %v1680 = vpop.f32.mrb[0].mxu0
    %v1681 = vadd.f32 %v1520, %v1680
    %v1682 = vpop.f32.mrb[0].mxu0
    %v1683 = vadd.f32 %v1522, %v1682
    %v1684 = vpop.f32.mrb[0].mxu0
    %v1685 = vadd.f32 %v1524, %v1684
    %v1686 = vpop.f32.mrb[0].mxu0
    %v1687 = vadd.f32 %v1526, %v1686
    %1688 = vmatprep.mubr.bf16.mxu0 %v242
    %1689 = vmatmul.mubr.bf16.gmra.mrb[0].mxu0 %v241
    %v1690 = vpop.f32.mrb[0].mxu0
    %v1691 = vadd.f32 %v1530, %v1690
    %v1692 = vpop.f32.mrb[0].mxu0
    %v1693 = vadd.f32 %v1532, %v1692
    %v1694 = vpop.f32.mrb[0].mxu0
    %v1695 = vadd.f32 %v1534, %v1694
    %v1696 = vpop.f32.mrb[0].mxu0
    %v1697 = vadd.f32 %v1536, %v1696
    %1698 = vmatprep.mubr.bf16.mxu0 %v248
    %1699 = vmatmul.mubr.bf16.gmra.mrb[0].mxu0 %v247
    %v1700 = vpop.f32.mrb[0].mxu0
    %v1701 = vadd.f32 %v1540, %v1700
    %v1702 = vpop.f32.mrb[0].mxu0
    %v1703 = vadd.f32 %v1542, %v1702
    %v1704 = vpop.f32.mrb[0].mxu0
    %v1705 = vadd.f32 %v1544, %v1704
    %v1706 = vpop.f32.mrb[0].mxu0
    %v1707 = vadd.f32 %v1546, %v1706
    %1708 = vmatprep.mubr.bf16.mxu0 %v254
    %1709 = vmatmul.mubr.bf16.gmra.mrb[0].mxu0 %v253
    %v1710 = vpop.f32.mrb[0].mxu0
    %v1711 = vadd.f32 %v1550, %v1710
    %v1712 = vpop.f32.mrb[0].mxu0
    %v1713 = vadd.f32 %v1552, %v1712
    %v1714 = vpop.f32.mrb[0].mxu0
    %v1715 = vadd.f32 %v1554, %v1714
    %v1716 = vpop.f32.mrb[0].mxu0
    %v1717 = vadd.f32 %v1556, %v1716
    %1718 = vmatprep.mubr.bf16.mxu0 %v260
    %1719 = vmatmul.mubr.bf16.gmra.mrb[0].mxu0 %v259
    %v1720 = vpop.f32.mrb[0].mxu0
    %v1721 = vadd.f32 %v1560, %v1720
    %v1722 = vpop.f32.mrb[0].mxu0
    %v1723 = vadd.f32 %v1562, %v1722
    %v1724 = vpop.f32.mrb[0].mxu0
    %v1725 = vadd.f32 %v1564, %v1724
    %v1726 = vpop.f32.mrb[0].mxu0
    %v1727 = vadd.f32 %v1566, %v1726
    %1728 = vmatprep.mubr.bf16.mxu0 %v266
    %1729 = vmatmul.mubr.bf16.gmra.mrb[0].mxu0 %v265
    %v1730 = vpop.f32.mrb[0].mxu0
    %v1731 = vadd.f32 %v1570, %v1730
    %v1732 = vpop.f32.mrb[0].mxu0
    %v1733 = vadd.f32 %v1572, %v1732
    %v1734 = vpop.f32.mrb[0].mxu0
    %v1735 = vadd.f32 %v1574, %v1734
    %v1736 = vpop.f32.mrb[0].mxu0
    %v1737 = vadd.f32 %v1576, %v1736
    %1738 = vmatprep.mubr.bf16.mxu0 %v272
    %1739 = vmatmul.mubr.bf16.gmra.mrb[0].mxu0 %v271
    %v1740 = vpop.f32.mrb[0].mxu0
    %v1741 = vadd.f32 %v1580, %v1740
    %v1742 = vpop.f32.mrb[0].mxu0
    %v1743 = vadd.f32 %v1582, %v1742
    %v1744 = vpop.f32.mrb[0].mxu0
    %v1745 = vadd.f32 %v1584, %v1744
    %v1746 = vpop.f32.mrb[0].mxu0
    %v1747 = vadd.f32 %v1586, %v1746
    %1748 = vmatprep.mubr.bf16.mxu0 %v278
    %1749 = vmatmul.mubr.bf16.gmra.mrb[0].mxu0 %v277
    %v1750 = vpop.f32.mrb[0].mxu0
    %v1751 = vadd.f32 %v1590, %v1750
    %v1752 = vpop.f32.mrb[0].mxu0
    %v1753 = vadd.f32 %v1592, %v1752
    %v1754 = vpop.f32.mrb[0].mxu0
    %v1755 = vadd.f32 %v1594, %v1754
    %v1756 = vpop.f32.mrb[0].mxu0
    %v1757 = vadd.f32 %v1596, %v1756
    %1758 = vmatprep.mubr.bf16.mxu0 %v284
    %1759 = vmatmul.mubr.bf16.gmra.mrb[0].mxu0 %v283
    %v1760 = vpop.f32.mrb[0].mxu0
    %v1761 = vadd.f32 %v1600, %v1760
    %v1762 = vpop.f32.mrb[0].mxu0
    %v1763 = vadd.f32 %v1602, %v1762
    %v1764 = vpop.f32.mrb[0].mxu0
    %v1765 = vadd.f32 %v1604, %v1764
    %v1766 = vpop.f32.mrb[0].mxu0
    %v1767 = vadd.f32 %v1606, %v1766
    %1768 = vmatprep.mubr.bf16.mxu0 %v290
    %1769 = vmatmul.mubr.bf16.gmra.mrb[0].mxu0 %v289
    %v1770 = vpop.f32.mrb[0].mxu0
    %v1771 = vadd.f32 %v1610, %v1770
    %v1772 = vpop.f32.mrb[0].mxu0
    %v1773 = vadd.f32 %v1612, %v1772
    %v1774 = vpop.f32.mrb[0].mxu0
    %v1775 = vadd.f32 %v1614, %v1774
    %v1776 = vpop.f32.mrb[0].mxu0
    %v1777 = vadd.f32 %v1616, %v1776
    %1778 = vmatprep.mubr.bf16.mxu0 %v296
    %1779 = vmatmul.mubr.bf16.gmra.mrb[0].mxu0 %v295
    %v1780 = vpop.f32.mrb[0].mxu0
    %v1781 = vadd.f32 %v1620, %v1780
    %v1782 = vpop.f32.mrb[0].mxu0
    %v1783 = vadd.f32 %v1622, %v1782
    %v1784 = vpop.f32.mrb[0].mxu0
    %v1785 = vadd.f32 %v1624, %v1784
    %v1786 = vpop.f32.mrb[0].mxu0
    %v1787 = vadd.f32 %v1626, %v1786
    %1788 = vmatprep.mubr.bf16.mxu0 %v302
    %1789 = vmatmul.mubr.bf16.gmra.mrb[0].mxu0 %v301
    %v1790 = vpop.f32.mrb[0].mxu0
    %v1791 = vadd.f32 %v1630, %v1790
    %v1792 = vpop.f32.mrb[0].mxu0
    %v1793 = vadd.f32 %v1632, %v1792
    %v1794 = vpop.f32.mrb[0].mxu0
    %v1795 = vadd.f32 %v1634, %v1794
    %v1796 = vpop.f32.mrb[0].mxu0
    %v1797 = vadd.f32 %v1636, %v1796
    %1798 = vmatprep.mubr.bf16.mxu0 %v308
    %1799 = vmatmul.mubr.bf16.gmra.mrb[0].mxu0 %v307
    %v1800 = vpop.f32.mrb[0].mxu0
    %v1801 = vadd.f32 %v1640, %v1800
    %v1802 = vpop.f32.mrb[0].mxu0
    %v1803 = vadd.f32 %v1642, %v1802
    %v1804 = vpop.f32.mrb[0].mxu0
    %v1805 = vpop.f32.mrb[0].mxu0
    %1806 = vdwg.mxu0
    %1807 = vmatprep.subr.bf16.mxu0 %v1230
    %1808 = vmatpush1.bf16.msra.mxu0 %v1229
    %1809 = vmatprep.subr.bf16.mxu0 %v1234
    %1810 = vmatpush1.bf16.msra.mxu0 %v1233
    %1811 = vmatprep.subr.bf16.mxu0 %v1238
    %1812 = vmatpush1.bf16.msra.mxu0 %v1237
    %1813 = vmatprep.subr.bf16.mxu0 %v1242
    %1814 = vmatpush1.bf16.msra.mxu0 %v1241
    %1815 = vmatprep.subr.bf16.mxu0 %v1246
    %1816 = vmatpush1.bf16.msra.mxu0 %v1245
    %1817 = vmatprep.subr.bf16.mxu0 %v1250
    %1818 = vmatpush1.bf16.msra.mxu0 %v1249
    %1819 = vmatprep.subr.bf16.mxu0 %v1254
    %1820 = vmatpush1.bf16.msra.mxu0 %v1253
    %1821 = vmatprep.subr.bf16.mxu0 %v1258
    %1822 = vmatpush1.bf16.msra.mxu0 %v1257
    %1823 = vmatprep.subr.bf16.mxu0 %v1262
    %1824 = vmatpush1.bf16.msra.mxu0 %v1261
    %1825 = vmatprep.subr.bf16.mxu0 %v1266
    %1826 = vmatpush1.bf16.msra.mxu0 %v1265
    %1827 = vmatprep.subr.bf16.mxu0 %v1270
    %1828 = vmatpush1.bf16.msra.mxu0 %v1269
    %1829 = vmatprep.subr.bf16.mxu0 %v1274
    %1830 = vmatpush1.bf16.msra.mxu0 %v1273
    %1831 = vmatprep.subr.bf16.mxu0 %v1278
    %1832 = vmatpush1.bf16.msra.mxu0 %v1277
    %1833 = vmatprep.subr.bf16.mxu0 %v1282
    %1834 = vmatpush1.bf16.msra.mxu0 %v1281
    %1835 = vmatprep.subr.bf16.mxu0 %v1286
    %1836 = vmatpush1.bf16.msra.mxu0 %v1285
    %1837 = vmatprep.subr.bf16.mxu0 %v1290
    %1838 = vmatpush1.bf16.msra.mxu0 %v1289
    %1839 = vmatprep.mubr.bf16.mxu0 %v238
    %1840 = vmatmul.mubr.bf16.gmra.mrb[0].mxu0 %v237
    %v1841 = vpop.f32.mrb[0].mxu0
    %v1842 = vadd.f32 %v1681, %v1841
    %v1843 = vpop.f32.mrb[0].mxu0
    %v1844 = vadd.f32 %v1683, %v1843
    %v1845 = vpop.f32.mrb[0].mxu0
    %v1846 = vadd.f32 %v1685, %v1845
    %v1847 = vpop.f32.mrb[0].mxu0
    %v1848 = vadd.f32 %v1687, %v1847
    %1849 = vmatprep.mubr.bf16.mxu0 %v244
    %1850 = vmatmul.mubr.bf16.gmra.mrb[0].mxu0 %v243
    %v1851 = vpop.f32.mrb[0].mxu0
    %v1852 = vadd.f32 %v1691, %v1851
    %v1853 = vpop.f32.mrb[0].mxu0
    %v1854 = vadd.f32 %v1693, %v1853
    %v1855 = vpop.f32.mrb[0].mxu0
    %v1856 = vadd.f32 %v1695, %v1855
    %v1857 = vpop.f32.mrb[0].mxu0
    %v1858 = vadd.f32 %v1697, %v1857
    %1859 = vmatprep.mubr.bf16.mxu0 %v250
    %1860 = vmatmul.mubr.bf16.gmra.mrb[0].mxu0 %v249
    %v1861 = vpop.f32.mrb[0].mxu0
    %v1862 = vadd.f32 %v1701, %v1861
    %v1863 = vpop.f32.mrb[0].mxu0
    %v1864 = vadd.f32 %v1703, %v1863
    %v1865 = vpop.f32.mrb[0].mxu0
    %v1866 = vadd.f32 %v1705, %v1865
    %v1867 = vpop.f32.mrb[0].mxu0
    %v1868 = vadd.f32 %v1707, %v1867
    %1869 = vmatprep.mubr.bf16.mxu0 %v256
    %1870 = vmatmul.mubr.bf16.gmra.mrb[0].mxu0 %v255
    %v1871 = vpop.f32.mrb[0].mxu0
    %v1872 = vadd.f32 %v1711, %v1871
    %v1873 = vpop.f32.mrb[0].mxu0
    %v1874 = vadd.f32 %v1713, %v1873
    %v1875 = vpop.f32.mrb[0].mxu0
    %v1876 = vadd.f32 %v1715, %v1875
    %v1877 = vpop.f32.mrb[0].mxu0
    %v1878 = vadd.f32 %v1717, %v1877
    %1879 = vmatprep.mubr.bf16.mxu0 %v262
    %1880 = vmatmul.mubr.bf16.gmra.mrb[0].mxu0 %v261
    %v1881 = vpop.f32.mrb[0].mxu0
    %v1882 = vadd.f32 %v1721, %v1881
    %v1883 = vpop.f32.mrb[0].mxu0
    %v1884 = vadd.f32 %v1723, %v1883
    %v1885 = vpop.f32.mrb[0].mxu0
    %v1886 = vadd.f32 %v1725, %v1885
    %v1887 = vpop.f32.mrb[0].mxu0
    %v1888 = vadd.f32 %v1727, %v1887
    %1889 = vmatprep.mubr.bf16.mxu0 %v268
    %1890 = vmatmul.mubr.bf16.gmra.mrb[0].mxu0 %v267
    %v1891 = vpop.f32.mrb[0].mxu0
    %v1892 = vadd.f32 %v1731, %v1891
    %v1893 = vpop.f32.mrb[0].mxu0
    %v1894 = vadd.f32 %v1733, %v1893
    %v1895 = vpop.f32.mrb[0].mxu0
    %v1896 = vadd.f32 %v1735, %v1895
    %v1897 = vpop.f32.mrb[0].mxu0
    %v1898 = vadd.f32 %v1737, %v1897
    %1899 = vmatprep.mubr.bf16.mxu0 %v274
    %1900 = vmatmul.mubr.bf16.gmra.mrb[0].mxu0 %v273
    %v1901 = vpop.f32.mrb[0].mxu0
    %v1902 = vadd.f32 %v1741, %v1901
    %v1903 = vpop.f32.mrb[0].mxu0
    %v1904 = vadd.f32 %v1743, %v1903
    %v1905 = vpop.f32.mrb[0].mxu0
    %v1906 = vadd.f32 %v1745, %v1905
    %v1907 = vpop.f32.mrb[0].mxu0
    %v1908 = vadd.f32 %v1747, %v1907
    %1909 = vmatprep.mubr.bf16.mxu0 %v280
    %1910 = vmatmul.mubr.bf16.gmra.mrb[0].mxu0 %v279
    %v1911 = vpop.f32.mrb[0].mxu0
    %v1912 = vadd.f32 %v1751, %v1911
    %v1913 = vpop.f32.mrb[0].mxu0
    %v1914 = vadd.f32 %v1753, %v1913
    %v1915 = vpop.f32.mrb[0].mxu0
    %v1916 = vadd.f32 %v1755, %v1915
    %v1917 = vpop.f32.mrb[0].mxu0
    %v1918 = vadd.f32 %v1757, %v1917
    %1919 = vmatprep.mubr.bf16.mxu0 %v286
    %1920 = vmatmul.mubr.bf16.gmra.mrb[0].mxu0 %v285
    %v1921 = vpop.f32.mrb[0].mxu0
    %v1922 = vadd.f32 %v1761, %v1921
    %v1923 = vpop.f32.mrb[0].mxu0
    %v1924 = vadd.f32 %v1763, %v1923
    %v1925 = vpop.f32.mrb[0].mxu0
    %v1926 = vadd.f32 %v1765, %v1925
    %v1927 = vpop.f32.mrb[0].mxu0
    %v1928 = vadd.f32 %v1767, %v1927
    %1929 = vmatprep.mubr.bf16.mxu0 %v292
    %1930 = vmatmul.mubr.bf16.gmra.mrb[0].mxu0 %v291
    %v1931 = vpop.f32.mrb[0].mxu0
    %v1932 = vadd.f32 %v1771, %v1931
    %v1933 = vpop.f32.mrb[0].mxu0
    %v1934 = vadd.f32 %v1773, %v1933
    %v1935 = vpop.f32.mrb[0].mxu0
    %v1936 = vadd.f32 %v1775, %v1935
    %v1937 = vpop.f32.mrb[0].mxu0
    %v1938 = vadd.f32 %v1777, %v1937
    %1939 = vmatprep.mubr.bf16.mxu0 %v298
    %1940 = vmatmul.mubr.bf16.gmra.mrb[0].mxu0 %v297
    %v1941 = vpop.f32.mrb[0].mxu0
    %v1942 = vadd.f32 %v1781, %v1941
    %v1943 = vpop.f32.mrb[0].mxu0
    %v1944 = vadd.f32 %v1783, %v1943
    %v1945 = vpop.f32.mrb[0].mxu0
    %v1946 = vadd.f32 %v1785, %v1945
    %v1947 = vpop.f32.mrb[0].mxu0
    %v1948 = vadd.f32 %v1787, %v1947
    %1949 = vmatprep.mubr.bf16.mxu0 %v304
    %1950 = vmatmul.mubr.bf16.gmra.mrb[0].mxu0 %v303
    %v1951 = vpop.f32.mrb[0].mxu0
    %v1952 = vadd.f32 %v1791, %v1951
    %v1953 = vpop.f32.mrb[0].mxu0
    %v1954 = vadd.f32 %v1793, %v1953
    %v1955 = vpop.f32.mrb[0].mxu0
    %v1956 = vadd.f32 %v1795, %v1955
    %v1957 = vpop.f32.mrb[0].mxu0
    %v1958 = vadd.f32 %v1797, %v1957
    %1959 = vmatprep.mubr.bf16.mxu0 %v310
    %1960 = vmatmul.mubr.bf16.gmra.mrb[0].mxu0 %v309
    %v1961 = vpop.f32.mrb[0].mxu0
    %v1962 = vadd.f32 %v1801, %v1961
    %v1963 = vpop.f32.mrb[0].mxu0
    %v1964 = vadd.f32 %v1803, %v1963
    %v1965 = vpop.f32.mrb[0].mxu0
    %v1966 = vpop.f32.mrb[0].mxu0
    %1967 = vdwg.mxu0
    %1968 = vmatprep.subr.bf16.mxu0 %v1104
    %1969 = vmatpush1.bf16.msra.mxu0 %v1103
    %1970 = vmatprep.subr.bf16.mxu0 %v1108
    %1971 = vmatpush1.bf16.msra.mxu0 %v1107
    %1972 = vmatprep.subr.bf16.mxu0 %v1112
    %1973 = vmatpush1.bf16.msra.mxu0 %v1111
    %1974 = vmatprep.subr.bf16.mxu0 %v1116
    %1975 = vmatpush1.bf16.msra.mxu0 %v1115
    %1976 = vmatprep.subr.bf16.mxu0 %v1120
    %1977 = vmatpush1.bf16.msra.mxu0 %v1119
    %1978 = vmatprep.subr.bf16.mxu0 %v1124
    %1979 = vmatpush1.bf16.msra.mxu0 %v1123
    %1980 = vmatprep.subr.bf16.mxu0 %v1128
    %1981 = vmatpush1.bf16.msra.mxu0 %v1127
    %1982 = vmatprep.subr.bf16.mxu0 %v1132
    %1983 = vmatpush1.bf16.msra.mxu0 %v1131
    %1984 = vmatprep.subr.bf16.mxu0 %v1136
    %1985 = vmatpush1.bf16.msra.mxu0 %v1135
    %1986 = vmatprep.subr.bf16.mxu0 %v1140
    %1987 = vmatpush1.bf16.msra.mxu0 %v1139
    %1988 = vmatprep.subr.bf16.mxu0 %v1144
    %1989 = vmatpush1.bf16.msra.mxu0 %v1143
    %1990 = vmatprep.subr.bf16.mxu0 %v1148
    %1991 = vmatpush1.bf16.msra.mxu0 %v1147
    %1992 = vmatprep.subr.bf16.mxu0 %v1152
    %1993 = vmatpush1.bf16.msra.mxu0 %v1151
    %1994 = vmatprep.subr.bf16.mxu0 %v1156
    %1995 = vmatpush1.bf16.msra.mxu0 %v1155
    %1996 = vmatprep.subr.bf16.mxu0 %v1160
    %1997 = vmatpush1.bf16.msra.mxu0 %v1159
    %1998 = vmatprep.subr.bf16.mxu0 %v1164
    %1999 = vmatpush1.bf16.msra.mxu0 %v1163
    %2000 = vmatprep.mubr.bf16.mxu0 %v234
    %2001 = vmatmul.mubr.bf16.gmra.mrb[0].mxu0 %v233
    %v2002 = vpop.f32.mrb[0].mxu0
    %v2003 = vadd.f32 %v516, %v2002
    %v2004 = vpop.f32.mrb[0].mxu0
    %v2005 = vadd.f32 %v520, %v2004
    %v2006 = vpop.f32.mrb[0].mxu0
    %v2007 = vadd.f32 %v516, %v2006
    %v2008 = vpop.f32.mrb[0].mxu0
    %v2009 = vadd.f32 %v520, %v2008
    %2010 = vmatprep.mubr.bf16.mxu0 %v240
    %2011 = vmatmul.mubr.bf16.gmra.mrb[0].mxu0 %v239
    %v2012 = vpop.f32.mrb[0].mxu0
    %v2013 = vadd.f32 %v516, %v2012
    %v2014 = vpop.f32.mrb[0].mxu0
    %v2015 = vadd.f32 %v520, %v2014
    %v2016 = vpop.f32.mrb[0].mxu0
    %v2017 = vadd.f32 %v516, %v2016
    %v2018 = vpop.f32.mrb[0].mxu0
    %v2019 = vadd.f32 %v520, %v2018
    %2020 = vmatprep.mubr.bf16.mxu0 %v246
    %2021 = vmatmul.mubr.bf16.gmra.mrb[0].mxu0 %v245
    %v2022 = vpop.f32.mrb[0].mxu0
    %v2023 = vadd.f32 %v516, %v2022
    %v2024 = vpop.f32.mrb[0].mxu0
    %v2025 = vadd.f32 %v520, %v2024
    %v2026 = vpop.f32.mrb[0].mxu0
    %v2027 = vadd.f32 %v516, %v2026
    %v2028 = vpop.f32.mrb[0].mxu0
    %v2029 = vadd.f32 %v520, %v2028
    %2030 = vmatprep.mubr.bf16.mxu0 %v252
    %2031 = vmatmul.mubr.bf16.gmra.mrb[0].mxu0 %v251
    %v2032 = vpop.f32.mrb[0].mxu0
    %v2033 = vadd.f32 %v516, %v2032
    %v2034 = vpop.f32.mrb[0].mxu0
    %v2035 = vadd.f32 %v520, %v2034
    %v2036 = vpop.f32.mrb[0].mxu0
    %v2037 = vadd.f32 %v516, %v2036
    %v2038 = vpop.f32.mrb[0].mxu0
    %v2039 = vadd.f32 %v520, %v2038
    %2040 = vmatprep.mubr.bf16.mxu0 %v258
    %2041 = vmatmul.mubr.bf16.gmra.mrb[0].mxu0 %v257
    %v2042 = vpop.f32.mrb[0].mxu0
    %v2043 = vadd.f32 %v516, %v2042
    %v2044 = vpop.f32.mrb[0].mxu0
    %v2045 = vadd.f32 %v520, %v2044
    %v2046 = vpop.f32.mrb[0].mxu0
    %v2047 = vadd.f32 %v516, %v2046
    %v2048 = vpop.f32.mrb[0].mxu0
    %v2049 = vadd.f32 %v520, %v2048
    %2050 = vmatprep.mubr.bf16.mxu0 %v264
    %2051 = vmatmul.mubr.bf16.gmra.mrb[0].mxu0 %v263
    %v2052 = vpop.f32.mrb[0].mxu0
    %v2053 = vadd.f32 %v516, %v2052
    %v2054 = vpop.f32.mrb[0].mxu0
    %v2055 = vadd.f32 %v520, %v2054
    %v2056 = vpop.f32.mrb[0].mxu0
    %v2057 = vadd.f32 %v516, %v2056
    %v2058 = vpop.f32.mrb[0].mxu0
    %v2059 = vadd.f32 %v520, %v2058
    %2060 = vmatprep.mubr.bf16.mxu0 %v270
    %2061 = vmatmul.mubr.bf16.gmra.mrb[0].mxu0 %v269
    %v2062 = vpop.f32.mrb[0].mxu0
    %v2063 = vadd.f32 %v516, %v2062
    %v2064 = vpop.f32.mrb[0].mxu0
    %v2065 = vadd.f32 %v520, %v2064
    %v2066 = vpop.f32.mrb[0].mxu0
    %v2067 = vadd.f32 %v516, %v2066
    %v2068 = vpop.f32.mrb[0].mxu0
    %v2069 = vadd.f32 %v520, %v2068
    %2070 = vmatprep.mubr.bf16.mxu0 %v276
    %2071 = vmatmul.mubr.bf16.gmra.mrb[0].mxu0 %v275
    %v2072 = vpop.f32.mrb[0].mxu0
    %v2073 = vadd.f32 %v516, %v2072
    %v2074 = vpop.f32.mrb[0].mxu0
    %v2075 = vadd.f32 %v520, %v2074
    %v2076 = vpop.f32.mrb[0].mxu0
    %v2077 = vadd.f32 %v516, %v2076
    %v2078 = vpop.f32.mrb[0].mxu0
    %v2079 = vadd.f32 %v520, %v2078
    %2080 = vmatprep.mubr.bf16.mxu0 %v282
    %2081 = vmatmul.mubr.bf16.gmra.mrb[0].mxu0 %v281
    %v2082 = vpop.f32.mrb[0].mxu0
    %v2083 = vadd.f32 %v516, %v2082
    %v2084 = vpop.f32.mrb[0].mxu0
    %v2085 = vadd.f32 %v520, %v2084
    %v2086 = vpop.f32.mrb[0].mxu0
    %v2087 = vadd.f32 %v516, %v2086
    %v2088 = vpop.f32.mrb[0].mxu0
    %v2089 = vadd.f32 %v520, %v2088
    %2090 = vmatprep.mubr.bf16.mxu0 %v288
    %2091 = vmatmul.mubr.bf16.gmra.mrb[0].mxu0 %v287
    %v2092 = vpop.f32.mrb[0].mxu0
    %v2093 = vadd.f32 %v516, %v2092
    %v2094 = vpop.f32.mrb[0].mxu0
    %v2095 = vadd.f32 %v520, %v2094
    %v2096 = vpop.f32.mrb[0].mxu0
    %v2097 = vadd.f32 %v516, %v2096
    %v2098 = vpop.f32.mrb[0].mxu0
    %v2099 = vadd.f32 %v520, %v2098
    %2100 = vmatprep.mubr.bf16.mxu0 %v294
    %2101 = vmatmul.mubr.bf16.gmra.mrb[0].mxu0 %v293
    %v2102 = vpop.f32.mrb[0].mxu0
    %v2103 = vadd.f32 %v516, %v2102
    %v2104 = vpop.f32.mrb[0].mxu0
    %v2105 = vadd.f32 %v520, %v2104
    %v2106 = vpop.f32.mrb[0].mxu0
    %v2107 = vadd.f32 %v516, %v2106
    %v2108 = vpop.f32.mrb[0].mxu0
    %v2109 = vadd.f32 %v520, %v2108
    %2110 = vmatprep.mubr.bf16.mxu0 %v300
    %2111 = vmatmul.mubr.bf16.gmra.mrb[0].mxu0 %v299
    %v2112 = vpop.f32.mrb[0].mxu0
    %v2113 = vadd.f32 %v516, %v2112
    %v2114 = vpop.f32.mrb[0].mxu0
    %v2115 = vadd.f32 %v520, %v2114
    %v2116 = vpop.f32.mrb[0].mxu0
    %v2117 = vadd.f32 %v516, %v2116
    %v2118 = vpop.f32.mrb[0].mxu0
    %v2119 = vadd.f32 %v520, %v2118
    %2120 = vmatprep.mubr.bf16.mxu0 %v306
    %2121 = vmatmul.mubr.bf16.gmra.mrb[0].mxu0 %v305
    %v2122 = vpop.f32.mrb[0].mxu0
    %v2123 = vadd.f32 %v516, %v2122
    %v2124 = vpop.f32.mrb[0].mxu0
    %v2125 = vadd.f32 %v520, %v2124
    %v2126 = vpop.f32.mrb[0].mxu0
    %v2127 = vpop.f32.mrb[0].mxu0
    %2128 = vdwg.mxu0
    %2129 = vmatprep.subr.bf16.mxu0 %v1168
    %2130 = vmatpush1.bf16.msra.mxu0 %v1167
    %2131 = vmatprep.subr.bf16.mxu0 %v1172
    %2132 = vmatpush1.bf16.msra.mxu0 %v1171
    %2133 = vmatprep.subr.bf16.mxu0 %v1176
    %2134 = vmatpush1.bf16.msra.mxu0 %v1175
    %2135 = vmatprep.subr.bf16.mxu0 %v1180
    %2136 = vmatpush1.bf16.msra.mxu0 %v1179
    %2137 = vmatprep.subr.bf16.mxu0 %v1184
    %2138 = vmatpush1.bf16.msra.mxu0 %v1183
    %2139 = vmatprep.subr.bf16.mxu0 %v1188
    %2140 = vmatpush1.bf16.msra.mxu0 %v1187
    %2141 = vmatprep.subr.bf16.mxu0 %v1192
    %2142 = vmatpush1.bf16.msra.mxu0 %v1191
    %2143 = vmatprep.subr.bf16.mxu0 %v1196
    %2144 = vmatpush1.bf16.msra.mxu0 %v1195
    %2145 = vmatprep.subr.bf16.mxu0 %v1200
    %2146 = vmatpush1.bf16.msra.mxu0 %v1199
    %2147 = vmatprep.subr.bf16.mxu0 %v1204
    %2148 = vmatpush1.bf16.msra.mxu0 %v1203
    %2149 = vmatprep.subr.bf16.mxu0 %v1208
    %2150 = vmatpush1.bf16.msra.mxu0 %v1207
    %2151 = vmatprep.subr.bf16.mxu0 %v1212
    %2152 = vmatpush1.bf16.msra.mxu0 %v1211
    %2153 = vmatprep.subr.bf16.mxu0 %v1216
    %2154 = vmatpush1.bf16.msra.mxu0 %v1215
    %2155 = vmatprep.subr.bf16.mxu0 %v1220
    %2156 = vmatpush1.bf16.msra.mxu0 %v1219
    %2157 = vmatprep.subr.bf16.mxu0 %v1224
    %2158 = vmatpush1.bf16.msra.mxu0 %v1223
    %2159 = vmatprep.subr.bf16.mxu0 %v1228
    %2160 = vmatpush1.bf16.msra.mxu0 %v1227
    %2161 = vmatprep.mubr.bf16.mxu0 %v236
    %2162 = vmatmul.mubr.bf16.gmra.mrb[0].mxu0 %v235
    %v2163 = vpop.f32.mrb[0].mxu0
    %v2164 = vadd.f32 %v2003, %v2163
    %v2165 = vpop.f32.mrb[0].mxu0
    %v2166 = vadd.f32 %v2005, %v2165
    %v2167 = vpop.f32.mrb[0].mxu0
    %v2168 = vadd.f32 %v2007, %v2167
    %v2169 = vpop.f32.mrb[0].mxu0
    %v2170 = vadd.f32 %v2009, %v2169
    %2171 = vmatprep.mubr.bf16.mxu0 %v242
    %2172 = vmatmul.mubr.bf16.gmra.mrb[0].mxu0 %v241
    %v2173 = vpop.f32.mrb[0].mxu0
    %v2174 = vadd.f32 %v2013, %v2173
    %v2175 = vpop.f32.mrb[0].mxu0
    %v2176 = vadd.f32 %v2015, %v2175
    %v2177 = vpop.f32.mrb[0].mxu0
    %v2178 = vadd.f32 %v2017, %v2177
    %v2179 = vpop.f32.mrb[0].mxu0
    %v2180 = vadd.f32 %v2019, %v2179
    %2181 = vmatprep.mubr.bf16.mxu0 %v248
    %2182 = vmatmul.mubr.bf16.gmra.mrb[0].mxu0 %v247
    %v2183 = vpop.f32.mrb[0].mxu0
    %v2184 = vadd.f32 %v2023, %v2183
    %v2185 = vpop.f32.mrb[0].mxu0
    %v2186 = vadd.f32 %v2025, %v2185
    %v2187 = vpop.f32.mrb[0].mxu0
    %v2188 = vadd.f32 %v2027, %v2187
    %v2189 = vpop.f32.mrb[0].mxu0
    %v2190 = vadd.f32 %v2029, %v2189
    %2191 = vmatprep.mubr.bf16.mxu0 %v254
    %2192 = vmatmul.mubr.bf16.gmra.mrb[0].mxu0 %v253
    %v2193 = vpop.f32.mrb[0].mxu0
    %v2194 = vadd.f32 %v2033, %v2193
    %v2195 = vpop.f32.mrb[0].mxu0
    %v2196 = vadd.f32 %v2035, %v2195
    %v2197 = vpop.f32.mrb[0].mxu0
    %v2198 = vadd.f32 %v2037, %v2197
    %v2199 = vpop.f32.mrb[0].mxu0
    %v2200 = vadd.f32 %v2039, %v2199
    %2201 = vmatprep.mubr.bf16.mxu0 %v260
    %2202 = vmatmul.mubr.bf16.gmra.mrb[0].mxu0 %v259
    %v2203 = vpop.f32.mrb[0].mxu0
    %v2204 = vadd.f32 %v2043, %v2203
    %v2205 = vpop.f32.mrb[0].mxu0
    %v2206 = vadd.f32 %v2045, %v2205
    %v2207 = vpop.f32.mrb[0].mxu0
    %v2208 = vadd.f32 %v2047, %v2207
    %v2209 = vpop.f32.mrb[0].mxu0
    %v2210 = vadd.f32 %v2049, %v2209
    %2211 = vmatprep.mubr.bf16.mxu0 %v266
    %2212 = vmatmul.mubr.bf16.gmra.mrb[0].mxu0 %v265
    %v2213 = vpop.f32.mrb[0].mxu0
    %v2214 = vadd.f32 %v2053, %v2213
    %v2215 = vpop.f32.mrb[0].mxu0
    %v2216 = vadd.f32 %v2055, %v2215
    %v2217 = vpop.f32.mrb[0].mxu0
    %v2218 = vadd.f32 %v2057, %v2217
    %v2219 = vpop.f32.mrb[0].mxu0
    %v2220 = vadd.f32 %v2059, %v2219
    %2221 = vmatprep.mubr.bf16.mxu0 %v272
    %2222 = vmatmul.mubr.bf16.gmra.mrb[0].mxu0 %v271
    %v2223 = vpop.f32.mrb[0].mxu0
    %v2224 = vadd.f32 %v2063, %v2223
    %v2225 = vpop.f32.mrb[0].mxu0
    %v2226 = vadd.f32 %v2065, %v2225
    %v2227 = vpop.f32.mrb[0].mxu0
    %v2228 = vadd.f32 %v2067, %v2227
    %v2229 = vpop.f32.mrb[0].mxu0
    %v2230 = vadd.f32 %v2069, %v2229
    %2231 = vmatprep.mubr.bf16.mxu0 %v278
    %2232 = vmatmul.mubr.bf16.gmra.mrb[0].mxu0 %v277
    %v2233 = vpop.f32.mrb[0].mxu0
    %v2234 = vadd.f32 %v2073, %v2233
    %v2235 = vpop.f32.mrb[0].mxu0
    %v2236 = vadd.f32 %v2075, %v2235
    %v2237 = vpop.f32.mrb[0].mxu0
    %v2238 = vadd.f32 %v2077, %v2237
    %v2239 = vpop.f32.mrb[0].mxu0
    %v2240 = vadd.f32 %v2079, %v2239
    %2241 = vmatprep.mubr.bf16.mxu0 %v284
    %2242 = vmatmul.mubr.bf16.gmra.mrb[0].mxu0 %v283
    %v2243 = vpop.f32.mrb[0].mxu0
    %v2244 = vadd.f32 %v2083, %v2243
    %v2245 = vpop.f32.mrb[0].mxu0
    %v2246 = vadd.f32 %v2085, %v2245
    %v2247 = vpop.f32.mrb[0].mxu0
    %v2248 = vadd.f32 %v2087, %v2247
    %v2249 = vpop.f32.mrb[0].mxu0
    %v2250 = vadd.f32 %v2089, %v2249
    %2251 = vmatprep.mubr.bf16.mxu0 %v290
    %2252 = vmatmul.mubr.bf16.gmra.mrb[0].mxu0 %v289
    %v2253 = vpop.f32.mrb[0].mxu0
    %v2254 = vadd.f32 %v2093, %v2253
    %v2255 = vpop.f32.mrb[0].mxu0
    %v2256 = vadd.f32 %v2095, %v2255
    %v2257 = vpop.f32.mrb[0].mxu0
    %v2258 = vadd.f32 %v2097, %v2257
    %v2259 = vpop.f32.mrb[0].mxu0
    %v2260 = vadd.f32 %v2099, %v2259
    %2261 = vmatprep.mubr.bf16.mxu0 %v296
    %2262 = vmatmul.mubr.bf16.gmra.mrb[0].mxu0 %v295
    %v2263 = vpop.f32.mrb[0].mxu0
    %v2264 = vadd.f32 %v2103, %v2263
    %v2265 = vpop.f32.mrb[0].mxu0
    %v2266 = vadd.f32 %v2105, %v2265
    %v2267 = vpop.f32.mrb[0].mxu0
    %v2268 = vadd.f32 %v2107, %v2267
    %v2269 = vpop.f32.mrb[0].mxu0
    %v2270 = vadd.f32 %v2109, %v2269
    %2271 = vmatprep.mubr.bf16.mxu0 %v302
    %2272 = vmatmul.mubr.bf16.gmra.mrb[0].mxu0 %v301
    %v2273 = vpop.f32.mrb[0].mxu0
    %v2274 = vadd.f32 %v2113, %v2273
    %v2275 = vpop.f32.mrb[0].mxu0
    %v2276 = vadd.f32 %v2115, %v2275
    %v2277 = vpop.f32.mrb[0].mxu0
    %v2278 = vadd.f32 %v2117, %v2277
    %v2279 = vpop.f32.mrb[0].mxu0
    %v2280 = vadd.f32 %v2119, %v2279
    %2281 = vmatprep.mubr.bf16.mxu0 %v308
    %2282 = vmatmul.mubr.bf16.gmra.mrb[0].mxu0 %v307
    %v2283 = vpop.f32.mrb[0].mxu0
    %v2284 = vadd.f32 %v2123, %v2283
    %v2285 = vpop.f32.mrb[0].mxu0
    %v2286 = vadd.f32 %v2125, %v2285
    %v2287 = vpop.f32.mrb[0].mxu0
    %v2288 = vpop.f32.mrb[0].mxu0
    %2289 = vdwg.mxu0
    %2290 = vmatprep.subr.bf16.mxu0 %v1232
    %2291 = vmatpush1.bf16.msra.mxu0 %v1231
    %2292 = vmatprep.subr.bf16.mxu0 %v1236
    %2293 = vmatpush1.bf16.msra.mxu0 %v1235
    %2294 = vmatprep.subr.bf16.mxu0 %v1240
    %2295 = vmatpush1.bf16.msra.mxu0 %v1239
    %2296 = vmatprep.subr.bf16.mxu0 %v1244
    %2297 = vmatpush1.bf16.msra.mxu0 %v1243
    %2298 = vmatprep.subr.bf16.mxu0 %v1248
    %2299 = vmatpush1.bf16.msra.mxu0 %v1247
    %2300 = vmatprep.subr.bf16.mxu0 %v1252
    %2301 = vmatpush1.bf16.msra.mxu0 %v1251
    %2302 = vmatprep.subr.bf16.mxu0 %v1256
    %2303 = vmatpush1.bf16.msra.mxu0 %v1255
    %2304 = vmatprep.subr.bf16.mxu0 %v1260
    %2305 = vmatpush1.bf16.msra.mxu0 %v1259
    %2306 = vmatprep.subr.bf16.mxu0 %v1264
    %2307 = vmatpush1.bf16.msra.mxu0 %v1263
    %2308 = vmatprep.subr.bf16.mxu0 %v1268
    %2309 = vmatpush1.bf16.msra.mxu0 %v1267
    %2310 = vmatprep.subr.bf16.mxu0 %v1272
    %2311 = vmatpush1.bf16.msra.mxu0 %v1271
    %2312 = vmatprep.subr.bf16.mxu0 %v1276
    %2313 = vmatpush1.bf16.msra.mxu0 %v1275
    %2314 = vmatprep.subr.bf16.mxu0 %v1280
    %2315 = vmatpush1.bf16.msra.mxu0 %v1279
    %2316 = vmatprep.subr.bf16.mxu0 %v1284
    %2317 = vmatpush1.bf16.msra.mxu0 %v1283
    %2318 = vmatprep.subr.bf16.mxu0 %v1288
    %2319 = vmatpush1.bf16.msra.mxu0 %v1287
    %2320 = vmatprep.subr.bf16.mxu0 %v1292
    %2321 = vmatpush1.bf16.msra.mxu0 %v1291
    %2322 = vmatprep.mubr.bf16.mxu0 %v238
    %2323 = vmatmul.mubr.bf16.gmra.mrb[0].mxu0 %v237
    %v2324 = vpop.f32.mrb[0].mxu0
    %v2325 = vadd.f32 %v2164, %v2324
    %v2326 = vpop.f32.mrb[0].mxu0
    %v2327 = vadd.f32 %v2166, %v2326
    %v2328 = vpop.f32.mrb[0].mxu0
    %v2329 = vadd.f32 %v2168, %v2328
    %v2330 = vpop.f32.mrb[0].mxu0
    %v2331 = vadd.f32 %v2170, %v2330
    %2332 = vmatprep.mubr.bf16.mxu0 %v244
    %2333 = vmatmul.mubr.bf16.gmra.mrb[0].mxu0 %v243
    %v2334 = vpop.f32.mrb[0].mxu0
    %v2335 = vadd.f32 %v2174, %v2334
    %v2336 = vpop.f32.mrb[0].mxu0
    %v2337 = vadd.f32 %v2176, %v2336
    %v2338 = vpop.f32.mrb[0].mxu0
    %v2339 = vadd.f32 %v2178, %v2338
    %v2340 = vpop.f32.mrb[0].mxu0
    %v2341 = vadd.f32 %v2180, %v2340
    %2342 = vmatprep.mubr.bf16.mxu0 %v250
    %2343 = vmatmul.mubr.bf16.gmra.mrb[0].mxu0 %v249
    %v2344 = vpop.f32.mrb[0].mxu0
    %v2345 = vadd.f32 %v2184, %v2344
    %v2346 = vpop.f32.mrb[0].mxu0
    %v2347 = vadd.f32 %v2186, %v2346
    %v2348 = vpop.f32.mrb[0].mxu0
    %v2349 = vadd.f32 %v2188, %v2348
    %v2350 = vpop.f32.mrb[0].mxu0
    %v2351 = vadd.f32 %v2190, %v2350
    %2352 = vmatprep.mubr.bf16.mxu0 %v256
    %2353 = vmatmul.mubr.bf16.gmra.mrb[0].mxu0 %v255
    %v2354 = vpop.f32.mrb[0].mxu0
    %v2355 = vadd.f32 %v2194, %v2354
    %v2356 = vpop.f32.mrb[0].mxu0
    %v2357 = vadd.f32 %v2196, %v2356
    %v2358 = vpop.f32.mrb[0].mxu0
    %v2359 = vadd.f32 %v2198, %v2358
    %v2360 = vpop.f32.mrb[0].mxu0
    %v2361 = vadd.f32 %v2200, %v2360
    %2362 = vmatprep.mubr.bf16.mxu0 %v262
    %2363 = vmatmul.mubr.bf16.gmra.mrb[0].mxu0 %v261
    %v2364 = vpop.f32.mrb[0].mxu0
    %v2365 = vadd.f32 %v2204, %v2364
    %v2366 = vpop.f32.mrb[0].mxu0
    %v2367 = vadd.f32 %v2206, %v2366
    %v2368 = vpop.f32.mrb[0].mxu0
    %v2369 = vadd.f32 %v2208, %v2368
    %v2370 = vpop.f32.mrb[0].mxu0
    %v2371 = vadd.f32 %v2210, %v2370
    %2372 = vmatprep.mubr.bf16.mxu0 %v268
    %2373 = vmatmul.mubr.bf16.gmra.mrb[0].mxu0 %v267
    %v2374 = vpop.f32.mrb[0].mxu0
    %v2375 = vadd.f32 %v2214, %v2374
    %v2376 = vpop.f32.mrb[0].mxu0
    %v2377 = vadd.f32 %v2216, %v2376
    %v2378 = vpop.f32.mrb[0].mxu0
    %v2379 = vadd.f32 %v2218, %v2378
    %v2380 = vpop.f32.mrb[0].mxu0
    %v2381 = vadd.f32 %v2220, %v2380
    %2382 = vmatprep.mubr.bf16.mxu0 %v274
    %2383 = vmatmul.mubr.bf16.gmra.mrb[0].mxu0 %v273
    %v2384 = vpop.f32.mrb[0].mxu0
    %v2385 = vadd.f32 %v2224, %v2384
    %v2386 = vpop.f32.mrb[0].mxu0
    %v2387 = vadd.f32 %v2226, %v2386
    %v2388 = vpop.f32.mrb[0].mxu0
    %v2389 = vadd.f32 %v2228, %v2388
    %v2390 = vpop.f32.mrb[0].mxu0
    %v2391 = vadd.f32 %v2230, %v2390
    %2392 = vmatprep.mubr.bf16.mxu0 %v280
    %2393 = vmatmul.mubr.bf16.gmra.mrb[0].mxu0 %v279
    %v2394 = vpop.f32.mrb[0].mxu0
    %v2395 = vadd.f32 %v2234, %v2394
    %v2396 = vpop.f32.mrb[0].mxu0
    %v2397 = vadd.f32 %v2236, %v2396
    %v2398 = vpop.f32.mrb[0].mxu0
    %v2399 = vadd.f32 %v2238, %v2398
    %v2400 = vpop.f32.mrb[0].mxu0
    %v2401 = vadd.f32 %v2240, %v2400
    %2402 = vmatprep.mubr.bf16.mxu0 %v286
    %2403 = vmatmul.mubr.bf16.gmra.mrb[0].mxu0 %v285
    %v2404 = vpop.f32.mrb[0].mxu0
    %v2405 = vadd.f32 %v2244, %v2404
    %v2406 = vpop.f32.mrb[0].mxu0
    %v2407 = vadd.f32 %v2246, %v2406
    %v2408 = vpop.f32.mrb[0].mxu0
    %v2409 = vadd.f32 %v2248, %v2408
    %v2410 = vpop.f32.mrb[0].mxu0
    %v2411 = vadd.f32 %v2250, %v2410
    %2412 = vmatprep.mubr.bf16.mxu0 %v292
    %2413 = vmatmul.mubr.bf16.gmra.mrb[0].mxu0 %v291
    %v2414 = vpop.f32.mrb[0].mxu0
    %v2415 = vadd.f32 %v2254, %v2414
    %v2416 = vpop.f32.mrb[0].mxu0
    %v2417 = vadd.f32 %v2256, %v2416
    %v2418 = vpop.f32.mrb[0].mxu0
    %v2419 = vadd.f32 %v2258, %v2418
    %v2420 = vpop.f32.mrb[0].mxu0
    %v2421 = vadd.f32 %v2260, %v2420
    %2422 = vmatprep.mubr.bf16.mxu0 %v298
    %2423 = vmatmul.mubr.bf16.gmra.mrb[0].mxu0 %v297
    %v2424 = vpop.f32.mrb[0].mxu0
    %v2425 = vadd.f32 %v2264, %v2424
    %v2426 = vpop.f32.mrb[0].mxu0
    %v2427 = vadd.f32 %v2266, %v2426
    %v2428 = vpop.f32.mrb[0].mxu0
    %v2429 = vadd.f32 %v2268, %v2428
    %v2430 = vpop.f32.mrb[0].mxu0
    %v2431 = vadd.f32 %v2270, %v2430
    %2432 = vmatprep.mubr.bf16.mxu0 %v304
    %2433 = vmatmul.mubr.bf16.gmra.mrb[0].mxu0 %v303
    %v2434 = vpop.f32.mrb[0].mxu0
    %v2435 = vadd.f32 %v2274, %v2434
    %v2436 = vpop.f32.mrb[0].mxu0
    %v2437 = vadd.f32 %v2276, %v2436
    %v2438 = vpop.f32.mrb[0].mxu0
    %v2439 = vadd.f32 %v2278, %v2438
    %v2440 = vpop.f32.mrb[0].mxu0
    %v2441 = vadd.f32 %v2280, %v2440
    %2442 = vmatprep.mubr.bf16.mxu0 %v310
    %2443 = vmatmul.mubr.bf16.gmra.mrb[0].mxu0 %v309
    %v2444 = vpop.f32.mrb[0].mxu0
    %v2445 = vadd.f32 %v2284, %v2444
    %v2446 = vpop.f32.mrb[0].mxu0
    %v2447 = vadd.f32 %v2286, %v2446
    %v2448 = vpop.f32.mrb[0].mxu0
    %v2449 = vpop.f32.mrb[0].mxu0
    %2450 = vdwg.mxu0
    %v2451 = vmax.f32 %v1842, 0.0
    %v2452 = vmax.f32 %v1844, 0.0
    %v2453 = vmax.f32 %v2325, 0.0
    %v2454 = vmax.f32 %v2327, 0.0
    %v2455 = vmax.f32 %v1846, 0.0
    %v2456 = vmax.f32 %v1848, 0.0
    %v2457 = vmax.f32 %v2329, 0.0
    %v2458 = vmax.f32 %v2331, 0.0
    %v2459 = vmax.f32 %v1852, 0.0
    %v2460 = vmax.f32 %v1854, 0.0
    %v2461 = vmax.f32 %v2335, 0.0
    %v2462 = vmax.f32 %v2337, 0.0
    %v2463 = vmax.f32 %v1856, 0.0
    %v2464 = vmax.f32 %v1858, 0.0
    %v2465 = vmax.f32 %v2339, 0.0
    %v2466 = vmax.f32 %v2341, 0.0
    %v2467 = vmax.f32 %v1862, 0.0
    %v2468 = vmax.f32 %v1864, 0.0
    %v2469 = vmax.f32 %v2345, 0.0
    %v2470 = vmax.f32 %v2347, 0.0
    %v2471 = vmax.f32 %v1866, 0.0
    %v2472 = vmax.f32 %v1868, 0.0
    %v2473 = vmax.f32 %v2349, 0.0
    %v2474 = vmax.f32 %v2351, 0.0
    %v2475 = vmax.f32 %v1872, 0.0
    %v2476 = vmax.f32 %v1874, 0.0
    %v2477 = vmax.f32 %v2355, 0.0
    %v2478 = vmax.f32 %v2357, 0.0
    %v2479 = vmax.f32 %v1876, 0.0
    %v2480 = vmax.f32 %v1878, 0.0
    %v2481 = vmax.f32 %v2359, 0.0
    %v2482 = vmax.f32 %v2361, 0.0
    %v2483 = vmax.f32 %v1882, 0.0
    %v2484 = vmax.f32 %v1884, 0.0
    %v2485 = vmax.f32 %v2365, 0.0
    %v2486 = vmax.f32 %v2367, 0.0
    %v2487 = vmax.f32 %v1886, 0.0
    %v2488 = vmax.f32 %v1888, 0.0
    %v2489 = vmax.f32 %v2369, 0.0
    %v2490 = vmax.f32 %v2371, 0.0
    %v2491 = vmax.f32 %v1892, 0.0
    %v2492 = vmax.f32 %v1894, 0.0
    %v2493 = vmax.f32 %v2375, 0.0
    %v2494 = vmax.f32 %v2377, 0.0
    %v2495 = vmax.f32 %v1896, 0.0
    %v2496 = vmax.f32 %v1898, 0.0
    %v2497 = vmax.f32 %v2379, 0.0
    %v2498 = vmax.f32 %v2381, 0.0
    %v2499 = vmax.f32 %v1902, 0.0
    %v2500 = vmax.f32 %v1904, 0.0
    %v2501 = vmax.f32 %v2385, 0.0
    %v2502 = vmax.f32 %v2387, 0.0
    %v2503 = vmax.f32 %v1906, 0.0
    %v2504 = vmax.f32 %v1908, 0.0
    %v2505 = vmax.f32 %v2389, 0.0
    %v2506 = vmax.f32 %v2391, 0.0
    %v2507 = vmax.f32 %v1912, 0.0
    %v2508 = vmax.f32 %v1914, 0.0
    %v2509 = vmax.f32 %v2395, 0.0
    %v2510 = vmax.f32 %v2397, 0.0
    %v2511 = vmax.f32 %v1916, 0.0
    %v2512 = vmax.f32 %v1918, 0.0
    %v2513 = vmax.f32 %v2399, 0.0
    %v2514 = vmax.f32 %v2401, 0.0
    %v2515 = vmax.f32 %v1922, 0.0
    %v2516 = vmax.f32 %v1924, 0.0
    %v2517 = vmax.f32 %v2405, 0.0
    %v2518 = vmax.f32 %v2407, 0.0
    %v2519 = vmax.f32 %v1926, 0.0
    %v2520 = vmax.f32 %v1928, 0.0
    %v2521 = vmax.f32 %v2409, 0.0
    %v2522 = vmax.f32 %v2411, 0.0
    %v2523 = vmax.f32 %v1932, 0.0
    %v2524 = vmax.f32 %v1934, 0.0
    %v2525 = vmax.f32 %v2415, 0.0
    %v2526 = vmax.f32 %v2417, 0.0
    %v2527 = vmax.f32 %v1936, 0.0
    %v2528 = vmax.f32 %v1938, 0.0
    %v2529 = vmax.f32 %v2419, 0.0
    %v2530 = vmax.f32 %v2421, 0.0
    %v2531 = vmax.f32 %v1942, 0.0
    %v2532 = vmax.f32 %v1944, 0.0
    %v2533 = vmax.f32 %v2425, 0.0
    %v2534 = vmax.f32 %v2427, 0.0
    %v2535 = vmax.f32 %v1946, 0.0
    %v2536 = vmax.f32 %v1948, 0.0
    %v2537 = vmax.f32 %v2429, 0.0
    %v2538 = vmax.f32 %v2431, 0.0
    %v2539 = vmax.f32 %v1952, 0.0
    %v2540 = vmax.f32 %v1954, 0.0
    %v2541 = vmax.f32 %v2435, 0.0
    %v2542 = vmax.f32 %v2437, 0.0
    %v2543 = vmax.f32 %v1956, 0.0
    %v2544 = vmax.f32 %v1958, 0.0
    %v2545 = vmax.f32 %v2439, 0.0
    %v2546 = vmax.f32 %v2441, 0.0
    %v2547 = vmax.f32 %v1962, 0.0
    %v2548 = vmax.f32 %v1964, 0.0
    %v2549 = vmax.f32 %v2445, 0.0
    %v2550 = vmax.f32 %v2447, 0.0
    %v2551 = vpack.c.bf16 %v2455, %v2451
    %v2552 = vpack.c.bf16 %v2456, %v2452
    %v2553 = vpack.c.bf16 %v2457, %v2453
    %v2554 = vpack.c.bf16 %v2458, %v2454
    %v2555 = vpack.c.bf16 %v2463, %v2459
    %v2556 = vpack.c.bf16 %v2464, %v2460
    %v2557 = vpack.c.bf16 %v2465, %v2461
    %v2558 = vpack.c.bf16 %v2466, %v2462
    %v2559 = vpack.c.bf16 %v2471, %v2467
    %v2560 = vpack.c.bf16 %v2472, %v2468
    %v2561 = vpack.c.bf16 %v2473, %v2469
    %v2562 = vpack.c.bf16 %v2474, %v2470
    %v2563 = vpack.c.bf16 %v2479, %v2475
    %v2564 = vpack.c.bf16 %v2480, %v2476
    %v2565 = vpack.c.bf16 %v2481, %v2477
    %v2566 = vpack.c.bf16 %v2482, %v2478
    %v2567 = vpack.c.bf16 %v2487, %v2483
    %v2568 = vpack.c.bf16 %v2488, %v2484
    %v2569 = vpack.c.bf16 %v2489, %v2485
    %v2570 = vpack.c.bf16 %v2490, %v2486
    %v2571 = vpack.c.bf16 %v2495, %v2491
    %v2572 = vpack.c.bf16 %v2496, %v2492
    %v2573 = vpack.c.bf16 %v2497, %v2493
    %v2574 = vpack.c.bf16 %v2498, %v2494
    %v2575 = vpack.c.bf16 %v2503, %v2499
    %v2576 = vpack.c.bf16 %v2504, %v2500
    %v2577 = vpack.c.bf16 %v2505, %v2501
    %v2578 = vpack.c.bf16 %v2506, %v2502
    %v2579 = vpack.c.bf16 %v2511, %v2507
    %v2580 = vpack.c.bf16 %v2512, %v2508
    %v2581 = vpack.c.bf16 %v2513, %v2509
    %v2582 = vpack.c.bf16 %v2514, %v2510
    %v2583 = vpack.c.bf16 %v2519, %v2515
    %v2584 = vpack.c.bf16 %v2520, %v2516
    %v2585 = vpack.c.bf16 %v2521, %v2517
    %v2586 = vpack.c.bf16 %v2522, %v2518
    %v2587 = vpack.c.bf16 %v2527, %v2523
    %v2588 = vpack.c.bf16 %v2528, %v2524
    %v2589 = vpack.c.bf16 %v2529, %v2525
    %v2590 = vpack.c.bf16 %v2530, %v2526
    %v2591 = vpack.c.bf16 %v2535, %v2531
    %v2592 = vpack.c.bf16 %v2536, %v2532
    %v2593 = vpack.c.bf16 %v2537, %v2533
    %v2594 = vpack.c.bf16 %v2538, %v2534
    %v2595 = vpack.c.bf16 %v2543, %v2539
    %v2596 = vpack.c.bf16 %v2544, %v2540
    %v2597 = vpack.c.bf16 %v2545, %v2541
    %v2598 = vpack.c.bf16 %v2546, %v2542
    %v2599 = vpack.c.bf16 %v2547, %v2547
    %v2600 = vpack.c.bf16 %v2548, %v2548
    %v2601 = vpack.c.bf16 %v2549, %v2549
    %v2602 = vpack.c.bf16 %v2550, %v2550
    %v2603 = vld [vmem:[#allocation7] sm:$0xff]
    %v2604 = vld [vmem:[#allocation7 + $0x8] sm:$0xff]
    %v2605 = vld [vmem:[#allocation7 + $0x10] sm:$0xff]
    %v2606 = vld [vmem:[#allocation7 + $0x18] sm:$0xff]
    %v2607 = vld [vmem:[#allocation7 + $0x20] sm:$0xff]
    %v2608 = vld [vmem:[#allocation7 + $0x28] sm:$0xff]
    %v2609 = vld [vmem:[#allocation7 + $0x30] sm:$0xff]
    %v2610 = vld [vmem:[#allocation7 + $0x38] sm:$0xff]
    %v2611 = vld [vmem:[#allocation7 + $0x40] sm:$0xff]
    %v2612 = vld [vmem:[#allocation7 + $0x48] sm:$0xff]
    %v2613 = vld [vmem:[#allocation7 + $0x50] sm:$0xff]
    %v2614 = vld [vmem:[#allocation7 + $0x58] sm:$0xff]
    %v2615 = vld [vmem:[#allocation7 + $0x60] sm:$0xff]
    %v2616 = vld [vmem:[#allocation7 + $0x68] sm:$0xff]
    %v2617 = vld [vmem:[#allocation7 + $0x70] sm:$0xff]
    %v2618 = vld [vmem:[#allocation7 + $0x78] sm:$0xff]
    %v2619 = vld [vmem:[#allocation7 + $0x80] sm:$0xff]
    %v2620 = vld [vmem:[#allocation7 + $0x88] sm:$0xff]
    %v2621 = vld [vmem:[#allocation7 + $0x90] sm:$0xff]
    %v2622 = vld [vmem:[#allocation7 + $0x98] sm:$0xff]
    %v2623 = vld [vmem:[#allocation7 + $0xa0] sm:$0xff]
    %v2624 = vld [vmem:[#allocation7 + $0xa8] sm:$0xff]
    %v2625 = vld [vmem:[#allocation7 + $0xb0] sm:$0xff]
    %v2626 = vld [vmem:[#allocation7 + $0xb8] sm:$0xff]
    %v2627 = vld [vmem:[#allocation7 + $0xc0] sm:$0xff]
    %v2628 = vld [vmem:[#allocation7 + $0xc8] sm:$0xff]
    %v2629 = vld [vmem:[#allocation7 + $0xd0] sm:$0xff]
    %v2630 = vld [vmem:[#allocation7 + $0xd8] sm:$0xff]
    %v2631 = vld [vmem:[#allocation7 + $0xe0] sm:$0xff]
    %v2632 = vld [vmem:[#allocation7 + $0xe8] sm:$0xff]
    %v2633 = vld [vmem:[#allocation7 + $0xf0] sm:$0xff]
    %v2634 = vld [vmem:[#allocation7 + $0xf8] sm:$0xff]
    %v2635 = vld [vmem:[#allocation7 + $0x100] sm:$0xff]
    %v2636 = vld [vmem:[#allocation7 + $0x108] sm:$0xff]
    %v2637 = vld [vmem:[#allocation7 + $0x110] sm:$0xff]
    %v2638 = vld [vmem:[#allocation7 + $0x118] sm:$0xff]
    %v2639 = vld [vmem:[#allocation7 + $0x120] sm:$0xff]
    %v2640 = vld [vmem:[#allocation7 + $0x128] sm:$0xff]
    %v2641 = vld [vmem:[#allocation7 + $0x130] sm:$0xff]
    %v2642 = vld [vmem:[#allocation7 + $0x138] sm:$0xff]
    %v2643 = vld [vmem:[#allocation7 + $0x140] sm:$0xff]
    %v2644 = vld [vmem:[#allocation7 + $0x148] sm:$0xff]
    %v2645 = vld [vmem:[#allocation7 + $0x150] sm:$0xff]
    %v2646 = vld [vmem:[#allocation7 + $0x158] sm:$0xff]
    %v2647 = vld [vmem:[#allocation7 + $0x160] sm:$0xff]
    %v2648 = vld [vmem:[#allocation7 + $0x168] sm:$0xff]
    %v2649 = vld [vmem:[#allocation7 + $0x170] sm:$0xff]
    %v2650 = vld [vmem:[#allocation7 + $0x178] sm:$0xff]
    %v2651 = vld [vmem:[#allocation7 + $0x180] sm:$0xff]
    %v2652 = vld [vmem:[#allocation7 + $0x188] sm:$0xff]
    %v2653 = vld [vmem:[#allocation7 + $0x190] sm:$0xff]
    %v2654 = vld [vmem:[#allocation7 + $0x198] sm:$0xff]
    %v2655 = vld [vmem:[#allocation7 + $0x1a0] sm:$0xff]
    %v2656 = vld [vmem:[#allocation7 + $0x1a8] sm:$0xff]
    %v2657 = vld [vmem:[#allocation7 + $0x1b0] sm:$0xff]
    %v2658 = vld [vmem:[#allocation7 + $0x1b8] sm:$0xff]
    %v2659 = vld [vmem:[#allocation7 + $0x1c0] sm:$0xff]
    %v2660 = vld [vmem:[#allocation7 + $0x1c8] sm:$0xff]
    %v2661 = vld [vmem:[#allocation7 + $0x1d0] sm:$0xff]
    %v2662 = vld [vmem:[#allocation7 + $0x1d8] sm:$0xff]
    %v2663 = vld [vmem:[#allocation7 + $0x1e0] sm:$0xff]
    %v2664 = vld [vmem:[#allocation7 + $0x1e8] sm:$0xff]
    %v2665 = vld [vmem:[#allocation7 + $0x1f0] sm:$0xff]
    %v2666 = vld [vmem:[#allocation7 + $0x1f8] sm:$0xff]
    %v2667 = vld [vmem:[%s4] sm:$0x3]
    %v2669 = vlaneseq
    %v2670 = vshrl.u32 %v2669, 7
    %v2671 = vsub.s32 0, %v2670
    %v2672 = vrot.slane %v2667, %v2671
    %v2673 = vlaneseq
    %v2674 = vshrl.u32 %v2673, 7
    %v2675 = vsub.s32 1, %v2674
    %v2676 = vrot.slane %v2667, %v2675
    %v2743 = vunpack.c.l.b16 %v2603
    %v2744 = vunpack.c.h.b16 %v2603
    %v2745 = vunpack.c.l.b16 %v2604
    %v2746 = vunpack.c.h.b16 %v2604
    %v2747 = vunpack.c.l.b16 %v2605
    %v2748 = vunpack.c.h.b16 %v2605
    %v2749 = vunpack.c.l.b16 %v2606
    %v2750 = vunpack.c.h.b16 %v2606
    %v2751 = vunpack.c.l.b16 %v2607
    %v2752 = vunpack.c.h.b16 %v2607
    %v2753 = vunpack.c.l.b16 %v2608
    %v2754 = vunpack.c.h.b16 %v2608
    %v2755 = vunpack.c.l.b16 %v2609
    %v2756 = vunpack.c.h.b16 %v2609
    %v2757 = vunpack.c.l.b16 %v2610
    %v2758 = vunpack.c.h.b16 %v2610
    %v2759 = vunpack.c.l.b16 %v2611
    %v2760 = vunpack.c.h.b16 %v2611
    %v2761 = vunpack.c.l.b16 %v2612
    %v2762 = vunpack.c.h.b16 %v2612
    %v2763 = vunpack.c.l.b16 %v2613
    %v2764 = vunpack.c.h.b16 %v2613
    %v2765 = vunpack.c.l.b16 %v2614
    %v2766 = vunpack.c.h.b16 %v2614
    %v2767 = vunpack.c.l.b16 %v2615
    %v2768 = vunpack.c.h.b16 %v2615
    %v2769 = vunpack.c.l.b16 %v2616
    %v2770 = vunpack.c.h.b16 %v2616
    %v2771 = vunpack.c.l.b16 %v2617
    %v2772 = vunpack.c.h.b16 %v2617
    %v2773 = vunpack.c.l.b16 %v2618
    %v2774 = vunpack.c.h.b16 %v2618
    %v2775 = vunpack.c.l.b16 %v2619
    %v2776 = vunpack.c.h.b16 %v2619
    %v2777 = vunpack.c.l.b16 %v2620
    %v2778 = vunpack.c.h.b16 %v2620
    %v2779 = vunpack.c.l.b16 %v2621
    %v2780 = vunpack.c.h.b16 %v2621
    %v2781 = vunpack.c.l.b16 %v2622
    %v2782 = vunpack.c.h.b16 %v2622
    %v2783 = vunpack.c.l.b16 %v2623
    %v2784 = vunpack.c.h.b16 %v2623
    %v2785 = vunpack.c.l.b16 %v2624
    %v2786 = vunpack.c.h.b16 %v2624
    %v2787 = vunpack.c.l.b16 %v2625
    %v2788 = vunpack.c.h.b16 %v2625
    %v2789 = vunpack.c.l.b16 %v2626
    %v2790 = vunpack.c.h.b16 %v2626
    %v2791 = vunpack.c.l.b16 %v2627
    %v2792 = vunpack.c.h.b16 %v2627
    %v2793 = vunpack.c.l.b16 %v2628
    %v2794 = vunpack.c.h.b16 %v2628
    %v2795 = vunpack.c.l.b16 %v2629
    %v2796 = vunpack.c.h.b16 %v2629
    %v2797 = vunpack.c.l.b16 %v2630
    %v2798 = vunpack.c.h.b16 %v2630
    %v2799 = vunpack.c.l.b16 %v2631
    %v2800 = vunpack.c.h.b16 %v2631
    %v2801 = vunpack.c.l.b16 %v2632
    %v2802 = vunpack.c.h.b16 %v2632
    %v2803 = vunpack.c.l.b16 %v2633
    %v2804 = vunpack.c.h.b16 %v2633
    %v2805 = vunpack.c.l.b16 %v2634
    %v2806 = vunpack.c.h.b16 %v2634
    %v2807 = vunpack.c.l.b16 %v2635
    %v2808 = vunpack.c.h.b16 %v2635
    %v2809 = vunpack.c.l.b16 %v2636
    %v2810 = vunpack.c.h.b16 %v2636
    %v2811 = vunpack.c.l.b16 %v2637
    %v2812 = vunpack.c.h.b16 %v2637
    %v2813 = vunpack.c.l.b16 %v2638
    %v2814 = vunpack.c.h.b16 %v2638
    %v2815 = vunpack.c.l.b16 %v2639
    %v2816 = vunpack.c.h.b16 %v2639
    %v2817 = vunpack.c.l.b16 %v2640
    %v2818 = vunpack.c.h.b16 %v2640
    %v2819 = vunpack.c.l.b16 %v2641
    %v2820 = vunpack.c.h.b16 %v2641
    %v2821 = vunpack.c.l.b16 %v2642
    %v2822 = vunpack.c.h.b16 %v2642
    %v2823 = vunpack.c.l.b16 %v2643
    %v2824 = vunpack.c.h.b16 %v2643
    %v2825 = vunpack.c.l.b16 %v2644
    %v2826 = vunpack.c.h.b16 %v2644
    %v2827 = vunpack.c.l.b16 %v2645
    %v2828 = vunpack.c.h.b16 %v2645
    %v2829 = vunpack.c.l.b16 %v2646
    %v2830 = vunpack.c.h.b16 %v2646
    %v2831 = vunpack.c.l.b16 %v2647
    %v2832 = vunpack.c.h.b16 %v2647
    %v2833 = vunpack.c.l.b16 %v2648
    %v2834 = vunpack.c.h.b16 %v2648
    %v2835 = vunpack.c.l.b16 %v2649
    %v2836 = vunpack.c.h.b16 %v2649
    %v2837 = vunpack.c.l.b16 %v2650
    %v2838 = vunpack.c.h.b16 %v2650
    %v2839 = vunpack.c.l.b16 %v2651
    %v2840 = vunpack.c.h.b16 %v2651
    %v2841 = vunpack.c.l.b16 %v2652
    %v2842 = vunpack.c.h.b16 %v2652
    %v2843 = vunpack.c.l.b16 %v2653
    %v2844 = vunpack.c.h.b16 %v2653
    %v2845 = vunpack.c.l.b16 %v2654
    %v2846 = vunpack.c.h.b16 %v2654
    %v2847 = vunpack.c.l.b16 %v2655
    %v2848 = vunpack.c.h.b16 %v2655
    %v2849 = vunpack.c.l.b16 %v2656
    %v2850 = vunpack.c.h.b16 %v2656
    %v2851 = vunpack.c.l.b16 %v2657
    %v2852 = vunpack.c.h.b16 %v2657
    %v2853 = vunpack.c.l.b16 %v2658
    %v2854 = vunpack.c.h.b16 %v2658
    %v2855 = vunpack.c.l.b16 %v2659
    %v2856 = vunpack.c.h.b16 %v2659
    %v2857 = vunpack.c.l.b16 %v2660
    %v2858 = vunpack.c.h.b16 %v2660
    %v2859 = vunpack.c.l.b16 %v2661
    %v2860 = vunpack.c.h.b16 %v2661
    %v2861 = vunpack.c.l.b16 %v2662
    %v2862 = vunpack.c.h.b16 %v2662
    %v2863 = vunpack.c.l.b16 %v2663
    %v2864 = vunpack.c.h.b16 %v2663
    %v2865 = vunpack.c.l.b16 %v2664
    %v2866 = vunpack.c.h.b16 %v2664
    %v2867 = vunpack.c.l.b16 %v2665
    %v2868 = vunpack.c.h.b16 %v2665
    %v2869 = vunpack.c.l.b16 %v2666
    %v2870 = vunpack.c.h.b16 %v2666
    %v2871 = vpack.c.b16 %v2745, %v2743
    %v2872 = vpack.c.b16 %v2746, %v2744
    %v2873 = vpack.c.b16 %v2749, %v2747
    %v2874 = vpack.c.b16 %v2750, %v2748
    %v2875 = vpack.c.b16 %v2753, %v2751
    %v2876 = vpack.c.b16 %v2754, %v2752
    %v2877 = vpack.c.b16 %v2757, %v2755
    %v2878 = vpack.c.b16 %v2758, %v2756
    %v2879 = vpack.c.b16 %v2761, %v2759
    %v2880 = vpack.c.b16 %v2762, %v2760
    %v2881 = vpack.c.b16 %v2765, %v2763
    %v2882 = vpack.c.b16 %v2766, %v2764
    %v2883 = vpack.c.b16 %v2769, %v2767
    %v2884 = vpack.c.b16 %v2770, %v2768
    %v2885 = vpack.c.b16 %v2773, %v2771
    %v2886 = vpack.c.b16 %v2774, %v2772
    %v2887 = vpack.c.b16 %v2777, %v2775
    %v2888 = vpack.c.b16 %v2778, %v2776
    %v2889 = vpack.c.b16 %v2781, %v2779
    %v2890 = vpack.c.b16 %v2782, %v2780
    %v2891 = vpack.c.b16 %v2785, %v2783
    %v2892 = vpack.c.b16 %v2786, %v2784
    %v2893 = vpack.c.b16 %v2789, %v2787
    %v2894 = vpack.c.b16 %v2790, %v2788
    %v2895 = vpack.c.b16 %v2793, %v2791
    %v2896 = vpack.c.b16 %v2794, %v2792
    %v2897 = vpack.c.b16 %v2797, %v2795
    %v2898 = vpack.c.b16 %v2798, %v2796
    %v2899 = vpack.c.b16 %v2801, %v2799
    %v2900 = vpack.c.b16 %v2802, %v2800
    %v2901 = vpack.c.b16 %v2805, %v2803
    %v2902 = vpack.c.b16 %v2806, %v2804
    %v2903 = vpack.c.b16 %v2809, %v2807
    %v2904 = vpack.c.b16 %v2810, %v2808
    %v2905 = vpack.c.b16 %v2813, %v2811
    %v2906 = vpack.c.b16 %v2814, %v2812
    %v2907 = vpack.c.b16 %v2817, %v2815
    %v2908 = vpack.c.b16 %v2818, %v2816
    %v2909 = vpack.c.b16 %v2821, %v2819
    %v2910 = vpack.c.b16 %v2822, %v2820
    %v2911 = vpack.c.b16 %v2825, %v2823
    %v2912 = vpack.c.b16 %v2826, %v2824
    %v2913 = vpack.c.b16 %v2829, %v2827
    %v2914 = vpack.c.b16 %v2830, %v2828
    %v2915 = vpack.c.b16 %v2833, %v2831
    %v2916 = vpack.c.b16 %v2834, %v2832
    %v2917 = vpack.c.b16 %v2837, %v2835
    %v2918 = vpack.c.b16 %v2838, %v2836
    %v2919 = vpack.c.b16 %v2841, %v2839
    %v2920 = vpack.c.b16 %v2842, %v2840
    %v2921 = vpack.c.b16 %v2845, %v2843
    %v2922 = vpack.c.b16 %v2846, %v2844
    %v2923 = vpack.c.b16 %v2849, %v2847
    %v2924 = vpack.c.b16 %v2850, %v2848
    %v2925 = vpack.c.b16 %v2853, %v2851
    %v2926 = vpack.c.b16 %v2854, %v2852
    %v2927 = vpack.c.b16 %v2857, %v2855
    %v2928 = vpack.c.b16 %v2858, %v2856
    %v2929 = vpack.c.b16 %v2861, %v2859
    %v2930 = vpack.c.b16 %v2862, %v2860
    %v2931 = vpack.c.b16 %v2865, %v2863
    %v2932 = vpack.c.b16 %v2866, %v2864
    %v2933 = vpack.c.b16 %v2869, %v2867
    %v2934 = vpack.c.b16 %v2870, %v2868
    %2999 = vmatprep.subr.bf16.mxu0 %v2872
    %3000 = vmatpush1.bf16.msra.mxu0 %v2871
    %3001 = vmatprep.subr.bf16.mxu0 %v2874
    %3002 = vmatpush1.bf16.msra.mxu0 %v2873
    %3003 = vmatprep.subr.bf16.mxu0 %v2876
    %3004 = vmatpush1.bf16.msra.mxu0 %v2875
    %3005 = vmatprep.subr.bf16.mxu0 %v2878
    %3006 = vmatpush1.bf16.msra.mxu0 %v2877
    %3007 = vmatprep.subr.bf16.mxu0 %v2880
    %3008 = vmatpush1.bf16.msra.mxu0 %v2879
    %3009 = vmatprep.subr.bf16.mxu0 %v2882
    %3010 = vmatpush1.bf16.msra.mxu0 %v2881
    %3011 = vmatprep.subr.bf16.mxu0 %v2884
    %3012 = vmatpush1.bf16.msra.mxu0 %v2883
    %3013 = vmatprep.subr.bf16.mxu0 %v2886
    %3014 = vmatpush1.bf16.msra.mxu0 %v2885
    %3015 = vmatprep.subr.bf16.mxu0 %v2888
    %3016 = vmatpush1.bf16.msra.mxu0 %v2887
    %3017 = vmatprep.subr.bf16.mxu0 %v2890
    %3018 = vmatpush1.bf16.msra.mxu0 %v2889
    %3019 = vmatprep.subr.bf16.mxu0 %v2892
    %3020 = vmatpush1.bf16.msra.mxu0 %v2891
    %3021 = vmatprep.subr.bf16.mxu0 %v2894
    %3022 = vmatpush1.bf16.msra.mxu0 %v2893
    %3023 = vmatprep.subr.bf16.mxu0 %v2896
    %3024 = vmatpush1.bf16.msra.mxu0 %v2895
    %3025 = vmatprep.subr.bf16.mxu0 %v2898
    %3026 = vmatpush1.bf16.msra.mxu0 %v2897
    %3027 = vmatprep.subr.bf16.mxu0 %v2900
    %3028 = vmatpush1.bf16.msra.mxu0 %v2899
    %3029 = vmatprep.subr.bf16.mxu0 %v2902
    %3030 = vmatpush1.bf16.msra.mxu0 %v2901
    %3031 = vmatprep.mubr.bf16.mxu0 %v2552
    %3032 = vmatmul.mubr.bf16.gmra.mrb[0].mxu0 %v2551
    %v3033 = vpop.f32.mrb[0].mxu0
    %v3034 = vadd.f32 %v2672, %v3033
    %v3035 = vpop.f32.mrb[0].mxu0
    %v3036 = vadd.f32 %v2676, %v3035
    %v3037 = vpop.f32.mrb[0].mxu0
    %v3038 = vadd.f32 %v2672, %v3037
    %v3039 = vpop.f32.mrb[0].mxu0
    %v3040 = vadd.f32 %v2676, %v3039
    %3041 = vmatprep.mubr.bf16.mxu0 %v2556
    %3042 = vmatmul.mubr.bf16.gmra.mrb[0].mxu0 %v2555
    %v3043 = vpop.f32.mrb[0].mxu0
    %v3044 = vadd.f32 %v2672, %v3043
    %v3045 = vpop.f32.mrb[0].mxu0
    %v3046 = vadd.f32 %v2676, %v3045
    %v3047 = vpop.f32.mrb[0].mxu0
    %v3048 = vadd.f32 %v2672, %v3047
    %v3049 = vpop.f32.mrb[0].mxu0
    %v3050 = vadd.f32 %v2676, %v3049
    %3051 = vmatprep.mubr.bf16.mxu0 %v2560
    %3052 = vmatmul.mubr.bf16.gmra.mrb[0].mxu0 %v2559
    %v3053 = vpop.f32.mrb[0].mxu0
    %v3054 = vadd.f32 %v2672, %v3053
    %v3055 = vpop.f32.mrb[0].mxu0
    %v3056 = vadd.f32 %v2676, %v3055
    %v3057 = vpop.f32.mrb[0].mxu0
    %v3058 = vadd.f32 %v2672, %v3057
    %v3059 = vpop.f32.mrb[0].mxu0
    %v3060 = vadd.f32 %v2676, %v3059
    %3061 = vmatprep.mubr.bf16.mxu0 %v2564
    %3062 = vmatmul.mubr.bf16.gmra.mrb[0].mxu0 %v2563
    %v3063 = vpop.f32.mrb[0].mxu0
    %v3064 = vadd.f32 %v2672, %v3063
    %v3065 = vpop.f32.mrb[0].mxu0
    %v3066 = vadd.f32 %v2676, %v3065
    %v3067 = vpop.f32.mrb[0].mxu0
    %v3068 = vadd.f32 %v2672, %v3067
    %v3069 = vpop.f32.mrb[0].mxu0
    %v3070 = vadd.f32 %v2676, %v3069
    %3071 = vmatprep.mubr.bf16.mxu0 %v2568
    %3072 = vmatmul.mubr.bf16.gmra.mrb[0].mxu0 %v2567
    %v3073 = vpop.f32.mrb[0].mxu0
    %v3074 = vadd.f32 %v2672, %v3073
    %v3075 = vpop.f32.mrb[0].mxu0
    %v3076 = vadd.f32 %v2676, %v3075
    %v3077 = vpop.f32.mrb[0].mxu0
    %v3078 = vadd.f32 %v2672, %v3077
    %v3079 = vpop.f32.mrb[0].mxu0
    %v3080 = vadd.f32 %v2676, %v3079
    %3081 = vmatprep.mubr.bf16.mxu0 %v2572
    %3082 = vmatmul.mubr.bf16.gmra.mrb[0].mxu0 %v2571
    %v3083 = vpop.f32.mrb[0].mxu0
    %v3084 = vadd.f32 %v2672, %v3083
    %v3085 = vpop.f32.mrb[0].mxu0
    %v3086 = vadd.f32 %v2676, %v3085
    %v3087 = vpop.f32.mrb[0].mxu0
    %v3088 = vadd.f32 %v2672, %v3087
    %v3089 = vpop.f32.mrb[0].mxu0
    %v3090 = vadd.f32 %v2676, %v3089
    %3091 = vmatprep.mubr.bf16.mxu0 %v2576
    %3092 = vmatmul.mubr.bf16.gmra.mrb[0].mxu0 %v2575
    %v3093 = vpop.f32.mrb[0].mxu0
    %v3094 = vadd.f32 %v2672, %v3093
    %v3095 = vpop.f32.mrb[0].mxu0
    %v3096 = vadd.f32 %v2676, %v3095
    %v3097 = vpop.f32.mrb[0].mxu0
    %v3098 = vadd.f32 %v2672, %v3097
    %v3099 = vpop.f32.mrb[0].mxu0
    %v3100 = vadd.f32 %v2676, %v3099
    %3101 = vmatprep.mubr.bf16.mxu0 %v2580
    %3102 = vmatmul.mubr.bf16.gmra.mrb[0].mxu0 %v2579
    %v3103 = vpop.f32.mrb[0].mxu0
    %v3104 = vadd.f32 %v2672, %v3103
    %v3105 = vpop.f32.mrb[0].mxu0
    %v3106 = vadd.f32 %v2676, %v3105
    %v3107 = vpop.f32.mrb[0].mxu0
    %v3108 = vadd.f32 %v2672, %v3107
    %v3109 = vpop.f32.mrb[0].mxu0
    %v3110 = vadd.f32 %v2676, %v3109
    %3111 = vmatprep.mubr.bf16.mxu0 %v2584
    %3112 = vmatmul.mubr.bf16.gmra.mrb[0].mxu0 %v2583
    %v3113 = vpop.f32.mrb[0].mxu0
    %v3114 = vadd.f32 %v2672, %v3113
    %v3115 = vpop.f32.mrb[0].mxu0
    %v3116 = vadd.f32 %v2676, %v3115
    %v3117 = vpop.f32.mrb[0].mxu0
    %v3118 = vadd.f32 %v2672, %v3117
    %v3119 = vpop.f32.mrb[0].mxu0
    %v3120 = vadd.f32 %v2676, %v3119
    %3121 = vmatprep.mubr.bf16.mxu0 %v2588
    %3122 = vmatmul.mubr.bf16.gmra.mrb[0].mxu0 %v2587
    %v3123 = vpop.f32.mrb[0].mxu0
    %v3124 = vadd.f32 %v2672, %v3123
    %v3125 = vpop.f32.mrb[0].mxu0
    %v3126 = vadd.f32 %v2676, %v3125
    %v3127 = vpop.f32.mrb[0].mxu0
    %v3128 = vadd.f32 %v2672, %v3127
    %v3129 = vpop.f32.mrb[0].mxu0
    %v3130 = vadd.f32 %v2676, %v3129
    %3131 = vmatprep.mubr.bf16.mxu0 %v2592
    %3132 = vmatmul.mubr.bf16.gmra.mrb[0].mxu0 %v2591
    %v3133 = vpop.f32.mrb[0].mxu0
    %v3134 = vadd.f32 %v2672, %v3133
    %v3135 = vpop.f32.mrb[0].mxu0
    %v3136 = vadd.f32 %v2676, %v3135
    %v3137 = vpop.f32.mrb[0].mxu0
    %v3138 = vadd.f32 %v2672, %v3137
    %v3139 = vpop.f32.mrb[0].mxu0
    %v3140 = vadd.f32 %v2676, %v3139
    %3141 = vmatprep.mubr.bf16.mxu0 %v2596
    %3142 = vmatmul.mubr.bf16.gmra.mrb[0].mxu0 %v2595
    %v3143 = vpop.f32.mrb[0].mxu0
    %v3144 = vadd.f32 %v2672, %v3143
    %v3145 = vpop.f32.mrb[0].mxu0
    %v3146 = vadd.f32 %v2676, %v3145
    %v3147 = vpop.f32.mrb[0].mxu0
    %v3148 = vadd.f32 %v2672, %v3147
    %v3149 = vpop.f32.mrb[0].mxu0
    %v3150 = vadd.f32 %v2676, %v3149
    %3151 = vmatprep.mubr.bf16.mxu0 %v2600
    %3152 = vmatmul.mubr.bf16.gmra.mrb[0].mxu0 %v2599
    %v3153 = vpop.f32.mrb[0].mxu0
    %v3154 = vadd.f32 %v2672, %v3153
    %v3155 = vpop.f32.mrb[0].mxu0
    %v3156 = vadd.f32 %v2676, %v3155
    %v3157 = vpop.f32.mrb[0].mxu0
    %v3158 = vpop.f32.mrb[0].mxu0
    %3159 = vdwg.mxu0
    %3160 = vmatprep.subr.bf16.mxu0 %v2904
    %3161 = vmatpush1.bf16.msra.mxu0 %v2903
    %3162 = vmatprep.subr.bf16.mxu0 %v2906
    %3163 = vmatpush1.bf16.msra.mxu0 %v2905
    %3164 = vmatprep.subr.bf16.mxu0 %v2908
    %3165 = vmatpush1.bf16.msra.mxu0 %v2907
    %3166 = vmatprep.subr.bf16.mxu0 %v2910
    %3167 = vmatpush1.bf16.msra.mxu0 %v2909
    %3168 = vmatprep.subr.bf16.mxu0 %v2912
    %3169 = vmatpush1.bf16.msra.mxu0 %v2911
    %3170 = vmatprep.subr.bf16.mxu0 %v2914
    %3171 = vmatpush1.bf16.msra.mxu0 %v2913
    %3172 = vmatprep.subr.bf16.mxu0 %v2916
    %3173 = vmatpush1.bf16.msra.mxu0 %v2915
    %3174 = vmatprep.subr.bf16.mxu0 %v2918
    %3175 = vmatpush1.bf16.msra.mxu0 %v2917
    %3176 = vmatprep.subr.bf16.mxu0 %v2920
    %3177 = vmatpush1.bf16.msra.mxu0 %v2919
    %3178 = vmatprep.subr.bf16.mxu0 %v2922
    %3179 = vmatpush1.bf16.msra.mxu0 %v2921
    %3180 = vmatprep.subr.bf16.mxu0 %v2924
    %3181 = vmatpush1.bf16.msra.mxu0 %v2923
    %3182 = vmatprep.subr.bf16.mxu0 %v2926
    %3183 = vmatpush1.bf16.msra.mxu0 %v2925
    %3184 = vmatprep.subr.bf16.mxu0 %v2928
    %3185 = vmatpush1.bf16.msra.mxu0 %v2927
    %3186 = vmatprep.subr.bf16.mxu0 %v2930
    %3187 = vmatpush1.bf16.msra.mxu0 %v2929
    %3188 = vmatprep.subr.bf16.mxu0 %v2932
    %3189 = vmatpush1.bf16.msra.mxu0 %v2931
    %3190 = vmatprep.subr.bf16.mxu0 %v2934
    %3191 = vmatpush1.bf16.msra.mxu0 %v2933
    %3192 = vmatprep.mubr.bf16.mxu0 %v2554
    %3193 = vmatmul.mubr.bf16.gmra.mrb[0].mxu0 %v2553
    %v3194 = vpop.f32.mrb[0].mxu0
    %v3195 = vadd.f32 %v3034, %v3194
    %v3196 = vpop.f32.mrb[0].mxu0
    %v3197 = vadd.f32 %v3036, %v3196
    %v3198 = vpop.f32.mrb[0].mxu0
    %v3199 = vadd.f32 %v3038, %v3198
    %v3200 = vpop.f32.mrb[0].mxu0
    %v3201 = vadd.f32 %v3040, %v3200
    %3202 = vmatprep.mubr.bf16.mxu0 %v2558
    %3203 = vmatmul.mubr.bf16.gmra.mrb[0].mxu0 %v2557
    %v3204 = vpop.f32.mrb[0].mxu0
    %v3205 = vadd.f32 %v3044, %v3204
    %v3206 = vpop.f32.mrb[0].mxu0
    %v3207 = vadd.f32 %v3046, %v3206
    %v3208 = vpop.f32.mrb[0].mxu0
    %v3209 = vadd.f32 %v3048, %v3208
    %v3210 = vpop.f32.mrb[0].mxu0
    %v3211 = vadd.f32 %v3050, %v3210
    %3212 = vmatprep.mubr.bf16.mxu0 %v2562
    %3213 = vmatmul.mubr.bf16.gmra.mrb[0].mxu0 %v2561
    %v3214 = vpop.f32.mrb[0].mxu0
    %v3215 = vadd.f32 %v3054, %v3214
    %v3216 = vpop.f32.mrb[0].mxu0
    %v3217 = vadd.f32 %v3056, %v3216
    %v3218 = vpop.f32.mrb[0].mxu0
    %v3219 = vadd.f32 %v3058, %v3218
    %v3220 = vpop.f32.mrb[0].mxu0
    %v3221 = vadd.f32 %v3060, %v3220
    %3222 = vmatprep.mubr.bf16.mxu0 %v2566
    %3223 = vmatmul.mubr.bf16.gmra.mrb[0].mxu0 %v2565
    %v3224 = vpop.f32.mrb[0].mxu0
    %v3225 = vadd.f32 %v3064, %v3224
    %v3226 = vpop.f32.mrb[0].mxu0
    %v3227 = vadd.f32 %v3066, %v3226
    %v3228 = vpop.f32.mrb[0].mxu0
    %v3229 = vadd.f32 %v3068, %v3228
    %v3230 = vpop.f32.mrb[0].mxu0
    %v3231 = vadd.f32 %v3070, %v3230
    %3232 = vmatprep.mubr.bf16.mxu0 %v2570
    %3233 = vmatmul.mubr.bf16.gmra.mrb[0].mxu0 %v2569
    %v3234 = vpop.f32.mrb[0].mxu0
    %v3235 = vadd.f32 %v3074, %v3234
    %v3236 = vpop.f32.mrb[0].mxu0
    %v3237 = vadd.f32 %v3076, %v3236
    %v3238 = vpop.f32.mrb[0].mxu0
    %v3239 = vadd.f32 %v3078, %v3238
    %v3240 = vpop.f32.mrb[0].mxu0
    %v3241 = vadd.f32 %v3080, %v3240
    %3242 = vmatprep.mubr.bf16.mxu0 %v2574
    %3243 = vmatmul.mubr.bf16.gmra.mrb[0].mxu0 %v2573
    %v3244 = vpop.f32.mrb[0].mxu0
    %v3245 = vadd.f32 %v3084, %v3244
    %v3246 = vpop.f32.mrb[0].mxu0
    %v3247 = vadd.f32 %v3086, %v3246
    %v3248 = vpop.f32.mrb[0].mxu0
    %v3249 = vadd.f32 %v3088, %v3248
    %v3250 = vpop.f32.mrb[0].mxu0
    %v3251 = vadd.f32 %v3090, %v3250
    %3252 = vmatprep.mubr.bf16.mxu0 %v2578
    %3253 = vmatmul.mubr.bf16.gmra.mrb[0].mxu0 %v2577
    %v3254 = vpop.f32.mrb[0].mxu0
    %v3255 = vadd.f32 %v3094, %v3254
    %v3256 = vpop.f32.mrb[0].mxu0
    %v3257 = vadd.f32 %v3096, %v3256
    %v3258 = vpop.f32.mrb[0].mxu0
    %v3259 = vadd.f32 %v3098, %v3258
    %v3260 = vpop.f32.mrb[0].mxu0
    %v3261 = vadd.f32 %v3100, %v3260
    %3262 = vmatprep.mubr.bf16.mxu0 %v2582
    %3263 = vmatmul.mubr.bf16.gmra.mrb[0].mxu0 %v2581
    %v3264 = vpop.f32.mrb[0].mxu0
    %v3265 = vadd.f32 %v3104, %v3264
    %v3266 = vpop.f32.mrb[0].mxu0
    %v3267 = vadd.f32 %v3106, %v3266
    %v3268 = vpop.f32.mrb[0].mxu0
    %v3269 = vadd.f32 %v3108, %v3268
    %v3270 = vpop.f32.mrb[0].mxu0
    %v3271 = vadd.f32 %v3110, %v3270
    %3272 = vmatprep.mubr.bf16.mxu0 %v2586
    %3273 = vmatmul.mubr.bf16.gmra.mrb[0].mxu0 %v2585
    %v3274 = vpop.f32.mrb[0].mxu0
    %v3275 = vadd.f32 %v3114, %v3274
    %v3276 = vpop.f32.mrb[0].mxu0
    %v3277 = vadd.f32 %v3116, %v3276
    %v3278 = vpop.f32.mrb[0].mxu0
    %v3279 = vadd.f32 %v3118, %v3278
    %v3280 = vpop.f32.mrb[0].mxu0
    %v3281 = vadd.f32 %v3120, %v3280
    %3282 = vmatprep.mubr.bf16.mxu0 %v2590
    %3283 = vmatmul.mubr.bf16.gmra.mrb[0].mxu0 %v2589
    %v3284 = vpop.f32.mrb[0].mxu0
    %v3285 = vadd.f32 %v3124, %v3284
    %v3286 = vpop.f32.mrb[0].mxu0
    %v3287 = vadd.f32 %v3126, %v3286
    %v3288 = vpop.f32.mrb[0].mxu0
    %v3289 = vadd.f32 %v3128, %v3288
    %v3290 = vpop.f32.mrb[0].mxu0
    %v3291 = vadd.f32 %v3130, %v3290
    %3292 = vmatprep.mubr.bf16.mxu0 %v2594
    %3293 = vmatmul.mubr.bf16.gmra.mrb[0].mxu0 %v2593
    %v3294 = vpop.f32.mrb[0].mxu0
    %v3295 = vadd.f32 %v3134, %v3294
    %v3296 = vpop.f32.mrb[0].mxu0
    %v3297 = vadd.f32 %v3136, %v3296
    %v3298 = vpop.f32.mrb[0].mxu0
    %v3299 = vadd.f32 %v3138, %v3298
    %v3300 = vpop.f32.mrb[0].mxu0
    %v3301 = vadd.f32 %v3140, %v3300
    %3302 = vmatprep.mubr.bf16.mxu0 %v2598
    %3303 = vmatmul.mubr.bf16.gmra.mrb[0].mxu0 %v2597
    %v3304 = vpop.f32.mrb[0].mxu0
    %v3305 = vadd.f32 %v3144, %v3304
    %v3306 = vpop.f32.mrb[0].mxu0
    %v3307 = vadd.f32 %v3146, %v3306
    %v3308 = vpop.f32.mrb[0].mxu0
    %v3309 = vadd.f32 %v3148, %v3308
    %v3310 = vpop.f32.mrb[0].mxu0
    %v3311 = vadd.f32 %v3150, %v3310
    %3312 = vmatprep.mubr.bf16.mxu0 %v2602
    %3313 = vmatmul.mubr.bf16.gmra.mrb[0].mxu0 %v2601
    %v3314 = vpop.f32.mrb[0].mxu0
    %v3315 = vadd.f32 %v3154, %v3314
    %v3316 = vpop.f32.mrb[0].mxu0
    %v3317 = vadd.f32 %v3156, %v3316
    %v3318 = vpop.f32.mrb[0].mxu0
    %v3319 = vpop.f32.mrb[0].mxu0
    %3320 = vdwg.mxu0
    %v3321 = vmax.f32 %v3195, 0.0
    %v3322 = vmax.f32 %v3197, 0.0
    %v3323 = vmax.f32 %v3199, 0.0
    %v3324 = vmax.f32 %v3201, 0.0
    %v3325 = vmax.f32 %v3205, 0.0
    %v3326 = vmax.f32 %v3207, 0.0
    %v3327 = vmax.f32 %v3209, 0.0
    %v3328 = vmax.f32 %v3211, 0.0
    %v3329 = vmax.f32 %v3215, 0.0
    %v3330 = vmax.f32 %v3217, 0.0
    %v3331 = vmax.f32 %v3219, 0.0
    %v3332 = vmax.f32 %v3221, 0.0
    %v3333 = vmax.f32 %v3225, 0.0
    %v3334 = vmax.f32 %v3227, 0.0
    %v3335 = vmax.f32 %v3229, 0.0
    %v3336 = vmax.f32 %v3231, 0.0
    %v3337 = vmax.f32 %v3235, 0.0
    %v3338 = vmax.f32 %v3237, 0.0
    %v3339 = vmax.f32 %v3239, 0.0
    %v3340 = vmax.f32 %v3241, 0.0
    %v3341 = vmax.f32 %v3245, 0.0
    %v3342 = vmax.f32 %v3247, 0.0
    %v3343 = vmax.f32 %v3249, 0.0
    %v3344 = vmax.f32 %v3251, 0.0
    %v3345 = vmax.f32 %v3255, 0.0
    %v3346 = vmax.f32 %v3257, 0.0
    %v3347 = vmax.f32 %v3259, 0.0
    %v3348 = vmax.f32 %v3261, 0.0
    %v3349 = vmax.f32 %v3265, 0.0
    %v3350 = vmax.f32 %v3267, 0.0
    %v3351 = vmax.f32 %v3269, 0.0
    %v3352 = vmax.f32 %v3271, 0.0
    %v3353 = vmax.f32 %v3275, 0.0
    %v3354 = vmax.f32 %v3277, 0.0
    %v3355 = vmax.f32 %v3279, 0.0
    %v3356 = vmax.f32 %v3281, 0.0
    %v3357 = vmax.f32 %v3285, 0.0
    %v3358 = vmax.f32 %v3287, 0.0
    %v3359 = vmax.f32 %v3289, 0.0
    %v3360 = vmax.f32 %v3291, 0.0
    %v3361 = vmax.f32 %v3295, 0.0
    %v3362 = vmax.f32 %v3297, 0.0
    %v3363 = vmax.f32 %v3299, 0.0
    %v3364 = vmax.f32 %v3301, 0.0
    %v3365 = vmax.f32 %v3305, 0.0
    %v3366 = vmax.f32 %v3307, 0.0
    %v3367 = vmax.f32 %v3309, 0.0
    %v3368 = vmax.f32 %v3311, 0.0
    %v3369 = vmax.f32 %v3315, 0.0
    %v3370 = vmax.f32 %v3317, 0.0
    %v3371 = vpack.c.bf16 %v3323, %v3321
    %v3372 = vpack.c.bf16 %v3324, %v3322
    %v3373 = vpack.c.bf16 %v3327, %v3325
    %v3374 = vpack.c.bf16 %v3328, %v3326
    %v3375 = vpack.c.bf16 %v3331, %v3329
    %v3376 = vpack.c.bf16 %v3332, %v3330
    %v3377 = vpack.c.bf16 %v3335, %v3333
    %v3378 = vpack.c.bf16 %v3336, %v3334
    %v3379 = vpack.c.bf16 %v3339, %v3337
    %v3380 = vpack.c.bf16 %v3340, %v3338
    %v3381 = vpack.c.bf16 %v3343, %v3341
    %v3382 = vpack.c.bf16 %v3344, %v3342
    %v3383 = vpack.c.bf16 %v3347, %v3345
    %v3384 = vpack.c.bf16 %v3348, %v3346
    %v3385 = vpack.c.bf16 %v3351, %v3349
    %v3386 = vpack.c.bf16 %v3352, %v3350
    %v3387 = vpack.c.bf16 %v3355, %v3353
    %v3388 = vpack.c.bf16 %v3356, %v3354
    %v3389 = vpack.c.bf16 %v3359, %v3357
    %v3390 = vpack.c.bf16 %v3360, %v3358
    %v3391 = vpack.c.bf16 %v3363, %v3361
    %v3392 = vpack.c.bf16 %v3364, %v3362
    %v3393 = vpack.c.bf16 %v3367, %v3365
    %v3394 = vpack.c.bf16 %v3368, %v3366
    %v3395 = vpack.c.bf16 %v3369, %v3369
    %v3396 = vpack.c.bf16 %v3370, %v3370
    %v3397 = vld [vmem:[#allocation8] sm:$0xf]
    %v3398 = vld [vmem:[#allocation8 + $0x4] sm:$0xf]
    %v3399 = vld [vmem:[#allocation8 + $0x8] sm:$0xf]
    %v3400 = vld [vmem:[#allocation8 + $0xc] sm:$0xf]
    %v3401 = vld [vmem:[#allocation8 + $0x10] sm:$0xf]
    %v3402 = vld [vmem:[#allocation8 + $0x14] sm:$0xf]
    %v3403 = vld [vmem:[#allocation8 + $0x18] sm:$0xf]
    %v3404 = vld [vmem:[#allocation8 + $0x1c] sm:$0xf]
    %v3405 = vld [vmem:[#allocation8 + $0x20] sm:$0xf]
    %v3406 = vld [vmem:[#allocation8 + $0x24] sm:$0xf]
    %v3407 = vld [vmem:[#allocation8 + $0x28] sm:$0xf]
    %v3408 = vld [vmem:[#allocation8 + $0x2c] sm:$0xf]
    %v3409 = vld [vmem:[#allocation8 + $0x30] sm:$0xf]
    %v3410 = vld [vmem:[#allocation8 + $0x34] sm:$0xf]
    %v3411 = vld [vmem:[#allocation8 + $0x38] sm:$0xf]
    %v3412 = vld [vmem:[#allocation8 + $0x3c] sm:$0xf]
    %v3413 = vld [vmem:[#allocation8 + $0x40] sm:$0xf]
    %v3414 = vld [vmem:[#allocation8 + $0x44] sm:$0xf]
    %v3415 = vld [vmem:[#allocation8 + $0x48] sm:$0xf]
    %v3416 = vld [vmem:[#allocation8 + $0x4c] sm:$0xf]
    %v3417 = vld [vmem:[#allocation8 + $0x50] sm:$0xf]
    %v3418 = vld [vmem:[#allocation8 + $0x54] sm:$0xf]
    %v3419 = vld [vmem:[#allocation8 + $0x58] sm:$0xf]
    %v3420 = vld [vmem:[#allocation8 + $0x5c] sm:$0xf]
    %v3421 = vld [vmem:[#allocation8 + $0x60] sm:$0xf]
    %v3422 = vld [vmem:[#allocation8 + $0x64] sm:$0xf]
    %v3423 = vld [vmem:[#allocation8 + $0x68] sm:$0xf]
    %v3424 = vld [vmem:[#allocation8 + $0x6c] sm:$0xf]
    %v3425 = vld [vmem:[#allocation8 + $0x70] sm:$0xf]
    %v3426 = vld [vmem:[#allocation8 + $0x74] sm:$0xf]
    %v3427 = vld [vmem:[#allocation8 + $0x78] sm:$0xf]
    %v3428 = vld [vmem:[#allocation8 + $0x7c] sm:$0xf]
    %v3429 = vld [vmem:[%s6] sm:$0x1]
    %v3431 = vlaneseq
    %v3432 = vshrl.u32 %v3431, 7
    %v3433 = vsub.s32 0, %v3432
    %v3434 = vrot.slane %v3429, %v3433
    %v3468 = vunpack.c.l.b16 %v3397
    %v3469 = vunpack.c.l.b16 %v3398
    %v3470 = vunpack.c.l.b16 %v3399
    %v3471 = vunpack.c.l.b16 %v3400
    %v3472 = vunpack.c.l.b16 %v3401
    %v3473 = vunpack.c.l.b16 %v3402
    %v3474 = vunpack.c.l.b16 %v3403
    %v3475 = vunpack.c.l.b16 %v3404
    %v3476 = vunpack.c.l.b16 %v3405
    %v3477 = vunpack.c.l.b16 %v3406
    %v3478 = vunpack.c.l.b16 %v3407
    %v3479 = vunpack.c.l.b16 %v3408
    %v3480 = vunpack.c.l.b16 %v3409
    %v3481 = vunpack.c.l.b16 %v3410
    %v3482 = vunpack.c.l.b16 %v3411
    %v3483 = vunpack.c.l.b16 %v3412
    %v3484 = vunpack.c.l.b16 %v3413
    %v3485 = vunpack.c.l.b16 %v3414
    %v3486 = vunpack.c.l.b16 %v3415
    %v3487 = vunpack.c.l.b16 %v3416
    %v3488 = vunpack.c.l.b16 %v3417
    %v3489 = vunpack.c.l.b16 %v3418
    %v3490 = vunpack.c.l.b16 %v3419
    %v3491 = vunpack.c.l.b16 %v3420
    %v3492 = vunpack.c.l.b16 %v3421
    %v3493 = vunpack.c.l.b16 %v3422
    %v3494 = vunpack.c.l.b16 %v3423
    %v3495 = vunpack.c.l.b16 %v3424
    %v3496 = vunpack.c.l.b16 %v3425
    %v3497 = vunpack.c.l.b16 %v3426
    %v3498 = vunpack.c.l.b16 %v3427
    %v3499 = vunpack.c.l.b16 %v3428
    %v3500 = vpack.c.b16 %v3469, %v3468
    %v3501 = vpack.c.b16 %v3471, %v3470
    %v3502 = vpack.c.b16 %v3473, %v3472
    %v3503 = vpack.c.b16 %v3475, %v3474
    %v3504 = vpack.c.b16 %v3477, %v3476
    %v3505 = vpack.c.b16 %v3479, %v3478
    %v3506 = vpack.c.b16 %v3481, %v3480
    %v3507 = vpack.c.b16 %v3483, %v3482
    %v3508 = vpack.c.b16 %v3485, %v3484
    %v3509 = vpack.c.b16 %v3487, %v3486
    %v3510 = vpack.c.b16 %v3489, %v3488
    %v3511 = vpack.c.b16 %v3491, %v3490
    %v3512 = vpack.c.b16 %v3493, %v3492
    %v3513 = vpack.c.b16 %v3495, %v3494
    %v3514 = vpack.c.b16 %v3497, %v3496
    %v3515 = vpack.c.b16 %v3499, %v3498
    %3532 = vmatprep.subr.bf16.mxu0 0
    %3533 = vmatpush1.bf16.msra.mxu0 %v3500
    %3534 = vmatprep.subr.bf16.mxu0 0
    %3535 = vmatpush1.bf16.msra.mxu0 %v3501
    %3536 = vmatprep.subr.bf16.mxu0 0
    %3537 = vmatpush1.bf16.msra.mxu0 %v3502
    %3538 = vmatprep.subr.bf16.mxu0 0
    %3539 = vmatpush1.bf16.msra.mxu0 %v3503
    %3540 = vmatprep.subr.bf16.mxu0 0
    %3541 = vmatpush1.bf16.msra.mxu0 %v3504
    %3542 = vmatprep.subr.bf16.mxu0 0
    %3543 = vmatpush1.bf16.msra.mxu0 %v3505
    %3544 = vmatprep.subr.bf16.mxu0 0
    %3545 = vmatpush1.bf16.msra.mxu0 %v3506
    %3546 = vmatprep.subr.bf16.mxu0 0
    %3547 = vmatpush1.bf16.msra.mxu0 %v3507
    %3548 = vmatprep.subr.bf16.mxu0 0
    %3549 = vmatpush1.bf16.msra.mxu0 %v3508
    %3550 = vmatprep.subr.bf16.mxu0 0
    %3551 = vmatpush1.bf16.msra.mxu0 %v3509
    %3552 = vmatprep.subr.bf16.mxu0 0
    %3553 = vmatpush1.bf16.msra.mxu0 %v3510
    %3554 = vmatprep.subr.bf16.mxu0 0
    %3555 = vmatpush1.bf16.msra.mxu0 %v3511
    %3556 = vmatprep.subr.bf16.mxu0 0
    %3557 = vmatpush1.bf16.msra.mxu0 %v3512
    %3558 = vmatprep.subr.bf16.mxu0 0
    %3559 = vmatpush1.bf16.msra.mxu0 %v3513
    %3560 = vmatprep.subr.bf16.mxu0 0
    %3561 = vmatpush1.bf16.msra.mxu0 %v3514
    %3562 = vmatprep.subr.bf16.mxu0 0
    %3563 = vmatpush1.bf16.msra.mxu0 %v3515
    %3564 = vmatprep.mubr.bf16.mxu0 %v3372
    %3565 = vmatmul.mubr.bf16.gmra.mrb[0].mxu0 %v3371
    %v3566 = vpop.f32.mrb[0].mxu0
    %v3567 = vadd.f32 %v3434, %v3566
    %v3568 = vpop.f32.mrb[0].mxu0
    %v3569 = vpop.f32.mrb[0].mxu0
    %v3570 = vadd.f32 %v3434, %v3569
    %v3571 = vpop.f32.mrb[0].mxu0
    %3572 = vmatprep.mubr.bf16.mxu0 %v3374
    %3573 = vmatmul.mubr.bf16.gmra.mrb[0].mxu0 %v3373
    %v3574 = vpop.f32.mrb[0].mxu0
    %v3575 = vadd.f32 %v3434, %v3574
    %v3576 = vpop.f32.mrb[0].mxu0
    %v3577 = vpop.f32.mrb[0].mxu0
    %v3578 = vadd.f32 %v3434, %v3577
    %v3579 = vpop.f32.mrb[0].mxu0
    %3580 = vmatprep.mubr.bf16.mxu0 %v3376
    %3581 = vmatmul.mubr.bf16.gmra.mrb[0].mxu0 %v3375
    %v3582 = vpop.f32.mrb[0].mxu0
    %v3583 = vadd.f32 %v3434, %v3582
    %v3584 = vpop.f32.mrb[0].mxu0
    %v3585 = vpop.f32.mrb[0].mxu0
    %v3586 = vadd.f32 %v3434, %v3585
    %v3587 = vpop.f32.mrb[0].mxu0
    %3588 = vmatprep.mubr.bf16.mxu0 %v3378
    %3589 = vmatmul.mubr.bf16.gmra.mrb[0].mxu0 %v3377
    %v3590 = vpop.f32.mrb[0].mxu0
    %v3591 = vadd.f32 %v3434, %v3590
    %v3592 = vpop.f32.mrb[0].mxu0
    %v3593 = vpop.f32.mrb[0].mxu0
    %v3594 = vadd.f32 %v3434, %v3593
    %v3595 = vpop.f32.mrb[0].mxu0
    %3596 = vmatprep.mubr.bf16.mxu0 %v3380
    %3597 = vmatmul.mubr.bf16.gmra.mrb[0].mxu0 %v3379
    %v3598 = vpop.f32.mrb[0].mxu0
    %v3599 = vadd.f32 %v3434, %v3598
    %v3600 = vpop.f32.mrb[0].mxu0
    %v3601 = vpop.f32.mrb[0].mxu0
    %v3602 = vadd.f32 %v3434, %v3601
    %v3603 = vpop.f32.mrb[0].mxu0
    %3604 = vmatprep.mubr.bf16.mxu0 %v3382
    %3605 = vmatmul.mubr.bf16.gmra.mrb[0].mxu0 %v3381
    %v3606 = vpop.f32.mrb[0].mxu0
    %v3607 = vadd.f32 %v3434, %v3606
    %v3608 = vpop.f32.mrb[0].mxu0
    %v3609 = vpop.f32.mrb[0].mxu0
    %v3610 = vadd.f32 %v3434, %v3609
    %v3611 = vpop.f32.mrb[0].mxu0
    %3612 = vmatprep.mubr.bf16.mxu0 %v3384
    %3613 = vmatmul.mubr.bf16.gmra.mrb[0].mxu0 %v3383
    %v3614 = vpop.f32.mrb[0].mxu0
    %v3615 = vadd.f32 %v3434, %v3614
    %v3616 = vpop.f32.mrb[0].mxu0
    %v3617 = vpop.f32.mrb[0].mxu0
    %v3618 = vadd.f32 %v3434, %v3617
    %v3619 = vpop.f32.mrb[0].mxu0
    %3620 = vmatprep.mubr.bf16.mxu0 %v3386
    %3621 = vmatmul.mubr.bf16.gmra.mrb[0].mxu0 %v3385
    %v3622 = vpop.f32.mrb[0].mxu0
    %v3623 = vadd.f32 %v3434, %v3622
    %v3624 = vpop.f32.mrb[0].mxu0
    %v3625 = vpop.f32.mrb[0].mxu0
    %v3626 = vadd.f32 %v3434, %v3625
    %v3627 = vpop.f32.mrb[0].mxu0
    %3628 = vmatprep.mubr.bf16.mxu0 %v3388
    %3629 = vmatmul.mubr.bf16.gmra.mrb[0].mxu0 %v3387
    %v3630 = vpop.f32.mrb[0].mxu0
    %v3631 = vadd.f32 %v3434, %v3630
    %v3632 = vpop.f32.mrb[0].mxu0
    %v3633 = vpop.f32.mrb[0].mxu0
    %v3634 = vadd.f32 %v3434, %v3633
    %v3635 = vpop.f32.mrb[0].mxu0
    %3636 = vmatprep.mubr.bf16.mxu0 %v3390
    %3637 = vmatmul.mubr.bf16.gmra.mrb[0].mxu0 %v3389
    %v3638 = vpop.f32.mrb[0].mxu0
    %v3639 = vadd.f32 %v3434, %v3638
    %v3640 = vpop.f32.mrb[0].mxu0
    %v3641 = vpop.f32.mrb[0].mxu0
    %v3642 = vadd.f32 %v3434, %v3641
    %v3643 = vpop.f32.mrb[0].mxu0
    %3644 = vmatprep.mubr.bf16.mxu0 %v3392
    %3645 = vmatmul.mubr.bf16.gmra.mrb[0].mxu0 %v3391
    %v3646 = vpop.f32.mrb[0].mxu0
    %v3647 = vadd.f32 %v3434, %v3646
    %v3648 = vpop.f32.mrb[0].mxu0
    %v3649 = vpop.f32.mrb[0].mxu0
    %v3650 = vadd.f32 %v3434, %v3649
    %v3651 = vpop.f32.mrb[0].mxu0
    %3652 = vmatprep.mubr.bf16.mxu0 %v3394
    %3653 = vmatmul.mubr.bf16.gmra.mrb[0].mxu0 %v3393
    %v3654 = vpop.f32.mrb[0].mxu0
    %v3655 = vadd.f32 %v3434, %v3654
    %v3656 = vpop.f32.mrb[0].mxu0
    %v3657 = vpop.f32.mrb[0].mxu0
    %v3658 = vadd.f32 %v3434, %v3657
    %v3659 = vpop.f32.mrb[0].mxu0
    %3660 = vmatprep.mubr.bf16.mxu0 %v3396
    %3661 = vmatmul.mubr.bf16.gmra.mrb[0].mxu0 %v3395
    %v3662 = vpop.f32.mrb[0].mxu0
    %v3663 = vadd.f32 %v3434, %v3662
    %v3664 = vpop.f32.mrb[0].mxu0
    %v3665 = vpop.f32.mrb[0].mxu0
    %v3666 = vpop.f32.mrb[0].mxu0
    %3667 = vdwg.mxu0
    %v3668 = vpack.c.bf16 %v3570, %v3567
    %v3669 = vpack.c.bf16 %v3578, %v3575
    %v3670 = vpack.c.bf16 %v3586, %v3583
    %v3671 = vpack.c.bf16 %v3594, %v3591
    %v3672 = vpack.c.bf16 %v3602, %v3599
    %v3673 = vpack.c.bf16 %v3610, %v3607
    %v3674 = vpack.c.bf16 %v3618, %v3615
    %v3675 = vpack.c.bf16 %v3626, %v3623
    %v3676 = vpack.c.bf16 %v3634, %v3631
    %v3677 = vpack.c.bf16 %v3642, %v3639
    %v3678 = vpack.c.bf16 %v3650, %v3647
    %v3679 = vpack.c.bf16 %v3658, %v3655
    %v3680 = vpack.c.bf16 %v3663, %v3663
    %v3694 = vunpack.c.l.b16 %v3668
    %v3695 = vunpack.c.h.b16 %v3668
    %v3696 = vunpack.c.l.b16 %v3669
    %v3697 = vunpack.c.h.b16 %v3669
    %v3698 = vunpack.c.l.b16 %v3670
    %v3699 = vunpack.c.h.b16 %v3670
    %v3700 = vunpack.c.l.b16 %v3671
    %v3701 = vunpack.c.h.b16 %v3671
    %v3702 = vunpack.c.l.b16 %v3672
    %v3703 = vunpack.c.h.b16 %v3672
    %v3704 = vunpack.c.l.b16 %v3673
    %v3705 = vunpack.c.h.b16 %v3673
    %v3706 = vunpack.c.l.b16 %v3674
    %v3707 = vunpack.c.h.b16 %v3674
    %v3708 = vunpack.c.l.b16 %v3675
    %v3709 = vunpack.c.h.b16 %v3675
    %v3710 = vunpack.c.l.b16 %v3676
    %v3711 = vunpack.c.h.b16 %v3676
    %v3712 = vunpack.c.l.b16 %v3677
    %v3713 = vunpack.c.h.b16 %v3677
    %v3714 = vunpack.c.l.b16 %v3678
    %v3715 = vunpack.c.h.b16 %v3678
    %v3716 = vunpack.c.l.b16 %v3679
    %v3717 = vunpack.c.h.b16 %v3679
    %v3718 = vunpack.c.l.b16 %v3680
    %v3719 = vpack.c.b16 %v3694, %v3694
    %v3720 = vpack.c.b16 %v3695, %v3695
    %v3721 = vpack.c.b16 %v3696, %v3696
    %v3722 = vpack.c.b16 %v3697, %v3697
    %v3723 = vpack.c.b16 %v3698, %v3698
    %v3724 = vpack.c.b16 %v3699, %v3699
    %v3725 = vpack.c.b16 %v3700, %v3700
    %v3726 = vpack.c.b16 %v3701, %v3701
    %v3727 = vpack.c.b16 %v3702, %v3702
    %v3728 = vpack.c.b16 %v3703, %v3703
    %v3729 = vpack.c.b16 %v3704, %v3704
    %v3730 = vpack.c.b16 %v3705, %v3705
    %v3731 = vpack.c.b16 %v3706, %v3706
    %v3732 = vpack.c.b16 %v3707, %v3707
    %v3733 = vpack.c.b16 %v3708, %v3708
    %v3734 = vpack.c.b16 %v3709, %v3709
    %v3735 = vpack.c.b16 %v3710, %v3710
    %v3736 = vpack.c.b16 %v3711, %v3711
    %v3737 = vpack.c.b16 %v3712, %v3712
    %v3738 = vpack.c.b16 %v3713, %v3713
    %v3739 = vpack.c.b16 %v3714, %v3714
    %v3740 = vpack.c.b16 %v3715, %v3715
    %v3741 = vpack.c.b16 %v3716, %v3716
    %v3742 = vpack.c.b16 %v3717, %v3717
    %v3743 = vpack.c.b16 %v3718, %v3718
    %3769 = vst [vmem:[#allocation10] sm:$0xf] %v3719
    %3770 = vst [vmem:[#allocation10 + $0x4] sm:$0xf] %v3720
    %3771 = vst [vmem:[#allocation10 + $0x8] sm:$0xf] %v3721
    %3772 = vst [vmem:[#allocation10 + $0xc] sm:$0xf] %v3722
    %3773 = vst [vmem:[#allocation10 + $0x10] sm:$0xf] %v3723
    %3774 = vst [vmem:[#allocation10 + $0x14] sm:$0xf] %v3724
    %3775 = vst [vmem:[#allocation10 + $0x18] sm:$0xf] %v3725
    %3776 = vst [vmem:[#allocation10 + $0x1c] sm:$0xf] %v3726
    %3777 = vst [vmem:[#allocation10 + $0x20] sm:$0xf] %v3727
    %3778 = vst [vmem:[#allocation10 + $0x24] sm:$0xf] %v3728
    %3779 = vst [vmem:[#allocation10 + $0x28] sm:$0xf] %v3729
    %3780 = vst [vmem:[#allocation10 + $0x2c] sm:$0xf] %v3730
    %3781 = vst [vmem:[#allocation10 + $0x30] sm:$0xf] %v3731
    %3782 = vst [vmem:[#allocation10 + $0x34] sm:$0xf] %v3732
    %3783 = vst [vmem:[#allocation10 + $0x38] sm:$0xf] %v3733
    %3784 = vst [vmem:[#allocation10 + $0x3c] sm:$0xf] %v3734
    %3785 = vst [vmem:[#allocation10 + $0x40] sm:$0xf] %v3735
    %3786 = vst [vmem:[#allocation10 + $0x44] sm:$0xf] %v3736
    %3787 = vst [vmem:[#allocation10 + $0x48] sm:$0xf] %v3737
    %3788 = vst [vmem:[#allocation10 + $0x4c] sm:$0xf] %v3738
    %3789 = vst [vmem:[#allocation10 + $0x50] sm:$0xf] %v3739
    %3790 = vst [vmem:[#allocation10 + $0x54] sm:$0xf] %v3740
    %3791 = vst [vmem:[#allocation10 + $0x58] sm:$0xf] %v3741
    %3792 = vst [vmem:[#allocation10 + $0x5c] sm:$0xf] %v3742
    %3793 = vst [vmem:[#allocation10 + $0x60] sm:$0xf] %v3743
    // Predicated region
    $region46: #{tpu_custom_call.1} parent=1 // pred_check
      _
    $region47: #{tpu_custom_call.1} parent=1 // pred_check_branch
      %3795 = sbr.rel (0) target = $region49
    $region48: #{tpu_custom_call.1} parent=1 // pred_region
      %s3797 = ssub.s32 1600, 1600
      %3798 = vsyncadd [#allocation4], %s3797
      %s3799 = sshll.u32 [#allocation10], 4
      %s3800 = int_to_ptr.vmem [resolvable:$true] %s3799
      %3805 = dma.vmem_to_hbm [thread:$0]  %s3800, 1600, %s7, [#allocation4], 64, 64, 4
    $region49: #{tpu_custom_call.1} parent=1 // pred_fallthru
      _
    // Predicated region
    $region50: #{tpu_custom_call.1} parent=1 // pred_check
      _
    $region51: #{tpu_custom_call.1} parent=1 // pred_check_branch
      %3807 = sbr.rel (0) target = $region53
    $region52: #{tpu_custom_call.1} parent=1 // pred_region
      %3808 = dma.done [#allocation4], 1600
    $region53: #{tpu_custom_call.1} parent=1 // pred_fallthru
      _
    %3809 = vsyncpa [#allocation3], 1
    %3810 = vsyncpa [#allocation6], 1
    %3811 = vsyncpa [#allocation9], 1
    %3812 = vsyncpa [#allocation4], 1

</llo_original>
